<compile_context>
chip_gen: v7x
topology: tpu7x:2x2x1
jax: 0.10.0
libtpu: 0.0.40
codegen_flags: <defaults>
</compile_context>

<pallas_src>
import functools

import numpy as np
import jax
import jax.numpy as jnp
from jax import lax
from jax.experimental import pallas as pl
from jax.experimental.pallas import tpu as pltpu

_TINY = np.float32(np.finfo(np.float32).tiny)   # torch.finfo(torch.float32).tiny
_NEG_BIG = np.float32(-1e30)                    # "-inf" stand-in that never makes NaNs


def _round_up(x, m):
    return (x + m - 1) // m * m


def _topk_min(sek, K, P):
    """Per-row min of the top-K values of `sek` (== torch.topk(...).values.min(dim=1)).

    K-step selection: each step takes the row max, counts ties, and records the
    value once the cumulative count reaches K (same duplicate handling as
    torch.topk).  Two cross-lane XLU reductions per step.
    """
    def body(_, carry):
        masked, need, thresh = carry
        m = jnp.max(masked, axis=1, keepdims=True)                     # (P,1)
        eq = masked == m                                               # (P,P)
        c = jnp.sum(eq.astype(jnp.float32), axis=1, keepdims=True)     # (P,1)
        hit = jnp.logical_and(need > 0.0, c >= need)
        thresh = jnp.where(hit, m, thresh)
        need = need - c
        masked = jnp.where(eq, _NEG_BIG, masked)
        return masked, need, thresh

    init = (sek,
            jnp.full((P, 1), np.float32(K), dtype=jnp.float32),
            jnp.full((P, 1), _NEG_BIG, dtype=jnp.float32))
    # Full unroll only for small K; larger K would spill vregs (64 total).
    _, _, thresh = lax.fori_loop(0, K, body, init, unroll=(K <= 8))
    return thresh


def _ranking_statistics(x, K, eye_b, diag_fill, col_valid, pad, P):
    """Forward value of ranking_statistics(x, K, symetric=True) on the padded block."""
    se = jnp.where(eye_b, 0.0, x)                        # zero the diagonal
    sek = jnp.where(col_valid, se, _NEG_BIG) if pad else se
    thresh = _topk_min(sek, K, P)                        # (P,1) min of top-K per row
    mask = jnp.logical_or(sek > thresh, diag_fill)       # strict > then fill_diagonal_(1)
    # 0/1 entries, row popcount <= K -> bf16 operands + f32 accumulation is exact.
    maskf = jnp.where(mask, 1.0, 0.0).astype(jnp.bfloat16)
    psim = lax.dot_general(maskf, maskf, (((1,), (1,)), ((), ())),
                           preferred_element_type=jnp.float32)   # mask @ mask.T
    return psim * np.float32(1.0 / K)


def _ranking_loss_kernel(scal_ref, z1_ref, z2_ref, sims_ref,
                         loss_ref, simz_ref, rz_ref, rzc_ref, psim_ref, psimc_ref,
                         *, N, K):
    P = sims_ref.shape[0]
    pad = (N != P)                                   # static Python check

    lambda1 = scal_ref[0]
    lambda2 = scal_ref[1]
    neg = scal_ref[2]
    lambda4 = scal_ref[3]
    theta = scal_ref[4]
    inv_n = scal_ref[5]

    # Narrow iotas only -- no (P,P) int32 temporaries.
    rvec = lax.broadcasted_iota(jnp.int32, (P, 1), 0)
    cvec = lax.broadcasted_iota(jnp.int32, (1, P), 1)
    eye_b = rvec == cvec                             # (P,P) bool via broadcast compare
    if pad:
        row_valid = rvec < N                         # (P,1) bool
        col_valid = cvec < N                         # (1,P) bool
        diag_fill = jnp.logical_and(eye_b, row_valid)   # fill diag only on real rows
    else:
        row_valid = col_valid = None
        diag_fill = eye_b

    def ce_sum(logits, target):
        """nn.CrossEntropyLoss(reduction='sum') with soft targets.

        Padded rows/cols contribute nothing: every target matrix is exactly
        zero outside the real NxN block and padded columns are excluded from
        the log-sum-exp.
        """
        lm = jnp.where(col_valid, logits, _NEG_BIG) if pad else logits
        m = jnp.max(lm, axis=1, keepdims=True)
        lse = m + jnp.log(jnp.sum(jnp.exp(lm - m), axis=1, keepdims=True))
        return jnp.sum(target * (lse - logits))

    # --- z branch ----------------------------------------------------------
    z1 = z1_ref[...]
    z2 = z2_ref[...]
    # rsqrt on the EUP; eps guard keeps the all-zero padded rows NaN-free.
    z1n = z1 * lax.rsqrt(jnp.maximum(jnp.sum(z1 * z1, axis=-1, keepdims=True), 1e-24))
    z2n = z2 * lax.rsqrt(jnp.maximum(jnp.sum(z2 * z2, axis=-1, keepdims=True), 1e-24))
    simz = lax.dot_general(z1n, z2n, (((1,), (1,)), ((), ())),
                           precision=lax.Precision.HIGHEST,
                           preferred_element_type=jnp.float32)     # z1n @ z2n.T

    ranking_z0 = _ranking_statistics(simz, K, eye_b, diag_fill, col_valid, pad, P)
    # ranking_z / ranking_z.detach() == 1 in the forward -> cut == the 0/1 filter.
    ranking_z_cut = jnp.where(ranking_z0 > theta, 1.0, 0.0)
    ranking_z = ranking_z0 + _TINY

    # --- s branch ----------------------------------------------------------
    sims = sims_ref[...]                             # (|s| + |s|.T)/2, zero-padded
    psim0 = _ranking_statistics(sims, K, eye_b, diag_fill, col_valid, pad, P)
    mval = jnp.max(sims, axis=1, keepdims=True)      # sims >= 0, padding is 0
    inv_mval = pl.reciprocal(jnp.where(mval > 0.0, mval, 1.0), approx=True)
    sims1 = sims * inv_mval
    psim_cut = jnp.where(psim0 > theta, 1.0, 0.0)
    psim = psim0 + _TINY

    # --- losses -------------------------------------------------------------
    label = (psim_cut + ranking_z_cut) * 0.5
    if pad:   # keep the soft target exactly zero in the padded region
        label = jnp.where(row_valid, label, 0.0)
        label = jnp.where(col_valid, label, 0.0)

    loss1 = ce_sum(ranking_z_cut, sims1)
    loss2 = ce_sum(psim_cut, simz)
    loss3 = ce_sum(ranking_z, label)
    loss4 = ce_sum(psim, label)
    loss = (lambda1 * loss1 + lambda2 * loss2 + neg * loss3 + lambda4 * loss4) * inv_n

    loss_ref[0] = loss
    simz_ref[...] = simz
    rz_ref[...] = ranking_z
    rzc_ref[...] = ranking_z_cut.astype(jnp.bfloat16)   # exactly 0/1 -> bf16 exact
    psim_ref[...] = psim
    psimc_ref[...] = psim_cut.astype(jnp.bfloat16)


def ranking_loss(z1, z2, s, lambda1, lambda2, neg, lambda4, k, theta, num_sample):
    N, D = z1.shape
    assert s.shape == (N, N)
    assert 1 <= int(k) <= N

    P = _round_up(N, 128)          # square, lane-dense working size
    Dp = _round_up(D, 128)

    z1p = jnp.pad(z1.astype(jnp.float32), ((0, P - N), (0, Dp - D)))
    z2p = jnp.pad(z2.astype(jnp.float32), ((0, P - N), (0, Dp - D)))
    s_abs = jnp.abs(s.astype(jnp.float32))
    sims = (s_abs + s_abs.T) * 0.5           # XLA-side transpose; no MXU transpose in-kernel
    simsp = jnp.pad(sims, ((0, P - N), (0, P - N)))

    scal = jnp.array([lambda1, lambda2, neg, lambda4, theta, 1.0 / float(num_sample)],
                     dtype=jnp.float32)

    vmem = pltpu.MemorySpace.VMEM
    smem = pltpu.MemorySpace.SMEM
    pp_f32 = jax.ShapeDtypeStruct((P, P), jnp.float32)
    pp_bf16 = jax.ShapeDtypeStruct((P, P), jnp.bfloat16)

    # Rough live footprint: 2 (P,Dp) f32 inputs + ~12 (P,P) f32 + 2 (P,P) bf16.
    est_bytes = 4 * 2 * P * Dp + (4 * 12 + 2 * 2) * P * P
    vmem_limit = int(min(max(2 * est_bytes, 32 * 1024 * 1024), 64 * 1024 * 1024))

    kernel = functools.partial(_ranking_loss_kernel, N=N, K=int(k))

    outs = pl.pallas_call(
        kernel,
        out_shape=(
            jax.ShapeDtypeStruct((1,), jnp.float32),  # loss
            pp_f32,   # simz
            pp_f32,   # ranking_z
            pp_bf16,  # ranking_z_cut (exactly 0/1)
            pp_f32,   # psim
            pp_bf16,  # psim_cut (exactly 0/1)
        ),
        in_specs=[
            pl.BlockSpec(memory_space=smem),   # scalars (6,)
            pl.BlockSpec(memory_space=vmem),   # z1   (P, Dp)
            pl.BlockSpec(memory_space=vmem),   # z2   (P, Dp)
            pl.BlockSpec(memory_space=vmem),   # sims (P, P)
        ],
        out_specs=(
            pl.BlockSpec(memory_space=smem),
            pl.BlockSpec(memory_space=vmem),
            pl.BlockSpec(memory_space=vmem),
            pl.BlockSpec(memory_space=vmem),
            pl.BlockSpec(memory_space=vmem),
            pl.BlockSpec(memory_space=vmem),
        ),
        compiler_params=pltpu.CompilerParams(vmem_limit_bytes=vmem_limit),
    )(scal, z1p, z2p, simsp)

    loss, simz, rz, rzc, psim, psimc = outs
    return (loss[0],
            simz[:N, :N],
            rz[:N, :N],
            rzc[:N, :N].astype(jnp.float32),
            psim[:N, :N],
            psimc[:N, :N].astype(jnp.float32))


# ----------------------------- pure-JAX reference ----------------------------
def _ref_ranking_statistics(x, K):
    n = x.shape[0]
    se = x - jnp.diag(jnp.diag(x))
    thr = jnp.min(lax.top_k(se, K)[0], axis=1, keepdims=True)
    mask = (se > thr).astype(jnp.float32)
    eye = jnp.eye(n, dtype=jnp.float32)
    mask = mask * (1.0 - eye) + eye
    return (mask @ mask.T) / K


def _ref_forward(z1, z2, s, lambda1, lambda2, neg, lambda4, k, theta, num_sample):
    tiny = np.float32(np.finfo(np.float32).tiny)
    z1 = z1 / jnp.linalg.norm(z1, axis=-1, keepdims=True)
    z2 = z2 / jnp.linalg.norm(z2, axis=-1, keepdims=True)
    simz = z1 @ z2.T
    rz0 = _ref_ranking_statistics(simz, k)
    rzc = jnp.where(rz0 > theta, 1.0, 0.0)
    rz = rz0 + tiny
    sims = (jnp.abs(s) + jnp.abs(s).T) / 2
    ps0 = _ref_ranking_statistics(sims, k)
    sims1 = sims / sims.max(axis=1, keepdims=True)
    psc = jnp.where(ps0 > theta, 1.0, 0.0)
    ps = ps0 + tiny

    def ce(logits, target):   # nn.CrossEntropyLoss(reduction='sum') w/ soft targets
        lse = jax.scipy.special.logsumexp(logits, axis=1, keepdims=True)
        return jnp.sum(target * (lse - logits))

    L1 = ce(rzc, sims1) / num_sample
    L2 = ce(psc, simz) / num_sample
    label = (psc + rzc) / 2
    L3 = ce(rz, label) / num_sample
    L4 = ce(ps, label) / num_sample
    loss = lambda1 * L1 + lambda2 * L2 + neg * L3 + lambda4 * L4
    return loss, simz, rz, rzc, ps, psc


if __name__ == "__main__":
    key = jax.random.PRNGKey(0)
    k1, k2, k3 = jax.random.split(key, 3)
    N, D = 8, 32
    z1 = jax.random.normal(k1, (N, D), dtype=jnp.float32)
    z2 = jax.random.normal(k2, (N, D), dtype=jnp.float32)
    s = jax.random.normal(k3, (N, N), dtype=jnp.float32)

    hparams = dict(lambda1=1.0, lambda2=0.5, neg=0.2, lambda4=0.3,
                   k=3, theta=0.1, num_sample=N)

    outs = ranking_loss(z1, z2, s, **hparams)
    jax.block_until_ready(outs)
    loss, simz, rz, rzc, psim, psimc = outs

    r_loss, r_simz, r_rz, r_rzc, r_psim, r_psimc = [
        np.asarray(o) for o in _ref_forward(z1, z2, s, **hparams)]

    assert np.isfinite(float(loss))
    assert simz.shape == (N, N) and rz.shape == (N, N) and rzc.shape == (N, N)
    assert psim.shape == (N, N) and psimc.shape == (N, N)
    np.testing.assert_allclose(np.asarray(simz), r_simz, rtol=1e-3, atol=1e-4)
    np.testing.assert_allclose(np.asarray(rz), r_rz, rtol=1e-3, atol=1e-5)
    np.testing.assert_allclose(np.asarray(rzc), r_rzc, atol=1e-6)
    np.testing.assert_allclose(np.asarray(psim), r_psim, rtol=1e-3, atol=1e-5)
    np.testing.assert_allclose(np.asarray(psimc), r_psimc, atol=1e-6)
    np.testing.assert_allclose(float(loss), float(r_loss), rtol=2e-2, atol=1e-3)
    print("KERNEL_OK")
</pallas_src>

<mosaic_0001>
module attributes {stable_mosaic.version = 11 : i64} {
  func.func @_ranking_loss_kernel(%arg0: memref<6xf32, #tpu.memory_space<smem>>, %arg1: memref<128x128xf32, #tpu.memory_space<vmem>>, %arg2: memref<128x128xf32, #tpu.memory_space<vmem>>, %arg3: memref<128x128xf32, #tpu.memory_space<vmem>>, %arg4: memref<1xf32, #tpu.memory_space<smem>>, %arg5: memref<128x128xf32, #tpu.memory_space<vmem>>, %arg6: memref<128x128xf32, #tpu.memory_space<vmem>>, %arg7: memref<128x128xbf16, #tpu.memory_space<vmem>>, %arg8: memref<128x128xf32, #tpu.memory_space<vmem>>, %arg9: memref<128x128xbf16, #tpu.memory_space<vmem>>) attributes {dimension_semantics = [], scalar_prefetch = 0 : i64, scratch_operands = 0 : i64, tpu.core_type = #tpu.core_type<tc>} {
    %c0 = arith.constant 0 : index
    %0 = memref.load %arg0[%c0] : memref<6xf32, #tpu.memory_space<smem>>
    %c1 = arith.constant 1 : index
    %1 = memref.load %arg0[%c1] : memref<6xf32, #tpu.memory_space<smem>>
    %c2 = arith.constant 2 : index
    %2 = memref.load %arg0[%c2] : memref<6xf32, #tpu.memory_space<smem>>
    %c3 = arith.constant 3 : index
    %3 = memref.load %arg0[%c3] : memref<6xf32, #tpu.memory_space<smem>>
    %c4 = arith.constant 4 : index
    %4 = memref.load %arg0[%c4] : memref<6xf32, #tpu.memory_space<smem>>
    %c5 = arith.constant 5 : index
    %5 = memref.load %arg0[%c5] : memref<6xf32, #tpu.memory_space<smem>>
    %6 = tpu.iota {dimensions = array<i32: 0>} : vector<128x1xi32>
    %7 = tpu.iota {dimensions = array<i32: 1>} : vector<1x128xi32>
    %8 = vector.broadcast %6 : vector<128x1xi32> to vector<128x128xi32>
    %9 = vector.broadcast %7 : vector<1x128xi32> to vector<128x128xi32>
    %10 = arith.cmpi eq, %8, %9 : vector<128x128xi32>
    %c8_i32 = arith.constant 8 : i32
    %11 = vector.broadcast %c8_i32 : i32 to vector<128x1xi32>
    %12 = arith.cmpi slt, %6, %11 : vector<128x1xi32>
    %c8_i32_0 = arith.constant 8 : i32
    %13 = vector.broadcast %c8_i32_0 : i32 to vector<1x128xi32>
    %14 = arith.cmpi slt, %7, %13 : vector<1x128xi32>
    %15 = vector.broadcast %12 : vector<128x1xi1> to vector<128x128xi1>
    %16 = arith.andi %10, %15 : vector<128x128xi1>
    %c0_1 = arith.constant 0 : index
    %c0_2 = arith.constant 0 : index
    %17 = vector.load %arg1[%c0_1, %c0_2] : memref<128x128xf32, #tpu.memory_space<vmem>>, vector<128x128xf32>
    %c0_3 = arith.constant 0 : index
    %c0_4 = arith.constant 0 : index
    %18 = vector.load %arg2[%c0_3, %c0_4] : memref<128x128xf32, #tpu.memory_space<vmem>>, vector<128x128xf32>
    %19 = arith.mulf %17, %17 : vector<128x128xf32>
    %cst = arith.constant dense<0.000000e+00> : vector<128xf32>
    %20 = vector.multi_reduction <add>, %19, %cst [1] : vector<128x128xf32> to vector<128xf32>
    %21 = vector.shape_cast %20 : vector<128xf32> to vector<128x1xf32>
    %cst_5 = arith.constant 1.000000e-24 : f32
    %22 = vector.broadcast %cst_5 : f32 to vector<128x1xf32>
    %23 = arith.maximumf %21, %22 : vector<128x1xf32>
    %24 = math.rsqrt %23 : vector<128x1xf32>
    %25 = vector.broadcast %24 : vector<128x1xf32> to vector<128x128xf32>
    %26 = arith.mulf %17, %25 : vector<128x128xf32>
    %27 = arith.mulf %18, %18 : vector<128x128xf32>
    %cst_6 = arith.constant dense<0.000000e+00> : vector<128xf32>
    %28 = vector.multi_reduction <add>, %27, %cst_6 [1] : vector<128x128xf32> to vector<128xf32>
    %29 = vector.shape_cast %28 : vector<128xf32> to vector<128x1xf32>
    %cst_7 = arith.constant 1.000000e-24 : f32
    %30 = vector.broadcast %cst_7 : f32 to vector<128x1xf32>
    %31 = arith.maximumf %29, %30 : vector<128x1xf32>
    %32 = math.rsqrt %31 : vector<128x1xf32>
    %33 = vector.broadcast %32 : vector<128x1xf32> to vector<128x128xf32>
    %34 = arith.mulf %18, %33 : vector<128x128xf32>
    %cst_8 = arith.constant dense<0.000000e+00> : vector<128x128xf32>
    %35 = tpu.matmul %26, %34, %cst_8 {dimension_numbers = #tpu.dot_dimension_numbers<[1], [1], [0], [0], [0, 0, 1, 0], [], []>, precision = #tpu.contract_precision<fp32>} : vector<128x128xf32>, vector<128x128xf32>, vector<128x128xf32> -> vector<128x128xf32>
    %cst_9 = arith.constant 0.000000e+00 : f32
    %36 = vector.broadcast %cst_9 : f32 to vector<128x128xf32>
    %37 = arith.select %10, %36, %35 : vector<128x128xi1>, vector<128x128xf32>
    %cst_10 = arith.constant -1.000000e+30 : f32
    %38 = vector.shape_cast %14 : vector<1x128xi1> to vector<1x128xi1>
    %39 = vector.broadcast %38 : vector<1x128xi1> to vector<128x128xi1>
    %40 = vector.broadcast %cst_10 : f32 to vector<128x128xf32>
    %41 = arith.select %39, %37, %40 : vector<128x128xi1>, vector<128x128xf32>
    %cst_11 = arith.constant 3.000000e+00 : f32
    %42 = vector.broadcast %cst_11 : f32 to vector<128x1xf32>
    %cst_12 = arith.constant -1.000000e+30 : f32
    %43 = vector.broadcast %cst_12 : f32 to vector<128x1xf32>
    %c0_i32 = arith.constant 0 : i32
    %cst_13 = arith.constant dense<0xFF800000> : vector<128xf32>
    %44 = vector.multi_reduction <maximumf>, %41, %cst_13 [1] : vector<128x128xf32> to vector<128xf32>
    %45 = vector.shape_cast %44 : vector<128xf32> to vector<128x1xf32>
    %46 = vector.broadcast %45 : vector<128x1xf32> to vector<128x128xf32>
    %47 = arith.cmpf oeq, %41, %46 : vector<128x128xf32>
    %48 = arith.extui %47 : vector<128x128xi1> to vector<128x128xi32>
    %49 = arith.sitofp %48 : vector<128x128xi32> to vector<128x128xf32>
    %cst_14 = arith.constant dense<0.000000e+00> : vector<128xf32>
    %50 = vector.multi_reduction <add>, %49, %cst_14 [1] : vector<128x128xf32> to vector<128xf32>
    %51 = vector.shape_cast %50 : vector<128xf32> to vector<128x1xf32>
    %cst_15 = arith.constant 0.000000e+00 : f32
    %52 = vector.broadcast %cst_15 : f32 to vector<128x1xf32>
    %53 = arith.cmpf ogt, %42, %52 : vector<128x1xf32>
    %54 = arith.cmpf oge, %51, %42 : vector<128x1xf32>
    %55 = arith.andi %53, %54 : vector<128x1xi1>
    %56 = arith.select %55, %45, %43 : vector<128x1xi1>, vector<128x1xf32>
    %57 = arith.subf %42, %51 : vector<128x1xf32>
    %cst_16 = arith.constant -1.000000e+30 : f32
    %58 = vector.broadcast %cst_16 : f32 to vector<128x128xf32>
    %59 = arith.select %47, %58, %41 : vector<128x128xi1>, vector<128x128xf32>
    %c1_i32 = arith.constant 1 : i32
    %cst_17 = arith.constant dense<0xFF800000> : vector<128xf32>
    %60 = vector.multi_reduction <maximumf>, %59, %cst_17 [1] : vector<128x128xf32> to vector<128xf32>
    %61 = vector.shape_cast %60 : vector<128xf32> to vector<128x1xf32>
    %62 = vector.broadcast %61 : vector<128x1xf32> to vector<128x128xf32>
    %63 = arith.cmpf oeq, %59, %62 : vector<128x128xf32>
    %64 = arith.extui %63 : vector<128x128xi1> to vector<128x128xi32>
    %65 = arith.sitofp %64 : vector<128x128xi32> to vector<128x128xf32>
    %cst_18 = arith.constant dense<0.000000e+00> : vector<128xf32>
    %66 = vector.multi_reduction <add>, %65, %cst_18 [1] : vector<128x128xf32> to vector<128xf32>
    %67 = vector.shape_cast %66 : vector<128xf32> to vector<128x1xf32>
    %cst_19 = arith.constant 0.000000e+00 : f32
    %68 = vector.broadcast %cst_19 : f32 to vector<128x1xf32>
    %69 = arith.cmpf ogt, %57, %68 : vector<128x1xf32>
    %70 = arith.cmpf oge, %67, %57 : vector<128x1xf32>
    %71 = arith.andi %69, %70 : vector<128x1xi1>
    %72 = arith.select %71, %61, %56 : vector<128x1xi1>, vector<128x1xf32>
    %73 = arith.subf %57, %67 : vector<128x1xf32>
    %cst_20 = arith.constant -1.000000e+30 : f32
    %74 = vector.broadcast %cst_20 : f32 to vector<128x128xf32>
    %75 = arith.select %63, %74, %59 : vector<128x128xi1>, vector<128x128xf32>
    %c2_i32 = arith.constant 2 : i32
    %cst_21 = arith.constant dense<0xFF800000> : vector<128xf32>
    %76 = vector.multi_reduction <maximumf>, %75, %cst_21 [1] : vector<128x128xf32> to vector<128xf32>
    %77 = vector.shape_cast %76 : vector<128xf32> to vector<128x1xf32>
    %78 = vector.broadcast %77 : vector<128x1xf32> to vector<128x128xf32>
    %79 = arith.cmpf oeq, %75, %78 : vector<128x128xf32>
    %80 = arith.extui %79 : vector<128x128xi1> to vector<128x128xi32>
    %81 = arith.sitofp %80 : vector<128x128xi32> to vector<128x128xf32>
    %cst_22 = arith.constant dense<0.000000e+00> : vector<128xf32>
    %82 = vector.multi_reduction <add>, %81, %cst_22 [1] : vector<128x128xf32> to vector<128xf32>
    %83 = vector.shape_cast %82 : vector<128xf32> to vector<128x1xf32>
    %cst_23 = arith.constant 0.000000e+00 : f32
    %84 = vector.broadcast %cst_23 : f32 to vector<128x1xf32>
    %85 = arith.cmpf ogt, %73, %84 : vector<128x1xf32>
    %86 = arith.cmpf oge, %83, %73 : vector<128x1xf32>
    %87 = arith.andi %85, %86 : vector<128x1xi1>
    %88 = arith.select %87, %77, %72 : vector<128x1xi1>, vector<128x1xf32>
    %89 = arith.subf %73, %83 : vector<128x1xf32>
    %cst_24 = arith.constant -1.000000e+30 : f32
    %90 = vector.broadcast %cst_24 : f32 to vector<128x128xf32>
    %91 = arith.select %79, %90, %75 : vector<128x128xi1>, vector<128x128xf32>
    %92 = vector.broadcast %88 : vector<128x1xf32> to vector<128x128xf32>
    %93 = arith.cmpf ogt, %41, %92 : vector<128x128xf32>
    %94 = arith.ori %93, %16 : vector<128x128xi1>
    %cst_25 = arith.constant 1.000000e+00 : f32
    %cst_26 = arith.constant 0.000000e+00 : f32
    %95 = vector.broadcast %cst_25 : f32 to vector<128x128xf32>
    %96 = vector.broadcast %cst_26 : f32 to vector<128x128xf32>
    %97 = arith.select %94, %95, %96 : vector<128x128xi1>, vector<128x128xf32>
    %98 = arith.truncf %97 : vector<128x128xf32> to vector<128x128xbf16>
    %cst_27 = arith.constant dense<0.000000e+00> : vector<128x128xf32>
    %99 = tpu.matmul %98, %98, %cst_27 {dimension_numbers = #tpu.dot_dimension_numbers<[1], [1], [0], [0], [0, 0, 1, 0], [], []>} : vector<128x128xbf16>, vector<128x128xbf16>, vector<128x128xf32> -> vector<128x128xf32>
    %cst_28 = arith.constant 0.333333343 : f32
    %100 = vector.broadcast %cst_28 : f32 to vector<128x128xf32>
    %101 = arith.mulf %99, %100 : vector<128x128xf32>
    %102 = vector.broadcast %4 : f32 to vector<128x128xf32>
    %103 = arith.cmpf ogt, %101, %102 : vector<128x128xf32>
    %cst_29 = arith.constant 1.000000e+00 : f32
    %cst_30 = arith.constant 0.000000e+00 : f32
    %104 = vector.broadcast %cst_29 : f32 to vector<128x128xf32>
    %105 = vector.broadcast %cst_30 : f32 to vector<128x128xf32>
    %106 = arith.select %103, %104, %105 : vector<128x128xi1>, vector<128x128xf32>
    %cst_31 = arith.constant 1.17549435E-38 : f32
    %107 = vector.broadcast %cst_31 : f32 to vector<128x128xf32>
    %108 = arith.addf %101, %107 : vector<128x128xf32>
    %c0_32 = arith.constant 0 : index
    %c0_33 = arith.constant 0 : index
    %109 = vector.load %arg3[%c0_32, %c0_33] : memref<128x128xf32, #tpu.memory_space<vmem>>, vector<128x128xf32>
    %cst_34 = arith.constant 0.000000e+00 : f32
    %110 = vector.broadcast %cst_34 : f32 to vector<128x128xf32>
    %111 = arith.select %10, %110, %109 : vector<128x128xi1>, vector<128x128xf32>
    %cst_35 = arith.constant -1.000000e+30 : f32
    %112 = vector.shape_cast %14 : vector<1x128xi1> to vector<1x128xi1>
    %113 = vector.broadcast %112 : vector<1x128xi1> to vector<128x128xi1>
    %114 = vector.broadcast %cst_35 : f32 to vector<128x128xf32>
    %115 = arith.select %113, %111, %114 : vector<128x128xi1>, vector<128x128xf32>
    %cst_36 = arith.constant 3.000000e+00 : f32
    %116 = vector.broadcast %cst_36 : f32 to vector<128x1xf32>
    %cst_37 = arith.constant -1.000000e+30 : f32
    %117 = vector.broadcast %cst_37 : f32 to vector<128x1xf32>
    %c0_i32_38 = arith.constant 0 : i32
    %cst_39 = arith.constant dense<0xFF800000> : vector<128xf32>
    %118 = vector.multi_reduction <maximumf>, %115, %cst_39 [1] : vector<128x128xf32> to vector<128xf32>
    %119 = vector.shape_cast %118 : vector<128xf32> to vector<128x1xf32>
    %120 = vector.broadcast %119 : vector<128x1xf32> to vector<128x128xf32>
    %121 = arith.cmpf oeq, %115, %120 : vector<128x128xf32>
    %122 = arith.extui %121 : vector<128x128xi1> to vector<128x128xi32>
    %123 = arith.sitofp %122 : vector<128x128xi32> to vector<128x128xf32>
    %cst_40 = arith.constant dense<0.000000e+00> : vector<128xf32>
    %124 = vector.multi_reduction <add>, %123, %cst_40 [1] : vector<128x128xf32> to vector<128xf32>
    %125 = vector.shape_cast %124 : vector<128xf32> to vector<128x1xf32>
    %cst_41 = arith.constant 0.000000e+00 : f32
    %126 = vector.broadcast %cst_41 : f32 to vector<128x1xf32>
    %127 = arith.cmpf ogt, %116, %126 : vector<128x1xf32>
    %128 = arith.cmpf oge, %125, %116 : vector<128x1xf32>
    %129 = arith.andi %127, %128 : vector<128x1xi1>
    %130 = arith.select %129, %119, %117 : vector<128x1xi1>, vector<128x1xf32>
    %131 = arith.subf %116, %125 : vector<128x1xf32>
    %cst_42 = arith.constant -1.000000e+30 : f32
    %132 = vector.broadcast %cst_42 : f32 to vector<128x128xf32>
    %133 = arith.select %121, %132, %115 : vector<128x128xi1>, vector<128x128xf32>
    %c1_i32_43 = arith.constant 1 : i32
    %cst_44 = arith.constant dense<0xFF800000> : vector<128xf32>
    %134 = vector.multi_reduction <maximumf>, %133, %cst_44 [1] : vector<128x128xf32> to vector<128xf32>
    %135 = vector.shape_cast %134 : vector<128xf32> to vector<128x1xf32>
    %136 = vector.broadcast %135 : vector<128x1xf32> to vector<128x128xf32>
    %137 = arith.cmpf oeq, %133, %136 : vector<128x128xf32>
    %138 = arith.extui %137 : vector<128x128xi1> to vector<128x128xi32>
    %139 = arith.sitofp %138 : vector<128x128xi32> to vector<128x128xf32>
    %cst_45 = arith.constant dense<0.000000e+00> : vector<128xf32>
    %140 = vector.multi_reduction <add>, %139, %cst_45 [1] : vector<128x128xf32> to vector<128xf32>
    %141 = vector.shape_cast %140 : vector<128xf32> to vector<128x1xf32>
    %cst_46 = arith.constant 0.000000e+00 : f32
    %142 = vector.broadcast %cst_46 : f32 to vector<128x1xf32>
    %143 = arith.cmpf ogt, %131, %142 : vector<128x1xf32>
    %144 = arith.cmpf oge, %141, %131 : vector<128x1xf32>
    %145 = arith.andi %143, %144 : vector<128x1xi1>
    %146 = arith.select %145, %135, %130 : vector<128x1xi1>, vector<128x1xf32>
    %147 = arith.subf %131, %141 : vector<128x1xf32>
    %cst_47 = arith.constant -1.000000e+30 : f32
    %148 = vector.broadcast %cst_47 : f32 to vector<128x128xf32>
    %149 = arith.select %137, %148, %133 : vector<128x128xi1>, vector<128x128xf32>
    %c2_i32_48 = arith.constant 2 : i32
    %cst_49 = arith.constant dense<0xFF800000> : vector<128xf32>
    %150 = vector.multi_reduction <maximumf>, %149, %cst_49 [1] : vector<128x128xf32> to vector<128xf32>
    %151 = vector.shape_cast %150 : vector<128xf32> to vector<128x1xf32>
    %152 = vector.broadcast %151 : vector<128x1xf32> to vector<128x128xf32>
    %153 = arith.cmpf oeq, %149, %152 : vector<128x128xf32>
    %154 = arith.extui %153 : vector<128x128xi1> to vector<128x128xi32>
    %155 = arith.sitofp %154 : vector<128x128xi32> to vector<128x128xf32>
    %cst_50 = arith.constant dense<0.000000e+00> : vector<128xf32>
    %156 = vector.multi_reduction <add>, %155, %cst_50 [1] : vector<128x128xf32> to vector<128xf32>
    %157 = vector.shape_cast %156 : vector<128xf32> to vector<128x1xf32>
    %cst_51 = arith.constant 0.000000e+00 : f32
    %158 = vector.broadcast %cst_51 : f32 to vector<128x1xf32>
    %159 = arith.cmpf ogt, %147, %158 : vector<128x1xf32>
    %160 = arith.cmpf oge, %157, %147 : vector<128x1xf32>
    %161 = arith.andi %159, %160 : vector<128x1xi1>
    %162 = arith.select %161, %151, %146 : vector<128x1xi1>, vector<128x1xf32>
    %163 = arith.subf %147, %157 : vector<128x1xf32>
    %cst_52 = arith.constant -1.000000e+30 : f32
    %164 = vector.broadcast %cst_52 : f32 to vector<128x128xf32>
    %165 = arith.select %153, %164, %149 : vector<128x128xi1>, vector<128x128xf32>
    %166 = vector.broadcast %162 : vector<128x1xf32> to vector<128x128xf32>
    %167 = arith.cmpf ogt, %115, %166 : vector<128x128xf32>
    %168 = arith.ori %167, %16 : vector<128x128xi1>
    %cst_53 = arith.constant 1.000000e+00 : f32
    %cst_54 = arith.constant 0.000000e+00 : f32
    %169 = vector.broadcast %cst_53 : f32 to vector<128x128xf32>
    %170 = vector.broadcast %cst_54 : f32 to vector<128x128xf32>
    %171 = arith.select %168, %169, %170 : vector<128x128xi1>, vector<128x128xf32>
    %172 = arith.truncf %171 : vector<128x128xf32> to vector<128x128xbf16>
    %cst_55 = arith.constant dense<0.000000e+00> : vector<128x128xf32>
    %173 = tpu.matmul %172, %172, %cst_55 {dimension_numbers = #tpu.dot_dimension_numbers<[1], [1], [0], [0], [0, 0, 1, 0], [], []>} : vector<128x128xbf16>, vector<128x128xbf16>, vector<128x128xf32> -> vector<128x128xf32>
    %cst_56 = arith.constant 0.333333343 : f32
    %174 = vector.broadcast %cst_56 : f32 to vector<128x128xf32>
    %175 = arith.mulf %173, %174 : vector<128x128xf32>
    %cst_57 = arith.constant dense<0xFF800000> : vector<128xf32>
    %176 = vector.multi_reduction <maximumf>, %109, %cst_57 [1] : vector<128x128xf32> to vector<128xf32>
    %177 = vector.shape_cast %176 : vector<128xf32> to vector<128x1xf32>
    %cst_58 = arith.constant 0.000000e+00 : f32
    %178 = vector.broadcast %cst_58 : f32 to vector<128x1xf32>
    %179 = arith.cmpf ogt, %177, %178 : vector<128x1xf32>
    %cst_59 = arith.constant 1.000000e+00 : f32
    %180 = vector.broadcast %cst_59 : f32 to vector<128x1xf32>
    %181 = arith.select %179, %177, %180 : vector<128x1xi1>, vector<128x1xf32>
    %182 = tpu.reciprocal %181 {approx = true} : vector<128x1xf32> -> vector<128x1xf32>
    %183 = vector.broadcast %182 : vector<128x1xf32> to vector<128x128xf32>
    %184 = arith.mulf %109, %183 : vector<128x128xf32>
    %185 = vector.broadcast %4 : f32 to vector<128x128xf32>
    %186 = arith.cmpf ogt, %175, %185 : vector<128x128xf32>
    %cst_60 = arith.constant 1.000000e+00 : f32
    %cst_61 = arith.constant 0.000000e+00 : f32
    %187 = vector.broadcast %cst_60 : f32 to vector<128x128xf32>
    %188 = vector.broadcast %cst_61 : f32 to vector<128x128xf32>
    %189 = arith.select %186, %187, %188 : vector<128x128xi1>, vector<128x128xf32>
    %cst_62 = arith.constant 1.17549435E-38 : f32
    %190 = vector.broadcast %cst_62 : f32 to vector<128x128xf32>
    %191 = arith.addf %175, %190 : vector<128x128xf32>
    %192 = arith.addf %189, %106 : vector<128x128xf32>
    %cst_63 = arith.constant 5.000000e-01 : f32
    %193 = vector.broadcast %cst_63 : f32 to vector<128x128xf32>
    %194 = arith.mulf %192, %193 : vector<128x128xf32>
    %cst_64 = arith.constant 0.000000e+00 : f32
    %195 = vector.shape_cast %12 : vector<128x1xi1> to vector<128x1xi1>
    %196 = vector.broadcast %195 : vector<128x1xi1> to vector<128x128xi1>
    %197 = vector.broadcast %cst_64 : f32 to vector<128x128xf32>
    %198 = arith.select %196, %194, %197 : vector<128x128xi1>, vector<128x128xf32>
    %cst_65 = arith.constant 0.000000e+00 : f32
    %199 = vector.shape_cast %14 : vector<1x128xi1> to vector<1x128xi1>
    %200 = vector.broadcast %199 : vector<1x128xi1> to vector<128x128xi1>
    %201 = vector.broadcast %cst_65 : f32 to vector<128x128xf32>
    %202 = arith.select %200, %198, %201 : vector<128x128xi1>, vector<128x128xf32>
    %cst_66 = arith.constant -1.000000e+30 : f32
    %203 = vector.shape_cast %14 : vector<1x128xi1> to vector<1x128xi1>
    %204 = vector.broadcast %203 : vector<1x128xi1> to vector<128x128xi1>
    %205 = vector.broadcast %cst_66 : f32 to vector<128x128xf32>
    %206 = arith.select %204, %106, %205 : vector<128x128xi1>, vector<128x128xf32>
    %cst_67 = arith.constant dense<0xFF800000> : vector<128xf32>
    %207 = vector.multi_reduction <maximumf>, %206, %cst_67 [1] : vector<128x128xf32> to vector<128xf32>
    %208 = vector.shape_cast %207 : vector<128xf32> to vector<128x1xf32>
    %209 = vector.broadcast %208 : vector<128x1xf32> to vector<128x128xf32>
    %210 = arith.subf %206, %209 : vector<128x128xf32>
    %211 = math.exp %210 : vector<128x128xf32>
    %cst_68 = arith.constant dense<0.000000e+00> : vector<128xf32>
    %212 = vector.multi_reduction <add>, %211, %cst_68 [1] : vector<128x128xf32> to vector<128xf32>
    %213 = vector.shape_cast %212 : vector<128xf32> to vector<128x1xf32>
    %214 = math.log %213 : vector<128x1xf32>
    %215 = arith.addf %208, %214 : vector<128x1xf32>
    %216 = vector.broadcast %215 : vector<128x1xf32> to vector<128x128xf32>
    %217 = arith.subf %216, %106 : vector<128x128xf32>
    %218 = arith.mulf %184, %217 : vector<128x128xf32>
    %219 = vector.shape_cast %218 : vector<128x128xf32> to vector<1x128x128xf32>
    %cst_69 = arith.constant dense<0.000000e+00> : vector<1xf32>
    %220 = vector.multi_reduction <add>, %219, %cst_69 [1, 2] : vector<1x128x128xf32> to vector<1xf32>
    %221 = vector.shape_cast %220 : vector<1xf32> to vector<1x1x1xf32>
    %222 = vector.extract %221[0, 0, 0] : f32 from vector<1x1x1xf32>
    %cst_70 = arith.constant -1.000000e+30 : f32
    %223 = vector.shape_cast %14 : vector<1x128xi1> to vector<1x128xi1>
    %224 = vector.broadcast %223 : vector<1x128xi1> to vector<128x128xi1>
    %225 = vector.broadcast %cst_70 : f32 to vector<128x128xf32>
    %226 = arith.select %224, %189, %225 : vector<128x128xi1>, vector<128x128xf32>
    %cst_71 = arith.constant dense<0xFF800000> : vector<128xf32>
    %227 = vector.multi_reduction <maximumf>, %226, %cst_71 [1] : vector<128x128xf32> to vector<128xf32>
    %228 = vector.shape_cast %227 : vector<128xf32> to vector<128x1xf32>
    %229 = vector.broadcast %228 : vector<128x1xf32> to vector<128x128xf32>
    %230 = arith.subf %226, %229 : vector<128x128xf32>
    %231 = math.exp %230 : vector<128x128xf32>
    %cst_72 = arith.constant dense<0.000000e+00> : vector<128xf32>
    %232 = vector.multi_reduction <add>, %231, %cst_72 [1] : vector<128x128xf32> to vector<128xf32>
    %233 = vector.shape_cast %232 : vector<128xf32> to vector<128x1xf32>
    %234 = math.log %233 : vector<128x1xf32>
    %235 = arith.addf %228, %234 : vector<128x1xf32>
    %236 = vector.broadcast %235 : vector<128x1xf32> to vector<128x128xf32>
    %237 = arith.subf %236, %189 : vector<128x128xf32>
    %238 = arith.mulf %35, %237 : vector<128x128xf32>
    %239 = vector.shape_cast %238 : vector<128x128xf32> to vector<1x128x128xf32>
    %cst_73 = arith.constant dense<0.000000e+00> : vector<1xf32>
    %240 = vector.multi_reduction <add>, %239, %cst_73 [1, 2] : vector<1x128x128xf32> to vector<1xf32>
    %241 = vector.shape_cast %240 : vector<1xf32> to vector<1x1x1xf32>
    %242 = vector.extract %241[0, 0, 0] : f32 from vector<1x1x1xf32>
    %cst_74 = arith.constant -1.000000e+30 : f32
    %243 = vector.shape_cast %14 : vector<1x128xi1> to vector<1x128xi1>
    %244 = vector.broadcast %243 : vector<1x128xi1> to vector<128x128xi1>
    %245 = vector.broadcast %cst_74 : f32 to vector<128x128xf32>
    %246 = arith.select %244, %108, %245 : vector<128x128xi1>, vector<128x128xf32>
    %cst_75 = arith.constant dense<0xFF800000> : vector<128xf32>
    %247 = vector.multi_reduction <maximumf>, %246, %cst_75 [1] : vector<128x128xf32> to vector<128xf32>
    %248 = vector.shape_cast %247 : vector<128xf32> to vector<128x1xf32>
    %249 = vector.broadcast %248 : vector<128x1xf32> to vector<128x128xf32>
    %250 = arith.subf %246, %249 : vector<128x128xf32>
    %251 = math.exp %250 : vector<128x128xf32>
    %cst_76 = arith.constant dense<0.000000e+00> : vector<128xf32>
    %252 = vector.multi_reduction <add>, %251, %cst_76 [1] : vector<128x128xf32> to vector<128xf32>
    %253 = vector.shape_cast %252 : vector<128xf32> to vector<128x1xf32>
    %254 = math.log %253 : vector<128x1xf32>
    %255 = arith.addf %248, %254 : vector<128x1xf32>
    %256 = vector.broadcast %255 : vector<128x1xf32> to vector<128x128xf32>
    %257 = arith.subf %256, %108 : vector<128x128xf32>
    %258 = arith.mulf %202, %257 : vector<128x128xf32>
    %259 = vector.shape_cast %258 : vector<128x128xf32> to vector<1x128x128xf32>
    %cst_77 = arith.constant dense<0.000000e+00> : vector<1xf32>
    %260 = vector.multi_reduction <add>, %259, %cst_77 [1, 2] : vector<1x128x128xf32> to vector<1xf32>
    %261 = vector.shape_cast %260 : vector<1xf32> to vector<1x1x1xf32>
    %262 = vector.extract %261[0, 0, 0] : f32 from vector<1x1x1xf32>
    %cst_78 = arith.constant -1.000000e+30 : f32
    %263 = vector.shape_cast %14 : vector<1x128xi1> to vector<1x128xi1>
    %264 = vector.broadcast %263 : vector<1x128xi1> to vector<128x128xi1>
    %265 = vector.broadcast %cst_78 : f32 to vector<128x128xf32>
    %266 = arith.select %264, %191, %265 : vector<128x128xi1>, vector<128x128xf32>
    %cst_79 = arith.constant dense<0xFF800000> : vector<128xf32>
    %267 = vector.multi_reduction <maximumf>, %266, %cst_79 [1] : vector<128x128xf32> to vector<128xf32>
    %268 = vector.shape_cast %267 : vector<128xf32> to vector<128x1xf32>
    %269 = vector.broadcast %268 : vector<128x1xf32> to vector<128x128xf32>
    %270 = arith.subf %266, %269 : vector<128x128xf32>
    %271 = math.exp %270 : vector<128x128xf32>
    %cst_80 = arith.constant dense<0.000000e+00> : vector<128xf32>
    %272 = vector.multi_reduction <add>, %271, %cst_80 [1] : vector<128x128xf32> to vector<128xf32>
    %273 = vector.shape_cast %272 : vector<128xf32> to vector<128x1xf32>
    %274 = math.log %273 : vector<128x1xf32>
    %275 = arith.addf %268, %274 : vector<128x1xf32>
    %276 = vector.broadcast %275 : vector<128x1xf32> to vector<128x128xf32>
    %277 = arith.subf %276, %191 : vector<128x128xf32>
    %278 = arith.mulf %202, %277 : vector<128x128xf32>
    %279 = vector.shape_cast %278 : vector<128x128xf32> to vector<1x128x128xf32>
    %cst_81 = arith.constant dense<0.000000e+00> : vector<1xf32>
    %280 = vector.multi_reduction <add>, %279, %cst_81 [1, 2] : vector<1x128x128xf32> to vector<1xf32>
    %281 = vector.shape_cast %280 : vector<1xf32> to vector<1x1x1xf32>
    %282 = vector.extract %281[0, 0, 0] : f32 from vector<1x1x1xf32>
    %283 = arith.mulf %0, %222 : f32
    %284 = arith.mulf %1, %242 : f32
    %285 = arith.addf %283, %284 : f32
    %286 = arith.mulf %2, %262 : f32
    %287 = arith.addf %285, %286 : f32
    %288 = arith.mulf %3, %282 : f32
    %289 = arith.addf %287, %288 : f32
    %290 = arith.mulf %289, %5 : f32
    %c0_82 = arith.constant 0 : index
    %291 = memref.load %arg4[%c0_82] : memref<1xf32, #tpu.memory_space<smem>>
    memref.store %290, %arg4[%c0_82] : memref<1xf32, #tpu.memory_space<smem>>
    %c0_83 = arith.constant 0 : index
    %c0_84 = arith.constant 0 : index
    %292 = vector.load %arg5[%c0_83, %c0_84] : memref<128x128xf32, #tpu.memory_space<vmem>>, vector<128x128xf32>
    tpu.vector_store %arg5[%c0_83, %c0_84], %35 {strides = array<i32>} : memref<128x128xf32, #tpu.memory_space<vmem>>, vector<128x128xf32>,
    %c0_85 = arith.constant 0 : index
    %c0_86 = arith.constant 0 : index
    %293 = vector.load %arg6[%c0_85, %c0_86] : memref<128x128xf32, #tpu.memory_space<vmem>>, vector<128x128xf32>
    tpu.vector_store %arg6[%c0_85, %c0_86], %108 {strides = array<i32>} : memref<128x128xf32, #tpu.memory_space<vmem>>, vector<128x128xf32>,
    %294 = arith.truncf %106 : vector<128x128xf32> to vector<128x128xbf16>
    %c0_87 = arith.constant 0 : index
    %c0_88 = arith.constant 0 : index
    %295 = vector.load %arg7[%c0_87, %c0_88] : memref<128x128xbf16, #tpu.memory_space<vmem>>, vector<128x128xbf16>
    tpu.vector_store %arg7[%c0_87, %c0_88], %294 {strides = array<i32>} : memref<128x128xbf16, #tpu.memory_space<vmem>>, vector<128x128xbf16>,
    %c0_89 = arith.constant 0 : index
    %c0_90 = arith.constant 0 : index
    %296 = vector.load %arg8[%c0_89, %c0_90] : memref<128x128xf32, #tpu.memory_space<vmem>>, vector<128x128xf32>
    tpu.vector_store %arg8[%c0_89, %c0_90], %191 {strides = array<i32>} : memref<128x128xf32, #tpu.memory_space<vmem>>, vector<128x128xf32>,
    %297 = arith.truncf %189 : vector<128x128xf32> to vector<128x128xbf16>
    %c0_91 = arith.constant 0 : index
    %c0_92 = arith.constant 0 : index
    %298 = vector.load %arg9[%c0_91, %c0_92] : memref<128x128xbf16, #tpu.memory_space<vmem>>, vector<128x128xbf16>
    tpu.vector_store %arg9[%c0_91, %c0_92], %297 {strides = array<i32>} : memref<128x128xbf16, #tpu.memory_space<vmem>>, vector<128x128xbf16>,
    return
  }
}

</mosaic_0001>

<llo_original>
// kernel: tpu_custom_call.1
$region0: #{tpu_custom_call.1}
  #allocation0 [shape = 'u32[]', space=smem, size = 0x4, offset = 0x4, fixed_abs, tag = 'smem constant byte address 0x4 - core index']
  #allocation1 [shape = 'u32[144,128]{1,0:T(1,128)}', space=vmem, size = 0x12000, scoped, tag = 'internal scratch']
  %s0 = inlined_call_operand.hbm [shape: f32[6], index: 0, kind: input, shape index: {}]
  %s1 = inlined_call_operand.hbm [shape: f32[128,128], index: 1, kind: input, shape index: {}]
  %s2 = inlined_call_operand.hbm [shape: f32[128,128], index: 2, kind: input, shape index: {}]
  %s3 = inlined_call_operand.hbm [shape: f32[128,128], index: 3, kind: input, shape index: {}]
  %s4 = inlined_call_operand.hbm [shape: f32[1], index: 4, kind: output, shape index: {0}]
  %s5 = inlined_call_operand.hbm [shape: f32[128,128], index: 5, kind: output, shape index: {1}]
  %s6 = inlined_call_operand.hbm [shape: f32[128,128], index: 6, kind: output, shape index: {2}]
  %s7 = inlined_call_operand.hbm [shape: bf16[128,128], index: 7, kind: output, shape index: {3}]
  %s8 = inlined_call_operand.hbm [shape: f32[128,128], index: 8, kind: output, shape index: {4}]
  %s9 = inlined_call_operand.hbm [shape: bf16[128,128], index: 9, kind: output, shape index: {5}]
  %10 = xla_tuple %s4, %s5, %s6, %s7, %s8, %s9
  %s11 = sld [smem:[#allocation0]]
  $region82: #{tpu_custom_call.1} parent=0
    _
  %s13 = ssub.s32 1, %s11
  %s14 = scalar_select 0, %s13, %s11
  $region1: #{tpu_custom_call.1} parent=0
    #allocation2 [shape = 'u8[512]{0}', space=smem, size = 0x200, scoped, tag = 'input window, operand 0, single buffered']
    #allocation3 [shape = 's32[1]{0}', space=sflag, size = 0x4, scoped, tag = 'scoped memory for tpu_custom_call.1']
    #allocation4 [shape = 's32[1]{0}', space=sflag, size = 0x4, scoped, tag = 'scoped memory for tpu_custom_call.1']
    #allocation5 [shape = 's32[1]{0}', space=sflag, size = 0x4, scoped, tag = 'scoped memory for tpu_custom_call.1']
    #allocation6 [shape = 's32[1]{0}', space=sflag, size = 0x4, scoped, tag = 'scoped memory for tpu_custom_call.1']
    #allocation7 [shape = 'u8[65536]{0}', space=vmem, size = 0x10000, scoped, tag = 'input window, operand 1, single buffered']
    #allocation8 [shape = 'u8[65536]{0}', space=vmem, size = 0x10000, scoped, tag = 'input window, operand 2, single buffered']
    #allocation9 [shape = 's32[1]{0}', space=sflag, size = 0x4, scoped, tag = 'scoped memory for tpu_custom_call.1']
    #allocation10 [shape = 'u8[65536]{0}', space=vmem, size = 0x10000, scoped, tag = 'input window, operand 3, single buffered']
    #allocation11 [shape = 'u8[512]{0}', space=smem, size = 0x200, scoped, tag = 'output window, operand 0, single buffered']
    #allocation12 [shape = 'u8[65536]{0}', space=vmem, size = 0x10000, scoped, tag = 'output window, operand 1, single buffered']
    #allocation13 [shape = 'u8[65536]{0}', space=vmem, size = 0x10000, scoped, tag = 'output window, operand 2, single buffered']
    #allocation14 [shape = 's32[1]{0}', space=sflag, size = 0x4, scoped, tag = 'scoped memory for tpu_custom_call.1']
    #allocation15 [shape = 'u8[32768]{0}', space=vmem, size = 0x8000, scoped, tag = 'output window, operand 3, single buffered']
    #allocation16 [shape = 'u8[65536]{0}', space=vmem, size = 0x10000, scoped, tag = 'output window, operand 4, single buffered']
    #allocation17 [shape = 's32[1]{0}', space=sflag, size = 0x4, scoped, tag = 'scoped memory for tpu_custom_call.1']
    #allocation18 [shape = 'u8[32768]{0}', space=vmem, size = 0x8000, scoped, tag = 'output window, operand 5, single buffered']
    %15 = vsyncpa [#allocation5], 0
    %16 = vsyncpa [#allocation3], 0
    %17 = vsyncpa [#allocation9], 0
    %18 = vsyncpa [#allocation6], 0
    %19 = vsyncpa [#allocation4], 0
    %20 = vsyncpa [#allocation14], 0
    %21 = vsyncpa [#allocation17], 0
    // Predicated region
    $region2: #{tpu_custom_call.1} parent=1 // pred_check
      _
    $region3: #{tpu_custom_call.1} parent=1 // pred_check_branch
      %23 = sbr.rel (0) target = $region5
    $region4: #{tpu_custom_call.1} parent=1 // pred_region
      %s25 = ssub.s32 16, 16
      %26 = vsyncadd [#allocation5], %s25
      %29 = dma.hbm_to_smem %s0, 16, [#allocation2], [#allocation5]
    $region5: #{tpu_custom_call.1} parent=1 // pred_fallthru
      _
    // Predicated region
    $region6: #{tpu_custom_call.1} parent=1 // pred_check
      _
    $region7: #{tpu_custom_call.1} parent=1 // pred_check_branch
      %31 = sbr.rel (0) target = $region9
    $region8: #{tpu_custom_call.1} parent=1 // pred_region
      %s33 = ssub.s32 2048, 2048
      %34 = vsyncadd [#allocation3], %s33
      %s35 = sshll.u32 [#allocation7], 4
      %s36 = int_to_ptr.vmem [resolvable:$true] %s35
      %41 = dma.hbm_to_vmem [thread:$0]  %s1, 2048, %s36, [#allocation3], 128, 128, 8
    $region9: #{tpu_custom_call.1} parent=1 // pred_fallthru
      _
    // Predicated region
    $region10: #{tpu_custom_call.1} parent=1 // pred_check
      _
    $region11: #{tpu_custom_call.1} parent=1 // pred_check_branch
      %43 = sbr.rel (0) target = $region13
    $region12: #{tpu_custom_call.1} parent=1 // pred_region
      %s45 = ssub.s32 2048, 2048
      %46 = vsyncadd [#allocation9], %s45
      %s47 = sshll.u32 [#allocation8], 4
      %s48 = int_to_ptr.vmem [resolvable:$true] %s47
      %53 = dma.hbm_to_vmem [thread:$0]  %s2, 2048, %s48, [#allocation9], 128, 128, 8
    $region13: #{tpu_custom_call.1} parent=1 // pred_fallthru
      _
    // Predicated region
    $region14: #{tpu_custom_call.1} parent=1 // pred_check
      _
    $region15: #{tpu_custom_call.1} parent=1 // pred_check_branch
      %55 = sbr.rel (0) target = $region17
    $region16: #{tpu_custom_call.1} parent=1 // pred_region
      %s57 = ssub.s32 2048, 2048
      %58 = vsyncadd [#allocation9], %s57
      %s59 = sshll.u32 [#allocation10], 4
      %s60 = int_to_ptr.vmem [resolvable:$true] %s59
      %65 = dma.hbm_to_vmem [thread:$0]  %s3, 2048, %s60, [#allocation9], 128, 128, 8
    $region17: #{tpu_custom_call.1} parent=1 // pred_fallthru
      _
    // Predicated region
    $region18: #{tpu_custom_call.1} parent=1 // pred_check
      _
    $region19: #{tpu_custom_call.1} parent=1 // pred_check_branch
      %67 = sbr.rel (0) target = $region21
    $region20: #{tpu_custom_call.1} parent=1 // pred_region
      %68 = dma.done [#allocation5], 16
    $region21: #{tpu_custom_call.1} parent=1 // pred_fallthru
      _
    // Predicated region
    $region22: #{tpu_custom_call.1} parent=1 // pred_check
      _
    $region23: #{tpu_custom_call.1} parent=1 // pred_check_branch
      %70 = sbr.rel (0) target = $region25
    $region24: #{tpu_custom_call.1} parent=1 // pred_region
      %71 = dma.done [#allocation3], 2048
    $region25: #{tpu_custom_call.1} parent=1 // pred_fallthru
      _
    // Predicated region
    $region26: #{tpu_custom_call.1} parent=1 // pred_check
      _
    $region27: #{tpu_custom_call.1} parent=1 // pred_check_branch
      %73 = sbr.rel (0) target = $region29
    $region28: #{tpu_custom_call.1} parent=1 // pred_region
      %74 = dma.done [#allocation9], 2048
    $region29: #{tpu_custom_call.1} parent=1 // pred_fallthru
      _
    // Predicated region
    $region30: #{tpu_custom_call.1} parent=1 // pred_check
      _
    $region31: #{tpu_custom_call.1} parent=1 // pred_check_branch
      %76 = sbr.rel (0) target = $region33
    $region32: #{tpu_custom_call.1} parent=1 // pred_region
      %77 = dma.done [#allocation9], 2048
    $region33: #{tpu_custom_call.1} parent=1 // pred_fallthru
      _
    %78 = sfence
    %s80 = sld [smem:[#allocation2]]
    %s81 = sld [smem:[#allocation2 + $0x1]]
    %s82 = sld [smem:[#allocation2 + $0x2]]
    %s83 = sld [smem:[#allocation2 + $0x3]]
    %s84 = sld [smem:[#allocation2 + $0x4]]
    %s85 = sld [smem:[#allocation2 + $0x5]]
    %v86 = vlaneseq
    %v87 = vshrl.u32 %v86, 7
    %v88 = vadd.s32 %v87, 8
    %v89 = vadd.s32 %v87, 16
    %v90 = vadd.s32 %v87, 24
    %v91 = vadd.s32 %v87, 32
    %v92 = vadd.s32 %v87, 40
    %v93 = vadd.s32 %v87, 48
    %v94 = vadd.s32 %v87, 56
    %v95 = vadd.s32 %v87, 64
    %v96 = vadd.s32 %v87, 72
    %v97 = vadd.s32 %v87, 80
    %v98 = vadd.s32 %v87, 88
    %v99 = vadd.s32 %v87, 96
    %v100 = vadd.s32 %v87, 104
    %v101 = vadd.s32 %v87, 112
    %v102 = vadd.s32 %v87, 120
    %v103 = vlaneseq
    %v104 = vand.u32 %v103, 127
    %vm105 = vcmp.eq.s32.totalorder %v87, %v104
    %vm106 = vcmp.eq.s32.totalorder %v88, %v104
    %vm107 = vcmp.eq.s32.totalorder %v89, %v104
    %vm108 = vcmp.eq.s32.totalorder %v90, %v104
    %vm109 = vcmp.eq.s32.totalorder %v91, %v104
    %vm110 = vcmp.eq.s32.totalorder %v92, %v104
    %vm111 = vcmp.eq.s32.totalorder %v93, %v104
    %vm112 = vcmp.eq.s32.totalorder %v94, %v104
    %vm113 = vcmp.eq.s32.totalorder %v95, %v104
    %vm114 = vcmp.eq.s32.totalorder %v96, %v104
    %vm115 = vcmp.eq.s32.totalorder %v97, %v104
    %vm116 = vcmp.eq.s32.totalorder %v98, %v104
    %vm117 = vcmp.eq.s32.totalorder %v99, %v104
    %vm118 = vcmp.eq.s32.totalorder %v100, %v104
    %vm119 = vcmp.eq.s32.totalorder %v101, %v104
    %vm120 = vcmp.eq.s32.totalorder %v102, %v104
    %vm121 = vcmp.lt.s32.totalorder %v87, 8
    %vm122 = vcmp.lt.s32.totalorder %v88, 8
    %vm123 = vcmp.lt.s32.totalorder %v89, 8
    %vm124 = vcmp.lt.s32.totalorder %v90, 8
    %vm125 = vcmp.lt.s32.totalorder %v91, 8
    %vm126 = vcmp.lt.s32.totalorder %v92, 8
    %vm127 = vcmp.lt.s32.totalorder %v93, 8
    %vm128 = vcmp.lt.s32.totalorder %v94, 8
    %vm129 = vcmp.lt.s32.totalorder %v95, 8
    %vm130 = vcmp.lt.s32.totalorder %v96, 8
    %vm131 = vcmp.lt.s32.totalorder %v97, 8
    %vm132 = vcmp.lt.s32.totalorder %v98, 8
    %vm133 = vcmp.lt.s32.totalorder %v99, 8
    %vm134 = vcmp.lt.s32.totalorder %v100, 8
    %vm135 = vcmp.lt.s32.totalorder %v101, 8
    %vm136 = vcmp.lt.s32.totalorder %v102, 8
    %vm137 = vcmp.lt.s32.totalorder %v104, 8
    %v138 = vsel %vm121, 1, 0
    %v139 = vsel %vm122, 1, 0
    %v140 = vsel %vm123, 1, 0
    %v141 = vsel %vm124, 1, 0
    %v142 = vsel %vm125, 1, 0
    %v143 = vsel %vm126, 1, 0
    %v144 = vsel %vm127, 1, 0
    %v145 = vsel %vm128, 1, 0
    %v146 = vsel %vm129, 1, 0
    %v147 = vsel %vm130, 1, 0
    %v148 = vsel %vm131, 1, 0
    %v149 = vsel %vm132, 1, 0
    %v150 = vsel %vm133, 1, 0
    %v151 = vsel %vm134, 1, 0
    %v152 = vsel %vm135, 1, 0
    %v153 = vsel %vm136, 1, 0
    %vm154 = vcmp.eq.s32.totalorder %v138, 1
    %vm155 = vcmp.eq.s32.totalorder %v139, 1
    %vm156 = vcmp.eq.s32.totalorder %v140, 1
    %vm157 = vcmp.eq.s32.totalorder %v141, 1
    %vm158 = vcmp.eq.s32.totalorder %v142, 1
    %vm159 = vcmp.eq.s32.totalorder %v143, 1
    %vm160 = vcmp.eq.s32.totalorder %v144, 1
    %vm161 = vcmp.eq.s32.totalorder %v145, 1
    %vm162 = vcmp.eq.s32.totalorder %v146, 1
    %vm163 = vcmp.eq.s32.totalorder %v147, 1
    %vm164 = vcmp.eq.s32.totalorder %v148, 1
    %vm165 = vcmp.eq.s32.totalorder %v149, 1
    %vm166 = vcmp.eq.s32.totalorder %v150, 1
    %vm167 = vcmp.eq.s32.totalorder %v151, 1
    %vm168 = vcmp.eq.s32.totalorder %v152, 1
    %vm169 = vcmp.eq.s32.totalorder %v153, 1
    %vm170 = vmand %vm105, %vm154
    %vm171 = vmand %vm106, %vm155
    %vm172 = vmand %vm107, %vm156
    %vm173 = vmand %vm108, %vm157
    %vm174 = vmand %vm109, %vm158
    %vm175 = vmand %vm110, %vm159
    %vm176 = vmand %vm111, %vm160
    %vm177 = vmand %vm112, %vm161
    %vm178 = vmand %vm113, %vm162
    %vm179 = vmand %vm114, %vm163
    %vm180 = vmand %vm115, %vm164
    %vm181 = vmand %vm116, %vm165
    %vm182 = vmand %vm117, %vm166
    %vm183 = vmand %vm118, %vm167
    %vm184 = vmand %vm119, %vm168
    %vm185 = vmand %vm120, %vm169
    %v186 = vld [vmem:[#allocation7] sm:$0xff]
    %v187 = vld [vmem:[#allocation7 + $0x8] sm:$0xff]
    %v188 = vld [vmem:[#allocation7 + $0x10] sm:$0xff]
    %v189 = vld [vmem:[#allocation7 + $0x18] sm:$0xff]
    %v190 = vld [vmem:[#allocation7 + $0x20] sm:$0xff]
    %v191 = vld [vmem:[#allocation7 + $0x28] sm:$0xff]
    %v192 = vld [vmem:[#allocation7 + $0x30] sm:$0xff]
    %v193 = vld [vmem:[#allocation7 + $0x38] sm:$0xff]
    %v194 = vld [vmem:[#allocation7 + $0x40] sm:$0xff]
    %v195 = vld [vmem:[#allocation7 + $0x48] sm:$0xff]
    %v196 = vld [vmem:[#allocation7 + $0x50] sm:$0xff]
    %v197 = vld [vmem:[#allocation7 + $0x58] sm:$0xff]
    %v198 = vld [vmem:[#allocation7 + $0x60] sm:$0xff]
    %v199 = vld [vmem:[#allocation7 + $0x68] sm:$0xff]
    %v200 = vld [vmem:[#allocation7 + $0x70] sm:$0xff]
    %v201 = vld [vmem:[#allocation7 + $0x78] sm:$0xff]
    %v202 = vld [vmem:[#allocation8] sm:$0xff]
    %v203 = vld [vmem:[#allocation8 + $0x8] sm:$0xff]
    %v204 = vld [vmem:[#allocation8 + $0x10] sm:$0xff]
    %v205 = vld [vmem:[#allocation8 + $0x18] sm:$0xff]
    %v206 = vld [vmem:[#allocation8 + $0x20] sm:$0xff]
    %v207 = vld [vmem:[#allocation8 + $0x28] sm:$0xff]
    %v208 = vld [vmem:[#allocation8 + $0x30] sm:$0xff]
    %v209 = vld [vmem:[#allocation8 + $0x38] sm:$0xff]
    %v210 = vld [vmem:[#allocation8 + $0x40] sm:$0xff]
    %v211 = vld [vmem:[#allocation8 + $0x48] sm:$0xff]
    %v212 = vld [vmem:[#allocation8 + $0x50] sm:$0xff]
    %v213 = vld [vmem:[#allocation8 + $0x58] sm:$0xff]
    %v214 = vld [vmem:[#allocation8 + $0x60] sm:$0xff]
    %v215 = vld [vmem:[#allocation8 + $0x68] sm:$0xff]
    %v216 = vld [vmem:[#allocation8 + $0x70] sm:$0xff]
    %v217 = vld [vmem:[#allocation8 + $0x78] sm:$0xff]
    %v218 = vmul.f32 %v186, %v186
    %v219 = vmul.f32 %v187, %v187
    %v220 = vmul.f32 %v188, %v188
    %v221 = vmul.f32 %v189, %v189
    %v222 = vmul.f32 %v190, %v190
    %v223 = vmul.f32 %v191, %v191
    %v224 = vmul.f32 %v192, %v192
    %v225 = vmul.f32 %v193, %v193
    %v226 = vmul.f32 %v194, %v194
    %v227 = vmul.f32 %v195, %v195
    %v228 = vmul.f32 %v196, %v196
    %v229 = vmul.f32 %v197, %v197
    %v230 = vmul.f32 %v198, %v198
    %v231 = vmul.f32 %v199, %v199
    %v232 = vmul.f32 %v200, %v200
    %v233 = vmul.f32 %v201, %v201
    %234 = vadd.xlane.f32.xlu0 %v218
    %v235 = vpop.xlane.xlu0 %234
    %236 = vadd.xlane.f32.xlu0 %v219
    %v237 = vpop.xlane.xlu0 %236
    %238 = vadd.xlane.f32.xlu0 %v220
    %v239 = vpop.xlane.xlu0 %238
    %240 = vadd.xlane.f32.xlu0 %v221
    %v241 = vpop.xlane.xlu0 %240
    %242 = vadd.xlane.f32.xlu0 %v222
    %v243 = vpop.xlane.xlu0 %242
    %244 = vadd.xlane.f32.xlu0 %v223
    %v245 = vpop.xlane.xlu0 %244
    %246 = vadd.xlane.f32.xlu0 %v224
    %v247 = vpop.xlane.xlu0 %246
    %248 = vadd.xlane.f32.xlu0 %v225
    %v249 = vpop.xlane.xlu0 %248
    %250 = vadd.xlane.f32.xlu0 %v226
    %v251 = vpop.xlane.xlu0 %250
    %252 = vadd.xlane.f32.xlu0 %v227
    %v253 = vpop.xlane.xlu0 %252
    %254 = vadd.xlane.f32.xlu0 %v228
    %v255 = vpop.xlane.xlu0 %254
    %256 = vadd.xlane.f32.xlu0 %v229
    %v257 = vpop.xlane.xlu0 %256
    %258 = vadd.xlane.f32.xlu0 %v230
    %v259 = vpop.xlane.xlu0 %258
    %260 = vadd.xlane.f32.xlu0 %v231
    %v261 = vpop.xlane.xlu0 %260
    %262 = vadd.xlane.f32.xlu0 %v232
    %v263 = vpop.xlane.xlu0 %262
    %264 = vadd.xlane.f32.xlu0 %v233
    %v265 = vpop.xlane.xlu0 %264
    %v266 = vmax.f32 %v235, 1e-24
    %v267 = vmax.f32 %v237, 1e-24
    %v268 = vmax.f32 %v239, 1e-24
    %v269 = vmax.f32 %v241, 1e-24
    %v270 = vmax.f32 %v243, 1e-24
    %v271 = vmax.f32 %v245, 1e-24
    %v272 = vmax.f32 %v247, 1e-24
    %v273 = vmax.f32 %v249, 1e-24
    %v274 = vmax.f32 %v251, 1e-24
    %v275 = vmax.f32 %v253, 1e-24
    %v276 = vmax.f32 %v255, 1e-24
    %v277 = vmax.f32 %v257, 1e-24
    %v278 = vmax.f32 %v259, 1e-24
    %v279 = vmax.f32 %v261, 1e-24
    %v280 = vmax.f32 %v263, 1e-24
    %v281 = vmax.f32 %v265, 1e-24
    %v282 = vrsqrt.pop %v266
    %v283 = vrsqrt.pop %v267
    %v284 = vrsqrt.pop %v268
    %v285 = vrsqrt.pop %v269
    %v286 = vrsqrt.pop %v270
    %v287 = vrsqrt.pop %v271
    %v288 = vrsqrt.pop %v272
    %v289 = vrsqrt.pop %v273
    %v290 = vrsqrt.pop %v274
    %v291 = vrsqrt.pop %v275
    %v292 = vrsqrt.pop %v276
    %v293 = vrsqrt.pop %v277
    %v294 = vrsqrt.pop %v278
    %v295 = vrsqrt.pop %v279
    %v296 = vrsqrt.pop %v280
    %v297 = vrsqrt.pop %v281
    %v298 = vmul.f32 %v186, %v282
    %v299 = vmul.f32 %v187, %v283
    %v300 = vmul.f32 %v188, %v284
    %v301 = vmul.f32 %v189, %v285
    %v302 = vmul.f32 %v190, %v286
    %v303 = vmul.f32 %v191, %v287
    %v304 = vmul.f32 %v192, %v288
    %v305 = vmul.f32 %v193, %v289
    %v306 = vmul.f32 %v194, %v290
    %v307 = vmul.f32 %v195, %v291
    %v308 = vmul.f32 %v196, %v292
    %v309 = vmul.f32 %v197, %v293
    %v310 = vmul.f32 %v198, %v294
    %v311 = vmul.f32 %v199, %v295
    %v312 = vmul.f32 %v200, %v296
    %v313 = vmul.f32 %v201, %v297
    %v314 = vmul.f32 %v202, %v202
    %v315 = vmul.f32 %v203, %v203
    %v316 = vmul.f32 %v204, %v204
    %v317 = vmul.f32 %v205, %v205
    %v318 = vmul.f32 %v206, %v206
    %v319 = vmul.f32 %v207, %v207
    %v320 = vmul.f32 %v208, %v208
    %v321 = vmul.f32 %v209, %v209
    %v322 = vmul.f32 %v210, %v210
    %v323 = vmul.f32 %v211, %v211
    %v324 = vmul.f32 %v212, %v212
    %v325 = vmul.f32 %v213, %v213
    %v326 = vmul.f32 %v214, %v214
    %v327 = vmul.f32 %v215, %v215
    %v328 = vmul.f32 %v216, %v216
    %v329 = vmul.f32 %v217, %v217
    %330 = vadd.xlane.f32.xlu0 %v314
    %v331 = vpop.xlane.xlu0 %330
    %332 = vadd.xlane.f32.xlu0 %v315
    %v333 = vpop.xlane.xlu0 %332
    %334 = vadd.xlane.f32.xlu0 %v316
    %v335 = vpop.xlane.xlu0 %334
    %336 = vadd.xlane.f32.xlu0 %v317
    %v337 = vpop.xlane.xlu0 %336
    %338 = vadd.xlane.f32.xlu0 %v318
    %v339 = vpop.xlane.xlu0 %338
    %340 = vadd.xlane.f32.xlu0 %v319
    %v341 = vpop.xlane.xlu0 %340
    %342 = vadd.xlane.f32.xlu0 %v320
    %v343 = vpop.xlane.xlu0 %342
    %344 = vadd.xlane.f32.xlu0 %v321
    %v345 = vpop.xlane.xlu0 %344
    %346 = vadd.xlane.f32.xlu0 %v322
    %v347 = vpop.xlane.xlu0 %346
    %348 = vadd.xlane.f32.xlu0 %v323
    %v349 = vpop.xlane.xlu0 %348
    %350 = vadd.xlane.f32.xlu0 %v324
    %v351 = vpop.xlane.xlu0 %350
    %352 = vadd.xlane.f32.xlu0 %v325
    %v353 = vpop.xlane.xlu0 %352
    %354 = vadd.xlane.f32.xlu0 %v326
    %v355 = vpop.xlane.xlu0 %354
    %356 = vadd.xlane.f32.xlu0 %v327
    %v357 = vpop.xlane.xlu0 %356
    %358 = vadd.xlane.f32.xlu0 %v328
    %v359 = vpop.xlane.xlu0 %358
    %360 = vadd.xlane.f32.xlu0 %v329
    %v361 = vpop.xlane.xlu0 %360
    %v362 = vmax.f32 %v331, 1e-24
    %v363 = vmax.f32 %v333, 1e-24
    %v364 = vmax.f32 %v335, 1e-24
    %v365 = vmax.f32 %v337, 1e-24
    %v366 = vmax.f32 %v339, 1e-24
    %v367 = vmax.f32 %v341, 1e-24
    %v368 = vmax.f32 %v343, 1e-24
    %v369 = vmax.f32 %v345, 1e-24
    %v370 = vmax.f32 %v347, 1e-24
    %v371 = vmax.f32 %v349, 1e-24
    %v372 = vmax.f32 %v351, 1e-24
    %v373 = vmax.f32 %v353, 1e-24
    %v374 = vmax.f32 %v355, 1e-24
    %v375 = vmax.f32 %v357, 1e-24
    %v376 = vmax.f32 %v359, 1e-24
    %v377 = vmax.f32 %v361, 1e-24
    %v378 = vrsqrt.pop %v362
    %v379 = vrsqrt.pop %v363
    %v380 = vrsqrt.pop %v364
    %v381 = vrsqrt.pop %v365
    %v382 = vrsqrt.pop %v366
    %v383 = vrsqrt.pop %v367
    %v384 = vrsqrt.pop %v368
    %v385 = vrsqrt.pop %v369
    %v386 = vrsqrt.pop %v370
    %v387 = vrsqrt.pop %v371
    %v388 = vrsqrt.pop %v372
    %v389 = vrsqrt.pop %v373
    %v390 = vrsqrt.pop %v374
    %v391 = vrsqrt.pop %v375
    %v392 = vrsqrt.pop %v376
    %v393 = vrsqrt.pop %v377
    %v394 = vmul.f32 %v202, %v378
    %v395 = vmul.f32 %v203, %v379
    %v396 = vmul.f32 %v204, %v380
    %v397 = vmul.f32 %v205, %v381
    %v398 = vmul.f32 %v206, %v382
    %v399 = vmul.f32 %v207, %v383
    %v400 = vmul.f32 %v208, %v384
    %v401 = vmul.f32 %v209, %v385
    %v402 = vmul.f32 %v210, %v386
    %v403 = vmul.f32 %v211, %v387
    %v404 = vmul.f32 %v212, %v388
    %v405 = vmul.f32 %v213, %v389
    %v406 = vmul.f32 %v214, %v390
    %v407 = vmul.f32 %v215, %v391
    %v408 = vmul.f32 %v216, %v392
    %v409 = vmul.f32 %v217, %v393
    %410 = vmatprep.subr.mxu0 0.0
    %v411 = vand.u32 %v394, 4294901760
    %412 = vmatpush1.xpose.msra.mxu0 %v411
    %413 = vmatprep.subr.mxu0 0.0
    %v414 = vand.u32 %v395, 4294901760
    %415 = vmatpush1.xpose.msra.mxu0 %v414
    %416 = vmatprep.subr.mxu0 0.0
    %v417 = vand.u32 %v396, 4294901760
    %418 = vmatpush1.xpose.msra.mxu0 %v417
    %419 = vmatprep.subr.mxu0 0.0
    %v420 = vand.u32 %v397, 4294901760
    %421 = vmatpush1.xpose.msra.mxu0 %v420
    %422 = vmatprep.subr.mxu0 0.0
    %v423 = vand.u32 %v398, 4294901760
    %424 = vmatpush1.xpose.msra.mxu0 %v423
    %425 = vmatprep.subr.mxu0 0.0
    %v426 = vand.u32 %v399, 4294901760
    %427 = vmatpush1.xpose.msra.mxu0 %v426
    %428 = vmatprep.subr.mxu0 0.0
    %v429 = vand.u32 %v400, 4294901760
    %430 = vmatpush1.xpose.msra.mxu0 %v429
    %431 = vmatprep.subr.mxu0 0.0
    %v432 = vand.u32 %v401, 4294901760
    %433 = vmatpush1.xpose.msra.mxu0 %v432
    %434 = vmatprep.subr.mxu0 0.0
    %v435 = vand.u32 %v402, 4294901760
    %436 = vmatpush1.xpose.msra.mxu0 %v435
    %437 = vmatprep.subr.mxu0 0.0
    %v438 = vand.u32 %v403, 4294901760
    %439 = vmatpush1.xpose.msra.mxu0 %v438
    %440 = vmatprep.subr.mxu0 0.0
    %v441 = vand.u32 %v404, 4294901760
    %442 = vmatpush1.xpose.msra.mxu0 %v441
    %443 = vmatprep.subr.mxu0 0.0
    %v444 = vand.u32 %v405, 4294901760
    %445 = vmatpush1.xpose.msra.mxu0 %v444
    %446 = vmatprep.subr.mxu0 0.0
    %v447 = vand.u32 %v406, 4294901760
    %448 = vmatpush1.xpose.msra.mxu0 %v447
    %449 = vmatprep.subr.mxu0 0.0
    %v450 = vand.u32 %v407, 4294901760
    %451 = vmatpush1.xpose.msra.mxu0 %v450
    %452 = vmatprep.subr.mxu0 0.0
    %v453 = vand.u32 %v408, 4294901760
    %454 = vmatpush1.xpose.msra.mxu0 %v453
    %455 = vmatprep.subr.mxu0 0.0
    %v456 = vand.u32 %v409, 4294901760
    %457 = vmatpush1.xpose.msra.mxu0 %v456
    %458 = vmatprep.subr.mxu0 0.0
    %459 = vmatpush1.xpose.msra.mxu0 0.0
    %460 = vmatprep.subr.mxu0 0.0
    %461 = vmatpush1.xpose.msra.mxu0 0.0
    %462 = vmatprep.subr.mxu0 0.0
    %463 = vmatpush1.xpose.msra.mxu0 0.0
    %464 = vmatprep.subr.mxu0 0.0
    %465 = vmatpush1.xpose.msra.mxu0 0.0
    %466 = vmatprep.subr.mxu0 0.0
    %467 = vmatpush1.xpose.msra.mxu0 0.0
    %468 = vmatprep.subr.mxu0 0.0
    %469 = vmatpush1.xpose.msra.mxu0 0.0
    %470 = vmatprep.subr.mxu0 0.0
    %471 = vmatpush1.xpose.msra.mxu0 0.0
    %472 = vmatprep.subr.mxu0 0.0
    %473 = vmatpush1.xpose.msra.mxu0 0.0
    %474 = vmatprep.subr.mxu0 0.0
    %475 = vmatpush1.xpose.msra.mxu0 0.0
    %476 = vmatprep.subr.mxu0 0.0
    %477 = vmatpush1.xpose.msra.mxu0 0.0
    %478 = vmatprep.subr.mxu0 0.0
    %479 = vmatpush1.xpose.msra.mxu0 0.0
    %480 = vmatprep.subr.mxu0 0.0
    %481 = vmatpush1.xpose.msra.mxu0 0.0
    %482 = vmatprep.subr.mxu0 0.0
    %483 = vmatpush1.xpose.msra.mxu0 0.0
    %484 = vmatprep.subr.mxu0 0.0
    %485 = vmatpush1.xpose.msra.mxu0 0.0
    %486 = vmatprep.subr.mxu0 0.0
    %487 = vmatpush1.xpose.msra.mxu0 0.0
    %488 = vmatprep.subr.mxu0 0.0
    %489 = vmatpush1.xpose.msra.mxu0 0.0
    %490 = vmatprep.mubr.f32.mxu0 0.0
    %v491 = vand.u32 %v298, 4294901760
    %v492 = vsub.f32 %v298, %v491
    %v493 = vand.u32 %v492, 4294901760
    %v494 = vsub.f32 %v492, %v493
    %v495 = vand.u32 %v494, 4294901760
    %496 = vmatmul.mubr.f32.gmra.mrb[0].mxu0 %v495
    %v497 = vpop.f32.mrb[0].mxu0
    %v498 = vadd.f32 0.0, %v497
    %v499 = vpop.f32.mrb[0].mxu0
    %500 = vmatprep.mubr.f32.mxu0 0.0
    %v501 = vand.u32 %v299, 4294901760
    %v502 = vsub.f32 %v299, %v501
    %v503 = vand.u32 %v502, 4294901760
    %v504 = vsub.f32 %v502, %v503
    %v505 = vand.u32 %v504, 4294901760
    %506 = vmatmul.mubr.f32.gmra.mrb[0].mxu0 %v505
    %v507 = vpop.f32.mrb[0].mxu0
    %v508 = vadd.f32 0.0, %v507
    %v509 = vpop.f32.mrb[0].mxu0
    %510 = vmatprep.mubr.f32.mxu0 0.0
    %v511 = vand.u32 %v300, 4294901760
    %v512 = vsub.f32 %v300, %v511
    %v513 = vand.u32 %v512, 4294901760
    %v514 = vsub.f32 %v512, %v513
    %v515 = vand.u32 %v514, 4294901760
    %516 = vmatmul.mubr.f32.gmra.mrb[0].mxu0 %v515
    %v517 = vpop.f32.mrb[0].mxu0
    %v518 = vadd.f32 0.0, %v517
    %v519 = vpop.f32.mrb[0].mxu0
    %520 = vmatprep.mubr.f32.mxu0 0.0
    %v521 = vand.u32 %v301, 4294901760
    %v522 = vsub.f32 %v301, %v521
    %v523 = vand.u32 %v522, 4294901760
    %v524 = vsub.f32 %v522, %v523
    %v525 = vand.u32 %v524, 4294901760
    %526 = vmatmul.mubr.f32.gmra.mrb[0].mxu0 %v525
    %v527 = vpop.f32.mrb[0].mxu0
    %v528 = vadd.f32 0.0, %v527
    %v529 = vpop.f32.mrb[0].mxu0
    %530 = vmatprep.mubr.f32.mxu0 0.0
    %v531 = vand.u32 %v302, 4294901760
    %v532 = vsub.f32 %v302, %v531
    %v533 = vand.u32 %v532, 4294901760
    %v534 = vsub.f32 %v532, %v533
    %v535 = vand.u32 %v534, 4294901760
    %536 = vmatmul.mubr.f32.gmra.mrb[0].mxu0 %v535
    %v537 = vpop.f32.mrb[0].mxu0
    %v538 = vadd.f32 0.0, %v537
    %v539 = vpop.f32.mrb[0].mxu0
    %540 = vmatprep.mubr.f32.mxu0 0.0
    %v541 = vand.u32 %v303, 4294901760
    %v542 = vsub.f32 %v303, %v541
    %v543 = vand.u32 %v542, 4294901760
    %v544 = vsub.f32 %v542, %v543
    %v545 = vand.u32 %v544, 4294901760
    %546 = vmatmul.mubr.f32.gmra.mrb[0].mxu0 %v545
    %v547 = vpop.f32.mrb[0].mxu0
    %v548 = vadd.f32 0.0, %v547
    %v549 = vpop.f32.mrb[0].mxu0
    %550 = vmatprep.mubr.f32.mxu0 0.0
    %v551 = vand.u32 %v304, 4294901760
    %v552 = vsub.f32 %v304, %v551
    %v553 = vand.u32 %v552, 4294901760
    %v554 = vsub.f32 %v552, %v553
    %v555 = vand.u32 %v554, 4294901760
    %556 = vmatmul.mubr.f32.gmra.mrb[0].mxu0 %v555
    %v557 = vpop.f32.mrb[0].mxu0
    %v558 = vadd.f32 0.0, %v557
    %v559 = vpop.f32.mrb[0].mxu0
    %560 = vmatprep.mubr.f32.mxu0 0.0
    %v561 = vand.u32 %v305, 4294901760
    %v562 = vsub.f32 %v305, %v561
    %v563 = vand.u32 %v562, 4294901760
    %v564 = vsub.f32 %v562, %v563
    %v565 = vand.u32 %v564, 4294901760
    %566 = vmatmul.mubr.f32.gmra.mrb[0].mxu0 %v565
    %v567 = vpop.f32.mrb[0].mxu0
    %v568 = vadd.f32 0.0, %v567
    %v569 = vpop.f32.mrb[0].mxu0
    %570 = vmatprep.mubr.f32.mxu0 0.0
    %v571 = vand.u32 %v306, 4294901760
    %v572 = vsub.f32 %v306, %v571
    %v573 = vand.u32 %v572, 4294901760
    %v574 = vsub.f32 %v572, %v573
    %v575 = vand.u32 %v574, 4294901760
    %576 = vmatmul.mubr.f32.gmra.mrb[0].mxu0 %v575
    %v577 = vpop.f32.mrb[0].mxu0
    %v578 = vadd.f32 0.0, %v577
    %v579 = vpop.f32.mrb[0].mxu0
    %580 = vmatprep.mubr.f32.mxu0 0.0
    %v581 = vand.u32 %v307, 4294901760
    %v582 = vsub.f32 %v307, %v581
    %v583 = vand.u32 %v582, 4294901760
    %v584 = vsub.f32 %v582, %v583
    %v585 = vand.u32 %v584, 4294901760
    %586 = vmatmul.mubr.f32.gmra.mrb[0].mxu0 %v585
    %v587 = vpop.f32.mrb[0].mxu0
    %v588 = vadd.f32 0.0, %v587
    %v589 = vpop.f32.mrb[0].mxu0
    %590 = vmatprep.mubr.f32.mxu0 0.0
    %v591 = vand.u32 %v308, 4294901760
    %v592 = vsub.f32 %v308, %v591
    %v593 = vand.u32 %v592, 4294901760
    %v594 = vsub.f32 %v592, %v593
    %v595 = vand.u32 %v594, 4294901760
    %596 = vmatmul.mubr.f32.gmra.mrb[0].mxu0 %v595
    %v597 = vpop.f32.mrb[0].mxu0
    %v598 = vadd.f32 0.0, %v597
    %v599 = vpop.f32.mrb[0].mxu0
    %600 = vmatprep.mubr.f32.mxu0 0.0
    %v601 = vand.u32 %v309, 4294901760
    %v602 = vsub.f32 %v309, %v601
    %v603 = vand.u32 %v602, 4294901760
    %v604 = vsub.f32 %v602, %v603
    %v605 = vand.u32 %v604, 4294901760
    %606 = vmatmul.mubr.f32.gmra.mrb[0].mxu0 %v605
    %v607 = vpop.f32.mrb[0].mxu0
    %v608 = vadd.f32 0.0, %v607
    %v609 = vpop.f32.mrb[0].mxu0
    %610 = vmatprep.mubr.f32.mxu0 0.0
    %v611 = vand.u32 %v310, 4294901760
    %v612 = vsub.f32 %v310, %v611
    %v613 = vand.u32 %v612, 4294901760
    %v614 = vsub.f32 %v612, %v613
    %v615 = vand.u32 %v614, 4294901760
    %616 = vmatmul.mubr.f32.gmra.mrb[0].mxu0 %v615
    %v617 = vpop.f32.mrb[0].mxu0
    %v618 = vadd.f32 0.0, %v617
    %v619 = vpop.f32.mrb[0].mxu0
    %620 = vmatprep.mubr.f32.mxu0 0.0
    %v621 = vand.u32 %v311, 4294901760
    %v622 = vsub.f32 %v311, %v621
    %v623 = vand.u32 %v622, 4294901760
    %v624 = vsub.f32 %v622, %v623
    %v625 = vand.u32 %v624, 4294901760
    %626 = vmatmul.mubr.f32.gmra.mrb[0].mxu0 %v625
    %v627 = vpop.f32.mrb[0].mxu0
    %v628 = vadd.f32 0.0, %v627
    %v629 = vpop.f32.mrb[0].mxu0
    %630 = vmatprep.mubr.f32.mxu0 0.0
    %v631 = vand.u32 %v312, 4294901760
    %v632 = vsub.f32 %v312, %v631
    %v633 = vand.u32 %v632, 4294901760
    %v634 = vsub.f32 %v632, %v633
    %v635 = vand.u32 %v634, 4294901760
    %636 = vmatmul.mubr.f32.gmra.mrb[0].mxu0 %v635
    %v637 = vpop.f32.mrb[0].mxu0
    %v638 = vadd.f32 0.0, %v637
    %v639 = vpop.f32.mrb[0].mxu0
    %640 = vmatprep.mubr.f32.mxu0 0.0
    %v641 = vand.u32 %v313, 4294901760
    %v642 = vsub.f32 %v313, %v641
    %v643 = vand.u32 %v642, 4294901760
    %v644 = vsub.f32 %v642, %v643
    %v645 = vand.u32 %v644, 4294901760
    %646 = vmatmul.mubr.f32.gmra.mrb[0].mxu0 %v645
    %v647 = vpop.f32.mrb[0].mxu0
    %v648 = vadd.f32 0.0, %v647
    %v649 = vpop.f32.mrb[0].mxu0
    %650 = vdwg.mxu0
    %651 = vmatprep.subr.mxu0 0.0
    %v652 = vand.u32 %v394, 4294901760
    %v653 = vsub.f32 %v394, %v652
    %v654 = vand.u32 %v653, 4294901760
    %v655 = vsub.f32 %v653, %v654
    %v656 = vand.u32 %v655, 4294901760
    %657 = vmatpush1.xpose.msra.mxu0 %v656
    %658 = vmatprep.subr.mxu0 0.0
    %v659 = vand.u32 %v395, 4294901760
    %v660 = vsub.f32 %v395, %v659
    %v661 = vand.u32 %v660, 4294901760
    %v662 = vsub.f32 %v660, %v661
    %v663 = vand.u32 %v662, 4294901760
    %664 = vmatpush1.xpose.msra.mxu0 %v663
    %665 = vmatprep.subr.mxu0 0.0
    %v666 = vand.u32 %v396, 4294901760
    %v667 = vsub.f32 %v396, %v666
    %v668 = vand.u32 %v667, 4294901760
    %v669 = vsub.f32 %v667, %v668
    %v670 = vand.u32 %v669, 4294901760
    %671 = vmatpush1.xpose.msra.mxu0 %v670
    %672 = vmatprep.subr.mxu0 0.0
    %v673 = vand.u32 %v397, 4294901760
    %v674 = vsub.f32 %v397, %v673
    %v675 = vand.u32 %v674, 4294901760
    %v676 = vsub.f32 %v674, %v675
    %v677 = vand.u32 %v676, 4294901760
    %678 = vmatpush1.xpose.msra.mxu0 %v677
    %679 = vmatprep.subr.mxu0 0.0
    %v680 = vand.u32 %v398, 4294901760
    %v681 = vsub.f32 %v398, %v680
    %v682 = vand.u32 %v681, 4294901760
    %v683 = vsub.f32 %v681, %v682
    %v684 = vand.u32 %v683, 4294901760
    %685 = vmatpush1.xpose.msra.mxu0 %v684
    %686 = vmatprep.subr.mxu0 0.0
    %v687 = vand.u32 %v399, 4294901760
    %v688 = vsub.f32 %v399, %v687
    %v689 = vand.u32 %v688, 4294901760
    %v690 = vsub.f32 %v688, %v689
    %v691 = vand.u32 %v690, 4294901760
    %692 = vmatpush1.xpose.msra.mxu0 %v691
    %693 = vmatprep.subr.mxu0 0.0
    %v694 = vand.u32 %v400, 4294901760
    %v695 = vsub.f32 %v400, %v694
    %v696 = vand.u32 %v695, 4294901760
    %v697 = vsub.f32 %v695, %v696
    %v698 = vand.u32 %v697, 4294901760
    %699 = vmatpush1.xpose.msra.mxu0 %v698
    %700 = vmatprep.subr.mxu0 0.0
    %v701 = vand.u32 %v401, 4294901760
    %v702 = vsub.f32 %v401, %v701
    %v703 = vand.u32 %v702, 4294901760
    %v704 = vsub.f32 %v702, %v703
    %v705 = vand.u32 %v704, 4294901760
    %706 = vmatpush1.xpose.msra.mxu0 %v705
    %707 = vmatprep.subr.mxu0 0.0
    %v708 = vand.u32 %v402, 4294901760
    %v709 = vsub.f32 %v402, %v708
    %v710 = vand.u32 %v709, 4294901760
    %v711 = vsub.f32 %v709, %v710
    %v712 = vand.u32 %v711, 4294901760
    %713 = vmatpush1.xpose.msra.mxu0 %v712
    %714 = vmatprep.subr.mxu0 0.0
    %v715 = vand.u32 %v403, 4294901760
    %v716 = vsub.f32 %v403, %v715
    %v717 = vand.u32 %v716, 4294901760
    %v718 = vsub.f32 %v716, %v717
    %v719 = vand.u32 %v718, 4294901760
    %720 = vmatpush1.xpose.msra.mxu0 %v719
    %721 = vmatprep.subr.mxu0 0.0
    %v722 = vand.u32 %v404, 4294901760
    %v723 = vsub.f32 %v404, %v722
    %v724 = vand.u32 %v723, 4294901760
    %v725 = vsub.f32 %v723, %v724
    %v726 = vand.u32 %v725, 4294901760
    %727 = vmatpush1.xpose.msra.mxu0 %v726
    %728 = vmatprep.subr.mxu0 0.0
    %v729 = vand.u32 %v405, 4294901760
    %v730 = vsub.f32 %v405, %v729
    %v731 = vand.u32 %v730, 4294901760
    %v732 = vsub.f32 %v730, %v731
    %v733 = vand.u32 %v732, 4294901760
    %734 = vmatpush1.xpose.msra.mxu0 %v733
    %735 = vmatprep.subr.mxu0 0.0
    %v736 = vand.u32 %v406, 4294901760
    %v737 = vsub.f32 %v406, %v736
    %v738 = vand.u32 %v737, 4294901760
    %v739 = vsub.f32 %v737, %v738
    %v740 = vand.u32 %v739, 4294901760
    %741 = vmatpush1.xpose.msra.mxu0 %v740
    %742 = vmatprep.subr.mxu0 0.0
    %v743 = vand.u32 %v407, 4294901760
    %v744 = vsub.f32 %v407, %v743
    %v745 = vand.u32 %v744, 4294901760
    %v746 = vsub.f32 %v744, %v745
    %v747 = vand.u32 %v746, 4294901760
    %748 = vmatpush1.xpose.msra.mxu0 %v747
    %749 = vmatprep.subr.mxu0 0.0
    %v750 = vand.u32 %v408, 4294901760
    %v751 = vsub.f32 %v408, %v750
    %v752 = vand.u32 %v751, 4294901760
    %v753 = vsub.f32 %v751, %v752
    %v754 = vand.u32 %v753, 4294901760
    %755 = vmatpush1.xpose.msra.mxu0 %v754
    %756 = vmatprep.subr.mxu0 0.0
    %v757 = vand.u32 %v409, 4294901760
    %v758 = vsub.f32 %v409, %v757
    %v759 = vand.u32 %v758, 4294901760
    %v760 = vsub.f32 %v758, %v759
    %v761 = vand.u32 %v760, 4294901760
    %762 = vmatpush1.xpose.msra.mxu0 %v761
    %763 = vmatprep.subr.mxu0 0.0
    %764 = vmatpush1.xpose.msra.mxu0 0.0
    %765 = vmatprep.subr.mxu0 0.0
    %766 = vmatpush1.xpose.msra.mxu0 0.0
    %767 = vmatprep.subr.mxu0 0.0
    %768 = vmatpush1.xpose.msra.mxu0 0.0
    %769 = vmatprep.subr.mxu0 0.0
    %770 = vmatpush1.xpose.msra.mxu0 0.0
    %771 = vmatprep.subr.mxu0 0.0
    %772 = vmatpush1.xpose.msra.mxu0 0.0
    %773 = vmatprep.subr.mxu0 0.0
    %774 = vmatpush1.xpose.msra.mxu0 0.0
    %775 = vmatprep.subr.mxu0 0.0
    %776 = vmatpush1.xpose.msra.mxu0 0.0
    %777 = vmatprep.subr.mxu0 0.0
    %778 = vmatpush1.xpose.msra.mxu0 0.0
    %779 = vmatprep.subr.mxu0 0.0
    %780 = vmatpush1.xpose.msra.mxu0 0.0
    %781 = vmatprep.subr.mxu0 0.0
    %782 = vmatpush1.xpose.msra.mxu0 0.0
    %783 = vmatprep.subr.mxu0 0.0
    %784 = vmatpush1.xpose.msra.mxu0 0.0
    %785 = vmatprep.subr.mxu0 0.0
    %786 = vmatpush1.xpose.msra.mxu0 0.0
    %787 = vmatprep.subr.mxu0 0.0
    %788 = vmatpush1.xpose.msra.mxu0 0.0
    %789 = vmatprep.subr.mxu0 0.0
    %790 = vmatpush1.xpose.msra.mxu0 0.0
    %791 = vmatprep.subr.mxu0 0.0
    %792 = vmatpush1.xpose.msra.mxu0 0.0
    %793 = vmatprep.subr.mxu0 0.0
    %794 = vmatpush1.xpose.msra.mxu0 0.0
    %795 = vmatprep.mubr.f32.mxu0 0.0
    %v796 = vand.u32 %v298, 4294901760
    %797 = vmatmul.mubr.f32.gmra.mrb[0].mxu0 %v796
    %v798 = vpop.f32.mrb[0].mxu0
    %v799 = vadd.f32 %v498, %v798
    %v800 = vpop.f32.mrb[0].mxu0
    %801 = vmatprep.mubr.f32.mxu0 0.0
    %v802 = vand.u32 %v299, 4294901760
    %803 = vmatmul.mubr.f32.gmra.mrb[0].mxu0 %v802
    %v804 = vpop.f32.mrb[0].mxu0
    %v805 = vadd.f32 %v508, %v804
    %v806 = vpop.f32.mrb[0].mxu0
    %807 = vmatprep.mubr.f32.mxu0 0.0
    %v808 = vand.u32 %v300, 4294901760
    %809 = vmatmul.mubr.f32.gmra.mrb[0].mxu0 %v808
    %v810 = vpop.f32.mrb[0].mxu0
    %v811 = vadd.f32 %v518, %v810
    %v812 = vpop.f32.mrb[0].mxu0
    %813 = vmatprep.mubr.f32.mxu0 0.0
    %v814 = vand.u32 %v301, 4294901760
    %815 = vmatmul.mubr.f32.gmra.mrb[0].mxu0 %v814
    %v816 = vpop.f32.mrb[0].mxu0
    %v817 = vadd.f32 %v528, %v816
    %v818 = vpop.f32.mrb[0].mxu0
    %819 = vmatprep.mubr.f32.mxu0 0.0
    %v820 = vand.u32 %v302, 4294901760
    %821 = vmatmul.mubr.f32.gmra.mrb[0].mxu0 %v820
    %v822 = vpop.f32.mrb[0].mxu0
    %v823 = vadd.f32 %v538, %v822
    %v824 = vpop.f32.mrb[0].mxu0
    %825 = vmatprep.mubr.f32.mxu0 0.0
    %v826 = vand.u32 %v303, 4294901760
    %827 = vmatmul.mubr.f32.gmra.mrb[0].mxu0 %v826
    %v828 = vpop.f32.mrb[0].mxu0
    %v829 = vadd.f32 %v548, %v828
    %v830 = vpop.f32.mrb[0].mxu0
    %831 = vmatprep.mubr.f32.mxu0 0.0
    %v832 = vand.u32 %v304, 4294901760
    %833 = vmatmul.mubr.f32.gmra.mrb[0].mxu0 %v832
    %v834 = vpop.f32.mrb[0].mxu0
    %v835 = vadd.f32 %v558, %v834
    %v836 = vpop.f32.mrb[0].mxu0
    %837 = vmatprep.mubr.f32.mxu0 0.0
    %v838 = vand.u32 %v305, 4294901760
    %839 = vmatmul.mubr.f32.gmra.mrb[0].mxu0 %v838
    %v840 = vpop.f32.mrb[0].mxu0
    %v841 = vadd.f32 %v568, %v840
    %v842 = vpop.f32.mrb[0].mxu0
    %843 = vmatprep.mubr.f32.mxu0 0.0
    %v844 = vand.u32 %v306, 4294901760
    %845 = vmatmul.mubr.f32.gmra.mrb[0].mxu0 %v844
    %v846 = vpop.f32.mrb[0].mxu0
    %v847 = vadd.f32 %v578, %v846
    %v848 = vpop.f32.mrb[0].mxu0
    %849 = vmatprep.mubr.f32.mxu0 0.0
    %v850 = vand.u32 %v307, 4294901760
    %851 = vmatmul.mubr.f32.gmra.mrb[0].mxu0 %v850
    %v852 = vpop.f32.mrb[0].mxu0
    %v853 = vadd.f32 %v588, %v852
    %v854 = vpop.f32.mrb[0].mxu0
    %855 = vmatprep.mubr.f32.mxu0 0.0
    %v856 = vand.u32 %v308, 4294901760
    %857 = vmatmul.mubr.f32.gmra.mrb[0].mxu0 %v856
    %v858 = vpop.f32.mrb[0].mxu0
    %v859 = vadd.f32 %v598, %v858
    %v860 = vpop.f32.mrb[0].mxu0
    %861 = vmatprep.mubr.f32.mxu0 0.0
    %v862 = vand.u32 %v309, 4294901760
    %863 = vmatmul.mubr.f32.gmra.mrb[0].mxu0 %v862
    %v864 = vpop.f32.mrb[0].mxu0
    %v865 = vadd.f32 %v608, %v864
    %v866 = vpop.f32.mrb[0].mxu0
    %867 = vmatprep.mubr.f32.mxu0 0.0
    %v868 = vand.u32 %v310, 4294901760
    %869 = vmatmul.mubr.f32.gmra.mrb[0].mxu0 %v868
    %v870 = vpop.f32.mrb[0].mxu0
    %v871 = vadd.f32 %v618, %v870
    %v872 = vpop.f32.mrb[0].mxu0
    %873 = vmatprep.mubr.f32.mxu0 0.0
    %v874 = vand.u32 %v311, 4294901760
    %875 = vmatmul.mubr.f32.gmra.mrb[0].mxu0 %v874
    %v876 = vpop.f32.mrb[0].mxu0
    %v877 = vadd.f32 %v628, %v876
    %v878 = vpop.f32.mrb[0].mxu0
    %879 = vmatprep.mubr.f32.mxu0 0.0
    %v880 = vand.u32 %v312, 4294901760
    %881 = vmatmul.mubr.f32.gmra.mrb[0].mxu0 %v880
    %v882 = vpop.f32.mrb[0].mxu0
    %v883 = vadd.f32 %v638, %v882
    %v884 = vpop.f32.mrb[0].mxu0
    %885 = vmatprep.mubr.f32.mxu0 0.0
    %v886 = vand.u32 %v313, 4294901760
    %887 = vmatmul.mubr.f32.gmra.mrb[0].mxu0 %v886
    %v888 = vpop.f32.mrb[0].mxu0
    %v889 = vadd.f32 %v648, %v888
    %v890 = vpop.f32.mrb[0].mxu0
    %891 = vdwg.mxu0
    %892 = vmatprep.subr.mxu0 0.0
    %v893 = vand.u32 %v394, 4294901760
    %v894 = vsub.f32 %v394, %v893
    %895 = vmatpush1.xpose.msra.mxu0 %v894
    %896 = vmatprep.subr.mxu0 0.0
    %v897 = vand.u32 %v395, 4294901760
    %v898 = vsub.f32 %v395, %v897
    %899 = vmatpush1.xpose.msra.mxu0 %v898
    %900 = vmatprep.subr.mxu0 0.0
    %v901 = vand.u32 %v396, 4294901760
    %v902 = vsub.f32 %v396, %v901
    %903 = vmatpush1.xpose.msra.mxu0 %v902
    %904 = vmatprep.subr.mxu0 0.0
    %v905 = vand.u32 %v397, 4294901760
    %v906 = vsub.f32 %v397, %v905
    %907 = vmatpush1.xpose.msra.mxu0 %v906
    %908 = vmatprep.subr.mxu0 0.0
    %v909 = vand.u32 %v398, 4294901760
    %v910 = vsub.f32 %v398, %v909
    %911 = vmatpush1.xpose.msra.mxu0 %v910
    %912 = vmatprep.subr.mxu0 0.0
    %v913 = vand.u32 %v399, 4294901760
    %v914 = vsub.f32 %v399, %v913
    %915 = vmatpush1.xpose.msra.mxu0 %v914
    %916 = vmatprep.subr.mxu0 0.0
    %v917 = vand.u32 %v400, 4294901760
    %v918 = vsub.f32 %v400, %v917
    %919 = vmatpush1.xpose.msra.mxu0 %v918
    %920 = vmatprep.subr.mxu0 0.0
    %v921 = vand.u32 %v401, 4294901760
    %v922 = vsub.f32 %v401, %v921
    %923 = vmatpush1.xpose.msra.mxu0 %v922
    %924 = vmatprep.subr.mxu0 0.0
    %v925 = vand.u32 %v402, 4294901760
    %v926 = vsub.f32 %v402, %v925
    %927 = vmatpush1.xpose.msra.mxu0 %v926
    %928 = vmatprep.subr.mxu0 0.0
    %v929 = vand.u32 %v403, 4294901760
    %v930 = vsub.f32 %v403, %v929
    %931 = vmatpush1.xpose.msra.mxu0 %v930
    %932 = vmatprep.subr.mxu0 0.0
    %v933 = vand.u32 %v404, 4294901760
    %v934 = vsub.f32 %v404, %v933
    %935 = vmatpush1.xpose.msra.mxu0 %v934
    %936 = vmatprep.subr.mxu0 0.0
    %v937 = vand.u32 %v405, 4294901760
    %v938 = vsub.f32 %v405, %v937
    %939 = vmatpush1.xpose.msra.mxu0 %v938
    %940 = vmatprep.subr.mxu0 0.0
    %v941 = vand.u32 %v406, 4294901760
    %v942 = vsub.f32 %v406, %v941
    %943 = vmatpush1.xpose.msra.mxu0 %v942
    %944 = vmatprep.subr.mxu0 0.0
    %v945 = vand.u32 %v407, 4294901760
    %v946 = vsub.f32 %v407, %v945
    %947 = vmatpush1.xpose.msra.mxu0 %v946
    %948 = vmatprep.subr.mxu0 0.0
    %v949 = vand.u32 %v408, 4294901760
    %v950 = vsub.f32 %v408, %v949
    %951 = vmatpush1.xpose.msra.mxu0 %v950
    %952 = vmatprep.subr.mxu0 0.0
    %v953 = vand.u32 %v409, 4294901760
    %v954 = vsub.f32 %v409, %v953
    %955 = vmatpush1.xpose.msra.mxu0 %v954
    %956 = vmatprep.subr.mxu0 0.0
    %957 = vmatpush1.xpose.msra.mxu0 0.0
    %958 = vmatprep.subr.mxu0 0.0
    %959 = vmatpush1.xpose.msra.mxu0 0.0
    %960 = vmatprep.subr.mxu0 0.0
    %961 = vmatpush1.xpose.msra.mxu0 0.0
    %962 = vmatprep.subr.mxu0 0.0
    %963 = vmatpush1.xpose.msra.mxu0 0.0
    %964 = vmatprep.subr.mxu0 0.0
    %965 = vmatpush1.xpose.msra.mxu0 0.0
    %966 = vmatprep.subr.mxu0 0.0
    %967 = vmatpush1.xpose.msra.mxu0 0.0
    %968 = vmatprep.subr.mxu0 0.0
    %969 = vmatpush1.xpose.msra.mxu0 0.0
    %970 = vmatprep.subr.mxu0 0.0
    %971 = vmatpush1.xpose.msra.mxu0 0.0
    %972 = vmatprep.subr.mxu0 0.0
    %973 = vmatpush1.xpose.msra.mxu0 0.0
    %974 = vmatprep.subr.mxu0 0.0
    %975 = vmatpush1.xpose.msra.mxu0 0.0
    %976 = vmatprep.subr.mxu0 0.0
    %977 = vmatpush1.xpose.msra.mxu0 0.0
    %978 = vmatprep.subr.mxu0 0.0
    %979 = vmatpush1.xpose.msra.mxu0 0.0
    %980 = vmatprep.subr.mxu0 0.0
    %981 = vmatpush1.xpose.msra.mxu0 0.0
    %982 = vmatprep.subr.mxu0 0.0
    %983 = vmatpush1.xpose.msra.mxu0 0.0
    %984 = vmatprep.subr.mxu0 0.0
    %985 = vmatpush1.xpose.msra.mxu0 0.0
    %986 = vmatprep.subr.mxu0 0.0
    %987 = vmatpush1.xpose.msra.mxu0 0.0
    %988 = vmatprep.mubr.f32.mxu0 0.0
    %v989 = vand.u32 %v298, 4294901760
    %v990 = vsub.f32 %v298, %v989
    %991 = vmatmul.mubr.f32.gmra.mrb[0].mxu0 %v990
    %v992 = vpop.f32.mrb[0].mxu0
    %v993 = vadd.f32 %v799, %v992
    %v994 = vpop.f32.mrb[0].mxu0
    %995 = vmatprep.mubr.f32.mxu0 0.0
    %v996 = vand.u32 %v299, 4294901760
    %v997 = vsub.f32 %v299, %v996
    %998 = vmatmul.mubr.f32.gmra.mrb[0].mxu0 %v997
    %v999 = vpop.f32.mrb[0].mxu0
    %v1000 = vadd.f32 %v805, %v999
    %v1001 = vpop.f32.mrb[0].mxu0
    %1002 = vmatprep.mubr.f32.mxu0 0.0
    %v1003 = vand.u32 %v300, 4294901760
    %v1004 = vsub.f32 %v300, %v1003
    %1005 = vmatmul.mubr.f32.gmra.mrb[0].mxu0 %v1004
    %v1006 = vpop.f32.mrb[0].mxu0
    %v1007 = vadd.f32 %v811, %v1006
    %v1008 = vpop.f32.mrb[0].mxu0
    %1009 = vmatprep.mubr.f32.mxu0 0.0
    %v1010 = vand.u32 %v301, 4294901760
    %v1011 = vsub.f32 %v301, %v1010
    %1012 = vmatmul.mubr.f32.gmra.mrb[0].mxu0 %v1011
    %v1013 = vpop.f32.mrb[0].mxu0
    %v1014 = vadd.f32 %v817, %v1013
    %v1015 = vpop.f32.mrb[0].mxu0
    %1016 = vmatprep.mubr.f32.mxu0 0.0
    %v1017 = vand.u32 %v302, 4294901760
    %v1018 = vsub.f32 %v302, %v1017
    %1019 = vmatmul.mubr.f32.gmra.mrb[0].mxu0 %v1018
    %v1020 = vpop.f32.mrb[0].mxu0
    %v1021 = vadd.f32 %v823, %v1020
    %v1022 = vpop.f32.mrb[0].mxu0
    %1023 = vmatprep.mubr.f32.mxu0 0.0
    %v1024 = vand.u32 %v303, 4294901760
    %v1025 = vsub.f32 %v303, %v1024
    %1026 = vmatmul.mubr.f32.gmra.mrb[0].mxu0 %v1025
    %v1027 = vpop.f32.mrb[0].mxu0
    %v1028 = vadd.f32 %v829, %v1027
    %v1029 = vpop.f32.mrb[0].mxu0
    %1030 = vmatprep.mubr.f32.mxu0 0.0
    %v1031 = vand.u32 %v304, 4294901760
    %v1032 = vsub.f32 %v304, %v1031
    %1033 = vmatmul.mubr.f32.gmra.mrb[0].mxu0 %v1032
    %v1034 = vpop.f32.mrb[0].mxu0
    %v1035 = vadd.f32 %v835, %v1034
    %v1036 = vpop.f32.mrb[0].mxu0
    %1037 = vmatprep.mubr.f32.mxu0 0.0
    %v1038 = vand.u32 %v305, 4294901760
    %v1039 = vsub.f32 %v305, %v1038
    %1040 = vmatmul.mubr.f32.gmra.mrb[0].mxu0 %v1039
    %v1041 = vpop.f32.mrb[0].mxu0
    %v1042 = vadd.f32 %v841, %v1041
    %v1043 = vpop.f32.mrb[0].mxu0
    %1044 = vmatprep.mubr.f32.mxu0 0.0
    %v1045 = vand.u32 %v306, 4294901760
    %v1046 = vsub.f32 %v306, %v1045
    %1047 = vmatmul.mubr.f32.gmra.mrb[0].mxu0 %v1046
    %v1048 = vpop.f32.mrb[0].mxu0
    %v1049 = vadd.f32 %v847, %v1048
    %v1050 = vpop.f32.mrb[0].mxu0
    %1051 = vmatprep.mubr.f32.mxu0 0.0
    %v1052 = vand.u32 %v307, 4294901760
    %v1053 = vsub.f32 %v307, %v1052
    %1054 = vmatmul.mubr.f32.gmra.mrb[0].mxu0 %v1053
    %v1055 = vpop.f32.mrb[0].mxu0
    %v1056 = vadd.f32 %v853, %v1055
    %v1057 = vpop.f32.mrb[0].mxu0
    %1058 = vmatprep.mubr.f32.mxu0 0.0
    %v1059 = vand.u32 %v308, 4294901760
    %v1060 = vsub.f32 %v308, %v1059
    %1061 = vmatmul.mubr.f32.gmra.mrb[0].mxu0 %v1060
    %v1062 = vpop.f32.mrb[0].mxu0
    %v1063 = vadd.f32 %v859, %v1062
    %v1064 = vpop.f32.mrb[0].mxu0
    %1065 = vmatprep.mubr.f32.mxu0 0.0
    %v1066 = vand.u32 %v309, 4294901760
    %v1067 = vsub.f32 %v309, %v1066
    %1068 = vmatmul.mubr.f32.gmra.mrb[0].mxu0 %v1067
    %v1069 = vpop.f32.mrb[0].mxu0
    %v1070 = vadd.f32 %v865, %v1069
    %v1071 = vpop.f32.mrb[0].mxu0
    %1072 = vmatprep.mubr.f32.mxu0 0.0
    %v1073 = vand.u32 %v310, 4294901760
    %v1074 = vsub.f32 %v310, %v1073
    %1075 = vmatmul.mubr.f32.gmra.mrb[0].mxu0 %v1074
    %v1076 = vpop.f32.mrb[0].mxu0
    %v1077 = vadd.f32 %v871, %v1076
    %v1078 = vpop.f32.mrb[0].mxu0
    %1079 = vmatprep.mubr.f32.mxu0 0.0
    %v1080 = vand.u32 %v311, 4294901760
    %v1081 = vsub.f32 %v311, %v1080
    %1082 = vmatmul.mubr.f32.gmra.mrb[0].mxu0 %v1081
    %v1083 = vpop.f32.mrb[0].mxu0
    %v1084 = vadd.f32 %v877, %v1083
    %v1085 = vpop.f32.mrb[0].mxu0
    %1086 = vmatprep.mubr.f32.mxu0 0.0
    %v1087 = vand.u32 %v312, 4294901760
    %v1088 = vsub.f32 %v312, %v1087
    %1089 = vmatmul.mubr.f32.gmra.mrb[0].mxu0 %v1088
    %v1090 = vpop.f32.mrb[0].mxu0
    %v1091 = vadd.f32 %v883, %v1090
    %v1092 = vpop.f32.mrb[0].mxu0
    %1093 = vmatprep.mubr.f32.mxu0 0.0
    %v1094 = vand.u32 %v313, 4294901760
    %v1095 = vsub.f32 %v313, %v1094
    %1096 = vmatmul.mubr.f32.gmra.mrb[0].mxu0 %v1095
    %v1097 = vpop.f32.mrb[0].mxu0
    %v1098 = vadd.f32 %v889, %v1097
    %v1099 = vpop.f32.mrb[0].mxu0
    %1100 = vdwg.mxu0
    %1101 = vmatprep.subr.mxu0 0.0
    %v1102 = vand.u32 %v394, 4294901760
    %1103 = vmatpush1.xpose.msra.mxu0 %v1102
    %1104 = vmatprep.subr.mxu0 0.0
    %v1105 = vand.u32 %v395, 4294901760
    %1106 = vmatpush1.xpose.msra.mxu0 %v1105
    %1107 = vmatprep.subr.mxu0 0.0
    %v1108 = vand.u32 %v396, 4294901760
    %1109 = vmatpush1.xpose.msra.mxu0 %v1108
    %1110 = vmatprep.subr.mxu0 0.0
    %v1111 = vand.u32 %v397, 4294901760
    %1112 = vmatpush1.xpose.msra.mxu0 %v1111
    %1113 = vmatprep.subr.mxu0 0.0
    %v1114 = vand.u32 %v398, 4294901760
    %1115 = vmatpush1.xpose.msra.mxu0 %v1114
    %1116 = vmatprep.subr.mxu0 0.0
    %v1117 = vand.u32 %v399, 4294901760
    %1118 = vmatpush1.xpose.msra.mxu0 %v1117
    %1119 = vmatprep.subr.mxu0 0.0
    %v1120 = vand.u32 %v400, 4294901760
    %1121 = vmatpush1.xpose.msra.mxu0 %v1120
    %1122 = vmatprep.subr.mxu0 0.0
    %v1123 = vand.u32 %v401, 4294901760
    %1124 = vmatpush1.xpose.msra.mxu0 %v1123
    %1125 = vmatprep.subr.mxu0 0.0
    %v1126 = vand.u32 %v402, 4294901760
    %1127 = vmatpush1.xpose.msra.mxu0 %v1126
    %1128 = vmatprep.subr.mxu0 0.0
    %v1129 = vand.u32 %v403, 4294901760
    %1130 = vmatpush1.xpose.msra.mxu0 %v1129
    %1131 = vmatprep.subr.mxu0 0.0
    %v1132 = vand.u32 %v404, 4294901760
    %1133 = vmatpush1.xpose.msra.mxu0 %v1132
    %1134 = vmatprep.subr.mxu0 0.0
    %v1135 = vand.u32 %v405, 4294901760
    %1136 = vmatpush1.xpose.msra.mxu0 %v1135
    %1137 = vmatprep.subr.mxu0 0.0
    %v1138 = vand.u32 %v406, 4294901760
    %1139 = vmatpush1.xpose.msra.mxu0 %v1138
    %1140 = vmatprep.subr.mxu0 0.0
    %v1141 = vand.u32 %v407, 4294901760
    %1142 = vmatpush1.xpose.msra.mxu0 %v1141
    %1143 = vmatprep.subr.mxu0 0.0
    %v1144 = vand.u32 %v408, 4294901760
    %1145 = vmatpush1.xpose.msra.mxu0 %v1144
    %1146 = vmatprep.subr.mxu0 0.0
    %v1147 = vand.u32 %v409, 4294901760
    %1148 = vmatpush1.xpose.msra.mxu0 %v1147
    %1149 = vmatprep.subr.mxu0 0.0
    %1150 = vmatpush1.xpose.msra.mxu0 0.0
    %1151 = vmatprep.subr.mxu0 0.0
    %1152 = vmatpush1.xpose.msra.mxu0 0.0
    %1153 = vmatprep.subr.mxu0 0.0
    %1154 = vmatpush1.xpose.msra.mxu0 0.0
    %1155 = vmatprep.subr.mxu0 0.0
    %1156 = vmatpush1.xpose.msra.mxu0 0.0
    %1157 = vmatprep.subr.mxu0 0.0
    %1158 = vmatpush1.xpose.msra.mxu0 0.0
    %1159 = vmatprep.subr.mxu0 0.0
    %1160 = vmatpush1.xpose.msra.mxu0 0.0
    %1161 = vmatprep.subr.mxu0 0.0
    %1162 = vmatpush1.xpose.msra.mxu0 0.0
    %1163 = vmatprep.subr.mxu0 0.0
    %1164 = vmatpush1.xpose.msra.mxu0 0.0
    %1165 = vmatprep.subr.mxu0 0.0
    %1166 = vmatpush1.xpose.msra.mxu0 0.0
    %1167 = vmatprep.subr.mxu0 0.0
    %1168 = vmatpush1.xpose.msra.mxu0 0.0
    %1169 = vmatprep.subr.mxu0 0.0
    %1170 = vmatpush1.xpose.msra.mxu0 0.0
    %1171 = vmatprep.subr.mxu0 0.0
    %1172 = vmatpush1.xpose.msra.mxu0 0.0
    %1173 = vmatprep.subr.mxu0 0.0
    %1174 = vmatpush1.xpose.msra.mxu0 0.0
    %1175 = vmatprep.subr.mxu0 0.0
    %1176 = vmatpush1.xpose.msra.mxu0 0.0
    %1177 = vmatprep.subr.mxu0 0.0
    %1178 = vmatpush1.xpose.msra.mxu0 0.0
    %1179 = vmatprep.subr.mxu0 0.0
    %1180 = vmatpush1.xpose.msra.mxu0 0.0
    %1181 = vmatprep.mubr.f32.mxu0 0.0
    %v1182 = vand.u32 %v298, 4294901760
    %v1183 = vsub.f32 %v298, %v1182
    %v1184 = vand.u32 %v1183, 4294901760
    %1185 = vmatmul.mubr.f32.gmra.mrb[0].mxu0 %v1184
    %v1186 = vpop.f32.mrb[0].mxu0
    %v1187 = vadd.f32 %v993, %v1186
    %v1188 = vpop.f32.mrb[0].mxu0
    %1189 = vmatprep.mubr.f32.mxu0 0.0
    %v1190 = vand.u32 %v299, 4294901760
    %v1191 = vsub.f32 %v299, %v1190
    %v1192 = vand.u32 %v1191, 4294901760
    %1193 = vmatmul.mubr.f32.gmra.mrb[0].mxu0 %v1192
    %v1194 = vpop.f32.mrb[0].mxu0
    %v1195 = vadd.f32 %v1000, %v1194
    %v1196 = vpop.f32.mrb[0].mxu0
    %1197 = vmatprep.mubr.f32.mxu0 0.0
    %v1198 = vand.u32 %v300, 4294901760
    %v1199 = vsub.f32 %v300, %v1198
    %v1200 = vand.u32 %v1199, 4294901760
    %1201 = vmatmul.mubr.f32.gmra.mrb[0].mxu0 %v1200
    %v1202 = vpop.f32.mrb[0].mxu0
    %v1203 = vadd.f32 %v1007, %v1202
    %v1204 = vpop.f32.mrb[0].mxu0
    %1205 = vmatprep.mubr.f32.mxu0 0.0
    %v1206 = vand.u32 %v301, 4294901760
    %v1207 = vsub.f32 %v301, %v1206
    %v1208 = vand.u32 %v1207, 4294901760
    %1209 = vmatmul.mubr.f32.gmra.mrb[0].mxu0 %v1208
    %v1210 = vpop.f32.mrb[0].mxu0
    %v1211 = vadd.f32 %v1014, %v1210
    %v1212 = vpop.f32.mrb[0].mxu0
    %1213 = vmatprep.mubr.f32.mxu0 0.0
    %v1214 = vand.u32 %v302, 4294901760
    %v1215 = vsub.f32 %v302, %v1214
    %v1216 = vand.u32 %v1215, 4294901760
    %1217 = vmatmul.mubr.f32.gmra.mrb[0].mxu0 %v1216
    %v1218 = vpop.f32.mrb[0].mxu0
    %v1219 = vadd.f32 %v1021, %v1218
    %v1220 = vpop.f32.mrb[0].mxu0
    %1221 = vmatprep.mubr.f32.mxu0 0.0
    %v1222 = vand.u32 %v303, 4294901760
    %v1223 = vsub.f32 %v303, %v1222
    %v1224 = vand.u32 %v1223, 4294901760
    %1225 = vmatmul.mubr.f32.gmra.mrb[0].mxu0 %v1224
    %v1226 = vpop.f32.mrb[0].mxu0
    %v1227 = vadd.f32 %v1028, %v1226
    %v1228 = vpop.f32.mrb[0].mxu0
    %1229 = vmatprep.mubr.f32.mxu0 0.0
    %v1230 = vand.u32 %v304, 4294901760
    %v1231 = vsub.f32 %v304, %v1230
    %v1232 = vand.u32 %v1231, 4294901760
    %1233 = vmatmul.mubr.f32.gmra.mrb[0].mxu0 %v1232
    %v1234 = vpop.f32.mrb[0].mxu0
    %v1235 = vadd.f32 %v1035, %v1234
    %v1236 = vpop.f32.mrb[0].mxu0
    %1237 = vmatprep.mubr.f32.mxu0 0.0
    %v1238 = vand.u32 %v305, 4294901760
    %v1239 = vsub.f32 %v305, %v1238
    %v1240 = vand.u32 %v1239, 4294901760
    %1241 = vmatmul.mubr.f32.gmra.mrb[0].mxu0 %v1240
    %v1242 = vpop.f32.mrb[0].mxu0
    %v1243 = vadd.f32 %v1042, %v1242
    %v1244 = vpop.f32.mrb[0].mxu0
    %1245 = vmatprep.mubr.f32.mxu0 0.0
    %v1246 = vand.u32 %v306, 4294901760
    %v1247 = vsub.f32 %v306, %v1246
    %v1248 = vand.u32 %v1247, 4294901760
    %1249 = vmatmul.mubr.f32.gmra.mrb[0].mxu0 %v1248
    %v1250 = vpop.f32.mrb[0].mxu0
    %v1251 = vadd.f32 %v1049, %v1250
    %v1252 = vpop.f32.mrb[0].mxu0
    %1253 = vmatprep.mubr.f32.mxu0 0.0
    %v1254 = vand.u32 %v307, 4294901760
    %v1255 = vsub.f32 %v307, %v1254
    %v1256 = vand.u32 %v1255, 4294901760
    %1257 = vmatmul.mubr.f32.gmra.mrb[0].mxu0 %v1256
    %v1258 = vpop.f32.mrb[0].mxu0
    %v1259 = vadd.f32 %v1056, %v1258
    %v1260 = vpop.f32.mrb[0].mxu0
    %1261 = vmatprep.mubr.f32.mxu0 0.0
    %v1262 = vand.u32 %v308, 4294901760
    %v1263 = vsub.f32 %v308, %v1262
    %v1264 = vand.u32 %v1263, 4294901760
    %1265 = vmatmul.mubr.f32.gmra.mrb[0].mxu0 %v1264
    %v1266 = vpop.f32.mrb[0].mxu0
    %v1267 = vadd.f32 %v1063, %v1266
    %v1268 = vpop.f32.mrb[0].mxu0
    %1269 = vmatprep.mubr.f32.mxu0 0.0
    %v1270 = vand.u32 %v309, 4294901760
    %v1271 = vsub.f32 %v309, %v1270
    %v1272 = vand.u32 %v1271, 4294901760
    %1273 = vmatmul.mubr.f32.gmra.mrb[0].mxu0 %v1272
    %v1274 = vpop.f32.mrb[0].mxu0
    %v1275 = vadd.f32 %v1070, %v1274
    %v1276 = vpop.f32.mrb[0].mxu0
    %1277 = vmatprep.mubr.f32.mxu0 0.0
    %v1278 = vand.u32 %v310, 4294901760
    %v1279 = vsub.f32 %v310, %v1278
    %v1280 = vand.u32 %v1279, 4294901760
    %1281 = vmatmul.mubr.f32.gmra.mrb[0].mxu0 %v1280
    %v1282 = vpop.f32.mrb[0].mxu0
    %v1283 = vadd.f32 %v1077, %v1282
    %v1284 = vpop.f32.mrb[0].mxu0
    %1285 = vmatprep.mubr.f32.mxu0 0.0
    %v1286 = vand.u32 %v311, 4294901760
    %v1287 = vsub.f32 %v311, %v1286
    %v1288 = vand.u32 %v1287, 4294901760
    %1289 = vmatmul.mubr.f32.gmra.mrb[0].mxu0 %v1288
    %v1290 = vpop.f32.mrb[0].mxu0
    %v1291 = vadd.f32 %v1084, %v1290
    %v1292 = vpop.f32.mrb[0].mxu0
    %1293 = vmatprep.mubr.f32.mxu0 0.0
    %v1294 = vand.u32 %v312, 4294901760
    %v1295 = vsub.f32 %v312, %v1294
    %v1296 = vand.u32 %v1295, 4294901760
    %1297 = vmatmul.mubr.f32.gmra.mrb[0].mxu0 %v1296
    %v1298 = vpop.f32.mrb[0].mxu0
    %v1299 = vadd.f32 %v1091, %v1298
    %v1300 = vpop.f32.mrb[0].mxu0
    %1301 = vmatprep.mubr.f32.mxu0 0.0
    %v1302 = vand.u32 %v313, 4294901760
    %v1303 = vsub.f32 %v313, %v1302
    %v1304 = vand.u32 %v1303, 4294901760
    %1305 = vmatmul.mubr.f32.gmra.mrb[0].mxu0 %v1304
    %v1306 = vpop.f32.mrb[0].mxu0
    %v1307 = vadd.f32 %v1098, %v1306
    %v1308 = vpop.f32.mrb[0].mxu0
    %1309 = vdwg.mxu0
    %1310 = vmatprep.subr.mxu0 0.0
    %v1311 = vand.u32 %v394, 4294901760
    %v1312 = vsub.f32 %v394, %v1311
    %v1313 = vand.u32 %v1312, 4294901760
    %1314 = vmatpush1.xpose.msra.mxu0 %v1313
    %1315 = vmatprep.subr.mxu0 0.0
    %v1316 = vand.u32 %v395, 4294901760
    %v1317 = vsub.f32 %v395, %v1316
    %v1318 = vand.u32 %v1317, 4294901760
    %1319 = vmatpush1.xpose.msra.mxu0 %v1318
    %1320 = vmatprep.subr.mxu0 0.0
    %v1321 = vand.u32 %v396, 4294901760
    %v1322 = vsub.f32 %v396, %v1321
    %v1323 = vand.u32 %v1322, 4294901760
    %1324 = vmatpush1.xpose.msra.mxu0 %v1323
    %1325 = vmatprep.subr.mxu0 0.0
    %v1326 = vand.u32 %v397, 4294901760
    %v1327 = vsub.f32 %v397, %v1326
    %v1328 = vand.u32 %v1327, 4294901760
    %1329 = vmatpush1.xpose.msra.mxu0 %v1328
    %1330 = vmatprep.subr.mxu0 0.0
    %v1331 = vand.u32 %v398, 4294901760
    %v1332 = vsub.f32 %v398, %v1331
    %v1333 = vand.u32 %v1332, 4294901760
    %1334 = vmatpush1.xpose.msra.mxu0 %v1333
    %1335 = vmatprep.subr.mxu0 0.0
    %v1336 = vand.u32 %v399, 4294901760
    %v1337 = vsub.f32 %v399, %v1336
    %v1338 = vand.u32 %v1337, 4294901760
    %1339 = vmatpush1.xpose.msra.mxu0 %v1338
    %1340 = vmatprep.subr.mxu0 0.0
    %v1341 = vand.u32 %v400, 4294901760
    %v1342 = vsub.f32 %v400, %v1341
    %v1343 = vand.u32 %v1342, 4294901760
    %1344 = vmatpush1.xpose.msra.mxu0 %v1343
    %1345 = vmatprep.subr.mxu0 0.0
    %v1346 = vand.u32 %v401, 4294901760
    %v1347 = vsub.f32 %v401, %v1346
    %v1348 = vand.u32 %v1347, 4294901760
    %1349 = vmatpush1.xpose.msra.mxu0 %v1348
    %1350 = vmatprep.subr.mxu0 0.0
    %v1351 = vand.u32 %v402, 4294901760
    %v1352 = vsub.f32 %v402, %v1351
    %v1353 = vand.u32 %v1352, 4294901760
    %1354 = vmatpush1.xpose.msra.mxu0 %v1353
    %1355 = vmatprep.subr.mxu0 0.0
    %v1356 = vand.u32 %v403, 4294901760
    %v1357 = vsub.f32 %v403, %v1356
    %v1358 = vand.u32 %v1357, 4294901760
    %1359 = vmatpush1.xpose.msra.mxu0 %v1358
    %1360 = vmatprep.subr.mxu0 0.0
    %v1361 = vand.u32 %v404, 4294901760
    %v1362 = vsub.f32 %v404, %v1361
    %v1363 = vand.u32 %v1362, 4294901760
    %1364 = vmatpush1.xpose.msra.mxu0 %v1363
    %1365 = vmatprep.subr.mxu0 0.0
    %v1366 = vand.u32 %v405, 4294901760
    %v1367 = vsub.f32 %v405, %v1366
    %v1368 = vand.u32 %v1367, 4294901760
    %1369 = vmatpush1.xpose.msra.mxu0 %v1368
    %1370 = vmatprep.subr.mxu0 0.0
    %v1371 = vand.u32 %v406, 4294901760
    %v1372 = vsub.f32 %v406, %v1371
    %v1373 = vand.u32 %v1372, 4294901760
    %1374 = vmatpush1.xpose.msra.mxu0 %v1373
    %1375 = vmatprep.subr.mxu0 0.0
    %v1376 = vand.u32 %v407, 4294901760
    %v1377 = vsub.f32 %v407, %v1376
    %v1378 = vand.u32 %v1377, 4294901760
    %1379 = vmatpush1.xpose.msra.mxu0 %v1378
    %1380 = vmatprep.subr.mxu0 0.0
    %v1381 = vand.u32 %v408, 4294901760
    %v1382 = vsub.f32 %v408, %v1381
    %v1383 = vand.u32 %v1382, 4294901760
    %1384 = vmatpush1.xpose.msra.mxu0 %v1383
    %1385 = vmatprep.subr.mxu0 0.0
    %v1386 = vand.u32 %v409, 4294901760
    %v1387 = vsub.f32 %v409, %v1386
    %v1388 = vand.u32 %v1387, 4294901760
    %1389 = vmatpush1.xpose.msra.mxu0 %v1388
    %1390 = vmatprep.subr.mxu0 0.0
    %1391 = vmatpush1.xpose.msra.mxu0 0.0
    %1392 = vmatprep.subr.mxu0 0.0
    %1393 = vmatpush1.xpose.msra.mxu0 0.0
    %1394 = vmatprep.subr.mxu0 0.0
    %1395 = vmatpush1.xpose.msra.mxu0 0.0
    %1396 = vmatprep.subr.mxu0 0.0
    %1397 = vmatpush1.xpose.msra.mxu0 0.0
    %1398 = vmatprep.subr.mxu0 0.0
    %1399 = vmatpush1.xpose.msra.mxu0 0.0
    %1400 = vmatprep.subr.mxu0 0.0
    %1401 = vmatpush1.xpose.msra.mxu0 0.0
    %1402 = vmatprep.subr.mxu0 0.0
    %1403 = vmatpush1.xpose.msra.mxu0 0.0
    %1404 = vmatprep.subr.mxu0 0.0
    %1405 = vmatpush1.xpose.msra.mxu0 0.0
    %1406 = vmatprep.subr.mxu0 0.0
    %1407 = vmatpush1.xpose.msra.mxu0 0.0
    %1408 = vmatprep.subr.mxu0 0.0
    %1409 = vmatpush1.xpose.msra.mxu0 0.0
    %1410 = vmatprep.subr.mxu0 0.0
    %1411 = vmatpush1.xpose.msra.mxu0 0.0
    %1412 = vmatprep.subr.mxu0 0.0
    %1413 = vmatpush1.xpose.msra.mxu0 0.0
    %1414 = vmatprep.subr.mxu0 0.0
    %1415 = vmatpush1.xpose.msra.mxu0 0.0
    %1416 = vmatprep.subr.mxu0 0.0
    %1417 = vmatpush1.xpose.msra.mxu0 0.0
    %1418 = vmatprep.subr.mxu0 0.0
    %1419 = vmatpush1.xpose.msra.mxu0 0.0
    %1420 = vmatprep.subr.mxu0 0.0
    %1421 = vmatpush1.xpose.msra.mxu0 0.0
    %1422 = vmatprep.mubr.f32.mxu0 0.0
    %v1423 = vand.u32 %v298, 4294901760
    %1424 = vmatmul.mubr.f32.gmra.mrb[0].mxu0 %v1423
    %v1425 = vpop.f32.mrb[0].mxu0
    %v1426 = vadd.f32 %v1187, %v1425
    %v1427 = vpop.f32.mrb[0].mxu0
    %1428 = vmatprep.mubr.f32.mxu0 0.0
    %v1429 = vand.u32 %v299, 4294901760
    %1430 = vmatmul.mubr.f32.gmra.mrb[0].mxu0 %v1429
    %v1431 = vpop.f32.mrb[0].mxu0
    %v1432 = vadd.f32 %v1195, %v1431
    %v1433 = vpop.f32.mrb[0].mxu0
    %1434 = vmatprep.mubr.f32.mxu0 0.0
    %v1435 = vand.u32 %v300, 4294901760
    %1436 = vmatmul.mubr.f32.gmra.mrb[0].mxu0 %v1435
    %v1437 = vpop.f32.mrb[0].mxu0
    %v1438 = vadd.f32 %v1203, %v1437
    %v1439 = vpop.f32.mrb[0].mxu0
    %1440 = vmatprep.mubr.f32.mxu0 0.0
    %v1441 = vand.u32 %v301, 4294901760
    %1442 = vmatmul.mubr.f32.gmra.mrb[0].mxu0 %v1441
    %v1443 = vpop.f32.mrb[0].mxu0
    %v1444 = vadd.f32 %v1211, %v1443
    %v1445 = vpop.f32.mrb[0].mxu0
    %1446 = vmatprep.mubr.f32.mxu0 0.0
    %v1447 = vand.u32 %v302, 4294901760
    %1448 = vmatmul.mubr.f32.gmra.mrb[0].mxu0 %v1447
    %v1449 = vpop.f32.mrb[0].mxu0
    %v1450 = vadd.f32 %v1219, %v1449
    %v1451 = vpop.f32.mrb[0].mxu0
    %1452 = vmatprep.mubr.f32.mxu0 0.0
    %v1453 = vand.u32 %v303, 4294901760
    %1454 = vmatmul.mubr.f32.gmra.mrb[0].mxu0 %v1453
    %v1455 = vpop.f32.mrb[0].mxu0
    %v1456 = vadd.f32 %v1227, %v1455
    %v1457 = vpop.f32.mrb[0].mxu0
    %1458 = vmatprep.mubr.f32.mxu0 0.0
    %v1459 = vand.u32 %v304, 4294901760
    %1460 = vmatmul.mubr.f32.gmra.mrb[0].mxu0 %v1459
    %v1461 = vpop.f32.mrb[0].mxu0
    %v1462 = vadd.f32 %v1235, %v1461
    %v1463 = vpop.f32.mrb[0].mxu0
    %1464 = vmatprep.mubr.f32.mxu0 0.0
    %v1465 = vand.u32 %v305, 4294901760
    %1466 = vmatmul.mubr.f32.gmra.mrb[0].mxu0 %v1465
    %v1467 = vpop.f32.mrb[0].mxu0
    %v1468 = vadd.f32 %v1243, %v1467
    %v1469 = vpop.f32.mrb[0].mxu0
    %1470 = vmatprep.mubr.f32.mxu0 0.0
    %v1471 = vand.u32 %v306, 4294901760
    %1472 = vmatmul.mubr.f32.gmra.mrb[0].mxu0 %v1471
    %v1473 = vpop.f32.mrb[0].mxu0
    %v1474 = vadd.f32 %v1251, %v1473
    %v1475 = vpop.f32.mrb[0].mxu0
    %1476 = vmatprep.mubr.f32.mxu0 0.0
    %v1477 = vand.u32 %v307, 4294901760
    %1478 = vmatmul.mubr.f32.gmra.mrb[0].mxu0 %v1477
    %v1479 = vpop.f32.mrb[0].mxu0
    %v1480 = vadd.f32 %v1259, %v1479
    %v1481 = vpop.f32.mrb[0].mxu0
    %1482 = vmatprep.mubr.f32.mxu0 0.0
    %v1483 = vand.u32 %v308, 4294901760
    %1484 = vmatmul.mubr.f32.gmra.mrb[0].mxu0 %v1483
    %v1485 = vpop.f32.mrb[0].mxu0
    %v1486 = vadd.f32 %v1267, %v1485
    %v1487 = vpop.f32.mrb[0].mxu0
    %1488 = vmatprep.mubr.f32.mxu0 0.0
    %v1489 = vand.u32 %v309, 4294901760
    %1490 = vmatmul.mubr.f32.gmra.mrb[0].mxu0 %v1489
    %v1491 = vpop.f32.mrb[0].mxu0
    %v1492 = vadd.f32 %v1275, %v1491
    %v1493 = vpop.f32.mrb[0].mxu0
    %1494 = vmatprep.mubr.f32.mxu0 0.0
    %v1495 = vand.u32 %v310, 4294901760
    %1496 = vmatmul.mubr.f32.gmra.mrb[0].mxu0 %v1495
    %v1497 = vpop.f32.mrb[0].mxu0
    %v1498 = vadd.f32 %v1283, %v1497
    %v1499 = vpop.f32.mrb[0].mxu0
    %1500 = vmatprep.mubr.f32.mxu0 0.0
    %v1501 = vand.u32 %v311, 4294901760
    %1502 = vmatmul.mubr.f32.gmra.mrb[0].mxu0 %v1501
    %v1503 = vpop.f32.mrb[0].mxu0
    %v1504 = vadd.f32 %v1291, %v1503
    %v1505 = vpop.f32.mrb[0].mxu0
    %1506 = vmatprep.mubr.f32.mxu0 0.0
    %v1507 = vand.u32 %v312, 4294901760
    %1508 = vmatmul.mubr.f32.gmra.mrb[0].mxu0 %v1507
    %v1509 = vpop.f32.mrb[0].mxu0
    %v1510 = vadd.f32 %v1299, %v1509
    %v1511 = vpop.f32.mrb[0].mxu0
    %1512 = vmatprep.mubr.f32.mxu0 0.0
    %v1513 = vand.u32 %v313, 4294901760
    %1514 = vmatmul.mubr.f32.gmra.mrb[0].mxu0 %v1513
    %v1515 = vpop.f32.mrb[0].mxu0
    %v1516 = vadd.f32 %v1307, %v1515
    %v1517 = vpop.f32.mrb[0].mxu0
    %1518 = vdwg.mxu0
    %1519 = vmatprep.subr.mxu0 0.0
    %v1520 = vand.u32 %v394, 4294901760
    %1521 = vmatpush1.xpose.msra.mxu0 %v1520
    %1522 = vmatprep.subr.mxu0 0.0
    %v1523 = vand.u32 %v395, 4294901760
    %1524 = vmatpush1.xpose.msra.mxu0 %v1523
    %1525 = vmatprep.subr.mxu0 0.0
    %v1526 = vand.u32 %v396, 4294901760
    %1527 = vmatpush1.xpose.msra.mxu0 %v1526
    %1528 = vmatprep.subr.mxu0 0.0
    %v1529 = vand.u32 %v397, 4294901760
    %1530 = vmatpush1.xpose.msra.mxu0 %v1529
    %1531 = vmatprep.subr.mxu0 0.0
    %v1532 = vand.u32 %v398, 4294901760
    %1533 = vmatpush1.xpose.msra.mxu0 %v1532
    %1534 = vmatprep.subr.mxu0 0.0
    %v1535 = vand.u32 %v399, 4294901760
    %1536 = vmatpush1.xpose.msra.mxu0 %v1535
    %1537 = vmatprep.subr.mxu0 0.0
    %v1538 = vand.u32 %v400, 4294901760
    %1539 = vmatpush1.xpose.msra.mxu0 %v1538
    %1540 = vmatprep.subr.mxu0 0.0
    %v1541 = vand.u32 %v401, 4294901760
    %1542 = vmatpush1.xpose.msra.mxu0 %v1541
    %1543 = vmatprep.subr.mxu0 0.0
    %v1544 = vand.u32 %v402, 4294901760
    %1545 = vmatpush1.xpose.msra.mxu0 %v1544
    %1546 = vmatprep.subr.mxu0 0.0
    %v1547 = vand.u32 %v403, 4294901760
    %1548 = vmatpush1.xpose.msra.mxu0 %v1547
    %1549 = vmatprep.subr.mxu0 0.0
    %v1550 = vand.u32 %v404, 4294901760
    %1551 = vmatpush1.xpose.msra.mxu0 %v1550
    %1552 = vmatprep.subr.mxu0 0.0
    %v1553 = vand.u32 %v405, 4294901760
    %1554 = vmatpush1.xpose.msra.mxu0 %v1553
    %1555 = vmatprep.subr.mxu0 0.0
    %v1556 = vand.u32 %v406, 4294901760
    %1557 = vmatpush1.xpose.msra.mxu0 %v1556
    %1558 = vmatprep.subr.mxu0 0.0
    %v1559 = vand.u32 %v407, 4294901760
    %1560 = vmatpush1.xpose.msra.mxu0 %v1559
    %1561 = vmatprep.subr.mxu0 0.0
    %v1562 = vand.u32 %v408, 4294901760
    %1563 = vmatpush1.xpose.msra.mxu0 %v1562
    %1564 = vmatprep.subr.mxu0 0.0
    %v1565 = vand.u32 %v409, 4294901760
    %1566 = vmatpush1.xpose.msra.mxu0 %v1565
    %1567 = vmatprep.subr.mxu0 0.0
    %1568 = vmatpush1.xpose.msra.mxu0 0.0
    %1569 = vmatprep.subr.mxu0 0.0
    %1570 = vmatpush1.xpose.msra.mxu0 0.0
    %1571 = vmatprep.subr.mxu0 0.0
    %1572 = vmatpush1.xpose.msra.mxu0 0.0
    %1573 = vmatprep.subr.mxu0 0.0
    %1574 = vmatpush1.xpose.msra.mxu0 0.0
    %1575 = vmatprep.subr.mxu0 0.0
    %1576 = vmatpush1.xpose.msra.mxu0 0.0
    %1577 = vmatprep.subr.mxu0 0.0
    %1578 = vmatpush1.xpose.msra.mxu0 0.0
    %1579 = vmatprep.subr.mxu0 0.0
    %1580 = vmatpush1.xpose.msra.mxu0 0.0
    %1581 = vmatprep.subr.mxu0 0.0
    %1582 = vmatpush1.xpose.msra.mxu0 0.0
    %1583 = vmatprep.subr.mxu0 0.0
    %1584 = vmatpush1.xpose.msra.mxu0 0.0
    %1585 = vmatprep.subr.mxu0 0.0
    %1586 = vmatpush1.xpose.msra.mxu0 0.0
    %1587 = vmatprep.subr.mxu0 0.0
    %1588 = vmatpush1.xpose.msra.mxu0 0.0
    %1589 = vmatprep.subr.mxu0 0.0
    %1590 = vmatpush1.xpose.msra.mxu0 0.0
    %1591 = vmatprep.subr.mxu0 0.0
    %1592 = vmatpush1.xpose.msra.mxu0 0.0
    %1593 = vmatprep.subr.mxu0 0.0
    %1594 = vmatpush1.xpose.msra.mxu0 0.0
    %1595 = vmatprep.subr.mxu0 0.0
    %1596 = vmatpush1.xpose.msra.mxu0 0.0
    %1597 = vmatprep.subr.mxu0 0.0
    %1598 = vmatpush1.xpose.msra.mxu0 0.0
    %1599 = vmatprep.mubr.f32.mxu0 0.0
    %v1600 = vand.u32 %v298, 4294901760
    %1601 = vmatmul.mubr.f32.gmra.mrb[0].mxu0 %v1600
    %v1602 = vpop.f32.mrb[0].mxu0
    %v1603 = vadd.f32 %v1426, %v1602
    %v1604 = vpop.f32.mrb[0].mxu0
    %1605 = vmatprep.mubr.f32.mxu0 0.0
    %v1606 = vand.u32 %v299, 4294901760
    %1607 = vmatmul.mubr.f32.gmra.mrb[0].mxu0 %v1606
    %v1608 = vpop.f32.mrb[0].mxu0
    %v1609 = vadd.f32 %v1432, %v1608
    %v1610 = vpop.f32.mrb[0].mxu0
    %1611 = vmatprep.mubr.f32.mxu0 0.0
    %v1612 = vand.u32 %v300, 4294901760
    %1613 = vmatmul.mubr.f32.gmra.mrb[0].mxu0 %v1612
    %v1614 = vpop.f32.mrb[0].mxu0
    %v1615 = vadd.f32 %v1438, %v1614
    %v1616 = vpop.f32.mrb[0].mxu0
    %1617 = vmatprep.mubr.f32.mxu0 0.0
    %v1618 = vand.u32 %v301, 4294901760
    %1619 = vmatmul.mubr.f32.gmra.mrb[0].mxu0 %v1618
    %v1620 = vpop.f32.mrb[0].mxu0
    %v1621 = vadd.f32 %v1444, %v1620
    %v1622 = vpop.f32.mrb[0].mxu0
    %1623 = vmatprep.mubr.f32.mxu0 0.0
    %v1624 = vand.u32 %v302, 4294901760
    %1625 = vmatmul.mubr.f32.gmra.mrb[0].mxu0 %v1624
    %v1626 = vpop.f32.mrb[0].mxu0
    %v1627 = vadd.f32 %v1450, %v1626
    %v1628 = vpop.f32.mrb[0].mxu0
    %1629 = vmatprep.mubr.f32.mxu0 0.0
    %v1630 = vand.u32 %v303, 4294901760
    %1631 = vmatmul.mubr.f32.gmra.mrb[0].mxu0 %v1630
    %v1632 = vpop.f32.mrb[0].mxu0
    %v1633 = vadd.f32 %v1456, %v1632
    %v1634 = vpop.f32.mrb[0].mxu0
    %1635 = vmatprep.mubr.f32.mxu0 0.0
    %v1636 = vand.u32 %v304, 4294901760
    %1637 = vmatmul.mubr.f32.gmra.mrb[0].mxu0 %v1636
    %v1638 = vpop.f32.mrb[0].mxu0
    %v1639 = vadd.f32 %v1462, %v1638
    %v1640 = vpop.f32.mrb[0].mxu0
    %1641 = vmatprep.mubr.f32.mxu0 0.0
    %v1642 = vand.u32 %v305, 4294901760
    %1643 = vmatmul.mubr.f32.gmra.mrb[0].mxu0 %v1642
    %v1644 = vpop.f32.mrb[0].mxu0
    %v1645 = vadd.f32 %v1468, %v1644
    %v1646 = vpop.f32.mrb[0].mxu0
    %1647 = vmatprep.mubr.f32.mxu0 0.0
    %v1648 = vand.u32 %v306, 4294901760
    %1649 = vmatmul.mubr.f32.gmra.mrb[0].mxu0 %v1648
    %v1650 = vpop.f32.mrb[0].mxu0
    %v1651 = vadd.f32 %v1474, %v1650
    %v1652 = vpop.f32.mrb[0].mxu0
    %1653 = vmatprep.mubr.f32.mxu0 0.0
    %v1654 = vand.u32 %v307, 4294901760
    %1655 = vmatmul.mubr.f32.gmra.mrb[0].mxu0 %v1654
    %v1656 = vpop.f32.mrb[0].mxu0
    %v1657 = vadd.f32 %v1480, %v1656
    %v1658 = vpop.f32.mrb[0].mxu0
    %1659 = vmatprep.mubr.f32.mxu0 0.0
    %v1660 = vand.u32 %v308, 4294901760
    %1661 = vmatmul.mubr.f32.gmra.mrb[0].mxu0 %v1660
    %v1662 = vpop.f32.mrb[0].mxu0
    %v1663 = vadd.f32 %v1486, %v1662
    %v1664 = vpop.f32.mrb[0].mxu0
    %1665 = vmatprep.mubr.f32.mxu0 0.0
    %v1666 = vand.u32 %v309, 4294901760
    %1667 = vmatmul.mubr.f32.gmra.mrb[0].mxu0 %v1666
    %v1668 = vpop.f32.mrb[0].mxu0
    %v1669 = vadd.f32 %v1492, %v1668
    %v1670 = vpop.f32.mrb[0].mxu0
    %1671 = vmatprep.mubr.f32.mxu0 0.0
    %v1672 = vand.u32 %v310, 4294901760
    %1673 = vmatmul.mubr.f32.gmra.mrb[0].mxu0 %v1672
    %v1674 = vpop.f32.mrb[0].mxu0
    %v1675 = vadd.f32 %v1498, %v1674
    %v1676 = vpop.f32.mrb[0].mxu0
    %1677 = vmatprep.mubr.f32.mxu0 0.0
    %v1678 = vand.u32 %v311, 4294901760
    %1679 = vmatmul.mubr.f32.gmra.mrb[0].mxu0 %v1678
    %v1680 = vpop.f32.mrb[0].mxu0
    %v1681 = vadd.f32 %v1504, %v1680
    %v1682 = vpop.f32.mrb[0].mxu0
    %1683 = vmatprep.mubr.f32.mxu0 0.0
    %v1684 = vand.u32 %v312, 4294901760
    %1685 = vmatmul.mubr.f32.gmra.mrb[0].mxu0 %v1684
    %v1686 = vpop.f32.mrb[0].mxu0
    %v1687 = vadd.f32 %v1510, %v1686
    %v1688 = vpop.f32.mrb[0].mxu0
    %1689 = vmatprep.mubr.f32.mxu0 0.0
    %v1690 = vand.u32 %v313, 4294901760
    %1691 = vmatmul.mubr.f32.gmra.mrb[0].mxu0 %v1690
    %v1692 = vpop.f32.mrb[0].mxu0
    %v1693 = vadd.f32 %v1516, %v1692
    %v1694 = vpop.f32.mrb[0].mxu0
    %1695 = vdwg.mxu0
    %v1696 = vsel %vm105, 0.0, %v1603
    %v1697 = vsel %vm106, 0.0, %v1609
    %v1698 = vsel %vm107, 0.0, %v1615
    %v1699 = vsel %vm108, 0.0, %v1621
    %v1700 = vsel %vm109, 0.0, %v1627
    %v1701 = vsel %vm110, 0.0, %v1633
    %v1702 = vsel %vm111, 0.0, %v1639
    %v1703 = vsel %vm112, 0.0, %v1645
    %v1704 = vsel %vm113, 0.0, %v1651
    %v1705 = vsel %vm114, 0.0, %v1657
    %v1706 = vsel %vm115, 0.0, %v1663
    %v1707 = vsel %vm116, 0.0, %v1669
    %v1708 = vsel %vm117, 0.0, %v1675
    %v1709 = vsel %vm118, 0.0, %v1681
    %v1710 = vsel %vm119, 0.0, %v1687
    %v1711 = vsel %vm120, 0.0, %v1693
    %v1712 = vsel %vm137, 1, 0
    %vm1713 = vcmp.eq.s32.totalorder %v1712, 1
    %v1714 = vsel %vm1713, %v1696, -1e+30
    %v1715 = vsel %vm1713, %v1697, -1e+30
    %v1716 = vsel %vm1713, %v1698, -1e+30
    %v1717 = vsel %vm1713, %v1699, -1e+30
    %v1718 = vsel %vm1713, %v1700, -1e+30
    %v1719 = vsel %vm1713, %v1701, -1e+30
    %v1720 = vsel %vm1713, %v1702, -1e+30
    %v1721 = vsel %vm1713, %v1703, -1e+30
    %v1722 = vsel %vm1713, %v1704, -1e+30
    %v1723 = vsel %vm1713, %v1705, -1e+30
    %v1724 = vsel %vm1713, %v1706, -1e+30
    %v1725 = vsel %vm1713, %v1707, -1e+30
    %v1726 = vsel %vm1713, %v1708, -1e+30
    %v1727 = vsel %vm1713, %v1709, -1e+30
    %v1728 = vsel %vm1713, %v1710, -1e+30
    %v1729 = vsel %vm1713, %v1711, -1e+30
    %1730 = vmax.xlane.f32.xlu0 %v1714
    %v1731 = vpop.xlane.xlu0 %1730
    %1732 = vmax.xlane.f32.xlu0 %v1715
    %v1733 = vpop.xlane.xlu0 %1732
    %1734 = vmax.xlane.f32.xlu0 %v1716
    %v1735 = vpop.xlane.xlu0 %1734
    %1736 = vmax.xlane.f32.xlu0 %v1717
    %v1737 = vpop.xlane.xlu0 %1736
    %1738 = vmax.xlane.f32.xlu0 %v1718
    %v1739 = vpop.xlane.xlu0 %1738
    %1740 = vmax.xlane.f32.xlu0 %v1719
    %v1741 = vpop.xlane.xlu0 %1740
    %1742 = vmax.xlane.f32.xlu0 %v1720
    %v1743 = vpop.xlane.xlu0 %1742
    %1744 = vmax.xlane.f32.xlu0 %v1721
    %v1745 = vpop.xlane.xlu0 %1744
    %1746 = vmax.xlane.f32.xlu0 %v1722
    %v1747 = vpop.xlane.xlu0 %1746
    %1748 = vmax.xlane.f32.xlu0 %v1723
    %v1749 = vpop.xlane.xlu0 %1748
    %1750 = vmax.xlane.f32.xlu0 %v1724
    %v1751 = vpop.xlane.xlu0 %1750
    %1752 = vmax.xlane.f32.xlu0 %v1725
    %v1753 = vpop.xlane.xlu0 %1752
    %1754 = vmax.xlane.f32.xlu0 %v1726
    %v1755 = vpop.xlane.xlu0 %1754
    %1756 = vmax.xlane.f32.xlu0 %v1727
    %v1757 = vpop.xlane.xlu0 %1756
    %1758 = vmax.xlane.f32.xlu0 %v1728
    %v1759 = vpop.xlane.xlu0 %1758
    %1760 = vmax.xlane.f32.xlu0 %v1729
    %v1761 = vpop.xlane.xlu0 %1760
    %vm1762 = vcmp.eq.f32.partialorder %v1714, %v1731
    %vm1763 = vcmp.eq.f32.partialorder %v1715, %v1733
    %vm1764 = vcmp.eq.f32.partialorder %v1716, %v1735
    %vm1765 = vcmp.eq.f32.partialorder %v1717, %v1737
    %vm1766 = vcmp.eq.f32.partialorder %v1718, %v1739
    %vm1767 = vcmp.eq.f32.partialorder %v1719, %v1741
    %vm1768 = vcmp.eq.f32.partialorder %v1720, %v1743
    %vm1769 = vcmp.eq.f32.partialorder %v1721, %v1745
    %vm1770 = vcmp.eq.f32.partialorder %v1722, %v1747
    %vm1771 = vcmp.eq.f32.partialorder %v1723, %v1749
    %vm1772 = vcmp.eq.f32.partialorder %v1724, %v1751
    %vm1773 = vcmp.eq.f32.partialorder %v1725, %v1753
    %vm1774 = vcmp.eq.f32.partialorder %v1726, %v1755
    %vm1775 = vcmp.eq.f32.partialorder %v1727, %v1757
    %vm1776 = vcmp.eq.f32.partialorder %v1728, %v1759
    %vm1777 = vcmp.eq.f32.partialorder %v1729, %v1761
    %v1778 = vsel %vm1762, 1, 0
    %v1779 = vsel %vm1763, 1, 0
    %v1780 = vsel %vm1764, 1, 0
    %v1781 = vsel %vm1765, 1, 0
    %v1782 = vsel %vm1766, 1, 0
    %v1783 = vsel %vm1767, 1, 0
    %v1784 = vsel %vm1768, 1, 0
    %v1785 = vsel %vm1769, 1, 0
    %v1786 = vsel %vm1770, 1, 0
    %v1787 = vsel %vm1771, 1, 0
    %v1788 = vsel %vm1772, 1, 0
    %v1789 = vsel %vm1773, 1, 0
    %v1790 = vsel %vm1774, 1, 0
    %v1791 = vsel %vm1775, 1, 0
    %v1792 = vsel %vm1776, 1, 0
    %v1793 = vsel %vm1777, 1, 0
    %v1794 = vcvt.s32.f32 %v1778
    %v1795 = vcvt.s32.f32 %v1779
    %v1796 = vcvt.s32.f32 %v1780
    %v1797 = vcvt.s32.f32 %v1781
    %v1798 = vcvt.s32.f32 %v1782
    %v1799 = vcvt.s32.f32 %v1783
    %v1800 = vcvt.s32.f32 %v1784
    %v1801 = vcvt.s32.f32 %v1785
    %v1802 = vcvt.s32.f32 %v1786
    %v1803 = vcvt.s32.f32 %v1787
    %v1804 = vcvt.s32.f32 %v1788
    %v1805 = vcvt.s32.f32 %v1789
    %v1806 = vcvt.s32.f32 %v1790
    %v1807 = vcvt.s32.f32 %v1791
    %v1808 = vcvt.s32.f32 %v1792
    %v1809 = vcvt.s32.f32 %v1793
    %1810 = vadd.xlane.f32.xlu0 %v1794
    %v1811 = vpop.xlane.xlu0 %1810
    %1812 = vadd.xlane.f32.xlu0 %v1795
    %v1813 = vpop.xlane.xlu0 %1812
    %1814 = vadd.xlane.f32.xlu0 %v1796
    %v1815 = vpop.xlane.xlu0 %1814
    %1816 = vadd.xlane.f32.xlu0 %v1797
    %v1817 = vpop.xlane.xlu0 %1816
    %1818 = vadd.xlane.f32.xlu0 %v1798
    %v1819 = vpop.xlane.xlu0 %1818
    %1820 = vadd.xlane.f32.xlu0 %v1799
    %v1821 = vpop.xlane.xlu0 %1820
    %1822 = vadd.xlane.f32.xlu0 %v1800
    %v1823 = vpop.xlane.xlu0 %1822
    %1824 = vadd.xlane.f32.xlu0 %v1801
    %v1825 = vpop.xlane.xlu0 %1824
    %1826 = vadd.xlane.f32.xlu0 %v1802
    %v1827 = vpop.xlane.xlu0 %1826
    %1828 = vadd.xlane.f32.xlu0 %v1803
    %v1829 = vpop.xlane.xlu0 %1828
    %1830 = vadd.xlane.f32.xlu0 %v1804
    %v1831 = vpop.xlane.xlu0 %1830
    %1832 = vadd.xlane.f32.xlu0 %v1805
    %v1833 = vpop.xlane.xlu0 %1832
    %1834 = vadd.xlane.f32.xlu0 %v1806
    %v1835 = vpop.xlane.xlu0 %1834
    %1836 = vadd.xlane.f32.xlu0 %v1807
    %v1837 = vpop.xlane.xlu0 %1836
    %1838 = vadd.xlane.f32.xlu0 %v1808
    %v1839 = vpop.xlane.xlu0 %1838
    %1840 = vadd.xlane.f32.xlu0 %v1809
    %v1841 = vpop.xlane.xlu0 %1840
    %vm1842 = vcmp.gt.f32.partialorder 3.0, 0.0
    %vm1843 = vcmp.ge.f32.partialorder %v1811, 3.0
    %vm1844 = vcmp.ge.f32.partialorder %v1813, 3.0
    %vm1845 = vcmp.ge.f32.partialorder %v1815, 3.0
    %vm1846 = vcmp.ge.f32.partialorder %v1817, 3.0
    %vm1847 = vcmp.ge.f32.partialorder %v1819, 3.0
    %vm1848 = vcmp.ge.f32.partialorder %v1821, 3.0
    %vm1849 = vcmp.ge.f32.partialorder %v1823, 3.0
    %vm1850 = vcmp.ge.f32.partialorder %v1825, 3.0
    %vm1851 = vcmp.ge.f32.partialorder %v1827, 3.0
    %vm1852 = vcmp.ge.f32.partialorder %v1829, 3.0
    %vm1853 = vcmp.ge.f32.partialorder %v1831, 3.0
    %vm1854 = vcmp.ge.f32.partialorder %v1833, 3.0
    %vm1855 = vcmp.ge.f32.partialorder %v1835, 3.0
    %vm1856 = vcmp.ge.f32.partialorder %v1837, 3.0
    %vm1857 = vcmp.ge.f32.partialorder %v1839, 3.0
    %vm1858 = vcmp.ge.f32.partialorder %v1841, 3.0
    %vm1859 = vmand %vm1842, %vm1843
    %vm1860 = vmand %vm1842, %vm1844
    %vm1861 = vmand %vm1842, %vm1845
    %vm1862 = vmand %vm1842, %vm1846
    %vm1863 = vmand %vm1842, %vm1847
    %vm1864 = vmand %vm1842, %vm1848
    %vm1865 = vmand %vm1842, %vm1849
    %vm1866 = vmand %vm1842, %vm1850
    %vm1867 = vmand %vm1842, %vm1851
    %vm1868 = vmand %vm1842, %vm1852
    %vm1869 = vmand %vm1842, %vm1853
    %vm1870 = vmand %vm1842, %vm1854
    %vm1871 = vmand %vm1842, %vm1855
    %vm1872 = vmand %vm1842, %vm1856
    %vm1873 = vmand %vm1842, %vm1857
    %vm1874 = vmand %vm1842, %vm1858
    %v1875 = vsel %vm1859, %v1731, -1e+30
    %v1876 = vsel %vm1860, %v1733, -1e+30
    %v1877 = vsel %vm1861, %v1735, -1e+30
    %v1878 = vsel %vm1862, %v1737, -1e+30
    %v1879 = vsel %vm1863, %v1739, -1e+30
    %v1880 = vsel %vm1864, %v1741, -1e+30
    %v1881 = vsel %vm1865, %v1743, -1e+30
    %v1882 = vsel %vm1866, %v1745, -1e+30
    %v1883 = vsel %vm1867, %v1747, -1e+30
    %v1884 = vsel %vm1868, %v1749, -1e+30
    %v1885 = vsel %vm1869, %v1751, -1e+30
    %v1886 = vsel %vm1870, %v1753, -1e+30
    %v1887 = vsel %vm1871, %v1755, -1e+30
    %v1888 = vsel %vm1872, %v1757, -1e+30
    %v1889 = vsel %vm1873, %v1759, -1e+30
    %v1890 = vsel %vm1874, %v1761, -1e+30
    %v1891 = vsub.f32 3.0, %v1811
    %v1892 = vsub.f32 3.0, %v1813
    %v1893 = vsub.f32 3.0, %v1815
    %v1894 = vsub.f32 3.0, %v1817
    %v1895 = vsub.f32 3.0, %v1819
    %v1896 = vsub.f32 3.0, %v1821
    %v1897 = vsub.f32 3.0, %v1823
    %v1898 = vsub.f32 3.0, %v1825
    %v1899 = vsub.f32 3.0, %v1827
    %v1900 = vsub.f32 3.0, %v1829
    %v1901 = vsub.f32 3.0, %v1831
    %v1902 = vsub.f32 3.0, %v1833
    %v1903 = vsub.f32 3.0, %v1835
    %v1904 = vsub.f32 3.0, %v1837
    %v1905 = vsub.f32 3.0, %v1839
    %v1906 = vsub.f32 3.0, %v1841
    %v1907 = vsel %vm1762, -1e+30, %v1714
    %v1908 = vsel %vm1763, -1e+30, %v1715
    %v1909 = vsel %vm1764, -1e+30, %v1716
    %v1910 = vsel %vm1765, -1e+30, %v1717
    %v1911 = vsel %vm1766, -1e+30, %v1718
    %v1912 = vsel %vm1767, -1e+30, %v1719
    %v1913 = vsel %vm1768, -1e+30, %v1720
    %v1914 = vsel %vm1769, -1e+30, %v1721
    %v1915 = vsel %vm1770, -1e+30, %v1722
    %v1916 = vsel %vm1771, -1e+30, %v1723
    %v1917 = vsel %vm1772, -1e+30, %v1724
    %v1918 = vsel %vm1773, -1e+30, %v1725
    %v1919 = vsel %vm1774, -1e+30, %v1726
    %v1920 = vsel %vm1775, -1e+30, %v1727
    %v1921 = vsel %vm1776, -1e+30, %v1728
    %v1922 = vsel %vm1777, -1e+30, %v1729
    %1923 = vmax.xlane.f32.xlu0 %v1907
    %v1924 = vpop.xlane.xlu0 %1923
    %1925 = vmax.xlane.f32.xlu0 %v1908
    %v1926 = vpop.xlane.xlu0 %1925
    %1927 = vmax.xlane.f32.xlu0 %v1909
    %v1928 = vpop.xlane.xlu0 %1927
    %1929 = vmax.xlane.f32.xlu0 %v1910
    %v1930 = vpop.xlane.xlu0 %1929
    %1931 = vmax.xlane.f32.xlu0 %v1911
    %v1932 = vpop.xlane.xlu0 %1931
    %1933 = vmax.xlane.f32.xlu0 %v1912
    %v1934 = vpop.xlane.xlu0 %1933
    %1935 = vmax.xlane.f32.xlu0 %v1913
    %v1936 = vpop.xlane.xlu0 %1935
    %1937 = vmax.xlane.f32.xlu0 %v1914
    %v1938 = vpop.xlane.xlu0 %1937
    %1939 = vmax.xlane.f32.xlu0 %v1915
    %v1940 = vpop.xlane.xlu0 %1939
    %1941 = vmax.xlane.f32.xlu0 %v1916
    %v1942 = vpop.xlane.xlu0 %1941
    %1943 = vmax.xlane.f32.xlu0 %v1917
    %v1944 = vpop.xlane.xlu0 %1943
    %1945 = vmax.xlane.f32.xlu0 %v1918
    %v1946 = vpop.xlane.xlu0 %1945
    %1947 = vmax.xlane.f32.xlu0 %v1919
    %v1948 = vpop.xlane.xlu0 %1947
    %1949 = vmax.xlane.f32.xlu0 %v1920
    %v1950 = vpop.xlane.xlu0 %1949
    %1951 = vmax.xlane.f32.xlu0 %v1921
    %v1952 = vpop.xlane.xlu0 %1951
    %1953 = vmax.xlane.f32.xlu0 %v1922
    %v1954 = vpop.xlane.xlu0 %1953
    %vm1955 = vcmp.eq.f32.partialorder %v1907, %v1924
    %vm1956 = vcmp.eq.f32.partialorder %v1908, %v1926
    %vm1957 = vcmp.eq.f32.partialorder %v1909, %v1928
    %vm1958 = vcmp.eq.f32.partialorder %v1910, %v1930
    %vm1959 = vcmp.eq.f32.partialorder %v1911, %v1932
    %vm1960 = vcmp.eq.f32.partialorder %v1912, %v1934
    %vm1961 = vcmp.eq.f32.partialorder %v1913, %v1936
    %vm1962 = vcmp.eq.f32.partialorder %v1914, %v1938
    %vm1963 = vcmp.eq.f32.partialorder %v1915, %v1940
    %vm1964 = vcmp.eq.f32.partialorder %v1916, %v1942
    %vm1965 = vcmp.eq.f32.partialorder %v1917, %v1944
    %vm1966 = vcmp.eq.f32.partialorder %v1918, %v1946
    %vm1967 = vcmp.eq.f32.partialorder %v1919, %v1948
    %vm1968 = vcmp.eq.f32.partialorder %v1920, %v1950
    %vm1969 = vcmp.eq.f32.partialorder %v1921, %v1952
    %vm1970 = vcmp.eq.f32.partialorder %v1922, %v1954
    %v1971 = vsel %vm1955, 1, 0
    %v1972 = vsel %vm1956, 1, 0
    %v1973 = vsel %vm1957, 1, 0
    %v1974 = vsel %vm1958, 1, 0
    %v1975 = vsel %vm1959, 1, 0
    %v1976 = vsel %vm1960, 1, 0
    %v1977 = vsel %vm1961, 1, 0
    %v1978 = vsel %vm1962, 1, 0
    %v1979 = vsel %vm1963, 1, 0
    %v1980 = vsel %vm1964, 1, 0
    %v1981 = vsel %vm1965, 1, 0
    %v1982 = vsel %vm1966, 1, 0
    %v1983 = vsel %vm1967, 1, 0
    %v1984 = vsel %vm1968, 1, 0
    %v1985 = vsel %vm1969, 1, 0
    %v1986 = vsel %vm1970, 1, 0
    %v1987 = vcvt.s32.f32 %v1971
    %v1988 = vcvt.s32.f32 %v1972
    %v1989 = vcvt.s32.f32 %v1973
    %v1990 = vcvt.s32.f32 %v1974
    %v1991 = vcvt.s32.f32 %v1975
    %v1992 = vcvt.s32.f32 %v1976
    %v1993 = vcvt.s32.f32 %v1977
    %v1994 = vcvt.s32.f32 %v1978
    %v1995 = vcvt.s32.f32 %v1979
    %v1996 = vcvt.s32.f32 %v1980
    %v1997 = vcvt.s32.f32 %v1981
    %v1998 = vcvt.s32.f32 %v1982
    %v1999 = vcvt.s32.f32 %v1983
    %v2000 = vcvt.s32.f32 %v1984
    %v2001 = vcvt.s32.f32 %v1985
    %v2002 = vcvt.s32.f32 %v1986
    %2003 = vadd.xlane.f32.xlu0 %v1987
    %v2004 = vpop.xlane.xlu0 %2003
    %2005 = vadd.xlane.f32.xlu0 %v1988
    %v2006 = vpop.xlane.xlu0 %2005
    %2007 = vadd.xlane.f32.xlu0 %v1989
    %v2008 = vpop.xlane.xlu0 %2007
    %2009 = vadd.xlane.f32.xlu0 %v1990
    %v2010 = vpop.xlane.xlu0 %2009
    %2011 = vadd.xlane.f32.xlu0 %v1991
    %v2012 = vpop.xlane.xlu0 %2011
    %2013 = vadd.xlane.f32.xlu0 %v1992
    %v2014 = vpop.xlane.xlu0 %2013
    %2015 = vadd.xlane.f32.xlu0 %v1993
    %v2016 = vpop.xlane.xlu0 %2015
    %2017 = vadd.xlane.f32.xlu0 %v1994
    %v2018 = vpop.xlane.xlu0 %2017
    %2019 = vadd.xlane.f32.xlu0 %v1995
    %v2020 = vpop.xlane.xlu0 %2019
    %2021 = vadd.xlane.f32.xlu0 %v1996
    %v2022 = vpop.xlane.xlu0 %2021
    %2023 = vadd.xlane.f32.xlu0 %v1997
    %v2024 = vpop.xlane.xlu0 %2023
    %2025 = vadd.xlane.f32.xlu0 %v1998
    %v2026 = vpop.xlane.xlu0 %2025
    %2027 = vadd.xlane.f32.xlu0 %v1999
    %v2028 = vpop.xlane.xlu0 %2027
    %2029 = vadd.xlane.f32.xlu0 %v2000
    %v2030 = vpop.xlane.xlu0 %2029
    %2031 = vadd.xlane.f32.xlu0 %v2001
    %v2032 = vpop.xlane.xlu0 %2031
    %2033 = vadd.xlane.f32.xlu0 %v2002
    %v2034 = vpop.xlane.xlu0 %2033
    %vm2035 = vcmp.gt.f32.partialorder %v1891, 0.0
    %vm2036 = vcmp.gt.f32.partialorder %v1892, 0.0
    %vm2037 = vcmp.gt.f32.partialorder %v1893, 0.0
    %vm2038 = vcmp.gt.f32.partialorder %v1894, 0.0
    %vm2039 = vcmp.gt.f32.partialorder %v1895, 0.0
    %vm2040 = vcmp.gt.f32.partialorder %v1896, 0.0
    %vm2041 = vcmp.gt.f32.partialorder %v1897, 0.0
    %vm2042 = vcmp.gt.f32.partialorder %v1898, 0.0
    %vm2043 = vcmp.gt.f32.partialorder %v1899, 0.0
    %vm2044 = vcmp.gt.f32.partialorder %v1900, 0.0
    %vm2045 = vcmp.gt.f32.partialorder %v1901, 0.0
    %vm2046 = vcmp.gt.f32.partialorder %v1902, 0.0
    %vm2047 = vcmp.gt.f32.partialorder %v1903, 0.0
    %vm2048 = vcmp.gt.f32.partialorder %v1904, 0.0
    %vm2049 = vcmp.gt.f32.partialorder %v1905, 0.0
    %vm2050 = vcmp.gt.f32.partialorder %v1906, 0.0
    %vm2051 = vcmp.ge.f32.partialorder %v2004, %v1891
    %vm2052 = vcmp.ge.f32.partialorder %v2006, %v1892
    %vm2053 = vcmp.ge.f32.partialorder %v2008, %v1893
    %vm2054 = vcmp.ge.f32.partialorder %v2010, %v1894
    %vm2055 = vcmp.ge.f32.partialorder %v2012, %v1895
    %vm2056 = vcmp.ge.f32.partialorder %v2014, %v1896
    %vm2057 = vcmp.ge.f32.partialorder %v2016, %v1897
    %vm2058 = vcmp.ge.f32.partialorder %v2018, %v1898
    %vm2059 = vcmp.ge.f32.partialorder %v2020, %v1899
    %vm2060 = vcmp.ge.f32.partialorder %v2022, %v1900
    %vm2061 = vcmp.ge.f32.partialorder %v2024, %v1901
    %vm2062 = vcmp.ge.f32.partialorder %v2026, %v1902
    %vm2063 = vcmp.ge.f32.partialorder %v2028, %v1903
    %vm2064 = vcmp.ge.f32.partialorder %v2030, %v1904
    %vm2065 = vcmp.ge.f32.partialorder %v2032, %v1905
    %vm2066 = vcmp.ge.f32.partialorder %v2034, %v1906
    %vm2067 = vmand %vm2035, %vm2051
    %vm2068 = vmand %vm2036, %vm2052
    %vm2069 = vmand %vm2037, %vm2053
    %vm2070 = vmand %vm2038, %vm2054
    %vm2071 = vmand %vm2039, %vm2055
    %vm2072 = vmand %vm2040, %vm2056
    %vm2073 = vmand %vm2041, %vm2057
    %vm2074 = vmand %vm2042, %vm2058
    %vm2075 = vmand %vm2043, %vm2059
    %vm2076 = vmand %vm2044, %vm2060
    %vm2077 = vmand %vm2045, %vm2061
    %vm2078 = vmand %vm2046, %vm2062
    %vm2079 = vmand %vm2047, %vm2063
    %vm2080 = vmand %vm2048, %vm2064
    %vm2081 = vmand %vm2049, %vm2065
    %vm2082 = vmand %vm2050, %vm2066
    %v2083 = vsel %vm2067, %v1924, %v1875
    %v2084 = vsel %vm2068, %v1926, %v1876
    %v2085 = vsel %vm2069, %v1928, %v1877
    %v2086 = vsel %vm2070, %v1930, %v1878
    %v2087 = vsel %vm2071, %v1932, %v1879
    %v2088 = vsel %vm2072, %v1934, %v1880
    %v2089 = vsel %vm2073, %v1936, %v1881
    %v2090 = vsel %vm2074, %v1938, %v1882
    %v2091 = vsel %vm2075, %v1940, %v1883
    %v2092 = vsel %vm2076, %v1942, %v1884
    %v2093 = vsel %vm2077, %v1944, %v1885
    %v2094 = vsel %vm2078, %v1946, %v1886
    %v2095 = vsel %vm2079, %v1948, %v1887
    %v2096 = vsel %vm2080, %v1950, %v1888
    %v2097 = vsel %vm2081, %v1952, %v1889
    %v2098 = vsel %vm2082, %v1954, %v1890
    %v2099 = vsub.f32 %v1891, %v2004
    %v2100 = vsub.f32 %v1892, %v2006
    %v2101 = vsub.f32 %v1893, %v2008
    %v2102 = vsub.f32 %v1894, %v2010
    %v2103 = vsub.f32 %v1895, %v2012
    %v2104 = vsub.f32 %v1896, %v2014
    %v2105 = vsub.f32 %v1897, %v2016
    %v2106 = vsub.f32 %v1898, %v2018
    %v2107 = vsub.f32 %v1899, %v2020
    %v2108 = vsub.f32 %v1900, %v2022
    %v2109 = vsub.f32 %v1901, %v2024
    %v2110 = vsub.f32 %v1902, %v2026
    %v2111 = vsub.f32 %v1903, %v2028
    %v2112 = vsub.f32 %v1904, %v2030
    %v2113 = vsub.f32 %v1905, %v2032
    %v2114 = vsub.f32 %v1906, %v2034
    %v2115 = vsel %vm1955, -1e+30, %v1907
    %v2116 = vsel %vm1956, -1e+30, %v1908
    %v2117 = vsel %vm1957, -1e+30, %v1909
    %v2118 = vsel %vm1958, -1e+30, %v1910
    %v2119 = vsel %vm1959, -1e+30, %v1911
    %v2120 = vsel %vm1960, -1e+30, %v1912
    %v2121 = vsel %vm1961, -1e+30, %v1913
    %v2122 = vsel %vm1962, -1e+30, %v1914
    %v2123 = vsel %vm1963, -1e+30, %v1915
    %v2124 = vsel %vm1964, -1e+30, %v1916
    %v2125 = vsel %vm1965, -1e+30, %v1917
    %v2126 = vsel %vm1966, -1e+30, %v1918
    %v2127 = vsel %vm1967, -1e+30, %v1919
    %v2128 = vsel %vm1968, -1e+30, %v1920
    %v2129 = vsel %vm1969, -1e+30, %v1921
    %v2130 = vsel %vm1970, -1e+30, %v1922
    %2131 = vmax.xlane.f32.xlu0 %v2115
    %v2132 = vpop.xlane.xlu0 %2131
    %2133 = vmax.xlane.f32.xlu0 %v2116
    %v2134 = vpop.xlane.xlu0 %2133
    %2135 = vmax.xlane.f32.xlu0 %v2117
    %v2136 = vpop.xlane.xlu0 %2135
    %2137 = vmax.xlane.f32.xlu0 %v2118
    %v2138 = vpop.xlane.xlu0 %2137
    %2139 = vmax.xlane.f32.xlu0 %v2119
    %v2140 = vpop.xlane.xlu0 %2139
    %2141 = vmax.xlane.f32.xlu0 %v2120
    %v2142 = vpop.xlane.xlu0 %2141
    %2143 = vmax.xlane.f32.xlu0 %v2121
    %v2144 = vpop.xlane.xlu0 %2143
    %2145 = vmax.xlane.f32.xlu0 %v2122
    %v2146 = vpop.xlane.xlu0 %2145
    %2147 = vmax.xlane.f32.xlu0 %v2123
    %v2148 = vpop.xlane.xlu0 %2147
    %2149 = vmax.xlane.f32.xlu0 %v2124
    %v2150 = vpop.xlane.xlu0 %2149
    %2151 = vmax.xlane.f32.xlu0 %v2125
    %v2152 = vpop.xlane.xlu0 %2151
    %2153 = vmax.xlane.f32.xlu0 %v2126
    %v2154 = vpop.xlane.xlu0 %2153
    %2155 = vmax.xlane.f32.xlu0 %v2127
    %v2156 = vpop.xlane.xlu0 %2155
    %2157 = vmax.xlane.f32.xlu0 %v2128
    %v2158 = vpop.xlane.xlu0 %2157
    %2159 = vmax.xlane.f32.xlu0 %v2129
    %v2160 = vpop.xlane.xlu0 %2159
    %2161 = vmax.xlane.f32.xlu0 %v2130
    %v2162 = vpop.xlane.xlu0 %2161
    %vm2163 = vcmp.eq.f32.partialorder %v2115, %v2132
    %vm2164 = vcmp.eq.f32.partialorder %v2116, %v2134
    %vm2165 = vcmp.eq.f32.partialorder %v2117, %v2136
    %vm2166 = vcmp.eq.f32.partialorder %v2118, %v2138
    %vm2167 = vcmp.eq.f32.partialorder %v2119, %v2140
    %vm2168 = vcmp.eq.f32.partialorder %v2120, %v2142
    %vm2169 = vcmp.eq.f32.partialorder %v2121, %v2144
    %vm2170 = vcmp.eq.f32.partialorder %v2122, %v2146
    %vm2171 = vcmp.eq.f32.partialorder %v2123, %v2148
    %vm2172 = vcmp.eq.f32.partialorder %v2124, %v2150
    %vm2173 = vcmp.eq.f32.partialorder %v2125, %v2152
    %vm2174 = vcmp.eq.f32.partialorder %v2126, %v2154
    %vm2175 = vcmp.eq.f32.partialorder %v2127, %v2156
    %vm2176 = vcmp.eq.f32.partialorder %v2128, %v2158
    %vm2177 = vcmp.eq.f32.partialorder %v2129, %v2160
    %vm2178 = vcmp.eq.f32.partialorder %v2130, %v2162
    %v2179 = vsel %vm2163, 1, 0
    %v2180 = vsel %vm2164, 1, 0
    %v2181 = vsel %vm2165, 1, 0
    %v2182 = vsel %vm2166, 1, 0
    %v2183 = vsel %vm2167, 1, 0
    %v2184 = vsel %vm2168, 1, 0
    %v2185 = vsel %vm2169, 1, 0
    %v2186 = vsel %vm2170, 1, 0
    %v2187 = vsel %vm2171, 1, 0
    %v2188 = vsel %vm2172, 1, 0
    %v2189 = vsel %vm2173, 1, 0
    %v2190 = vsel %vm2174, 1, 0
    %v2191 = vsel %vm2175, 1, 0
    %v2192 = vsel %vm2176, 1, 0
    %v2193 = vsel %vm2177, 1, 0
    %v2194 = vsel %vm2178, 1, 0
    %v2195 = vcvt.s32.f32 %v2179
    %v2196 = vcvt.s32.f32 %v2180
    %v2197 = vcvt.s32.f32 %v2181
    %v2198 = vcvt.s32.f32 %v2182
    %v2199 = vcvt.s32.f32 %v2183
    %v2200 = vcvt.s32.f32 %v2184
    %v2201 = vcvt.s32.f32 %v2185
    %v2202 = vcvt.s32.f32 %v2186
    %v2203 = vcvt.s32.f32 %v2187
    %v2204 = vcvt.s32.f32 %v2188
    %v2205 = vcvt.s32.f32 %v2189
    %v2206 = vcvt.s32.f32 %v2190
    %v2207 = vcvt.s32.f32 %v2191
    %v2208 = vcvt.s32.f32 %v2192
    %v2209 = vcvt.s32.f32 %v2193
    %v2210 = vcvt.s32.f32 %v2194
    %2211 = vadd.xlane.f32.xlu0 %v2195
    %v2212 = vpop.xlane.xlu0 %2211
    %2213 = vadd.xlane.f32.xlu0 %v2196
    %v2214 = vpop.xlane.xlu0 %2213
    %2215 = vadd.xlane.f32.xlu0 %v2197
    %v2216 = vpop.xlane.xlu0 %2215
    %2217 = vadd.xlane.f32.xlu0 %v2198
    %v2218 = vpop.xlane.xlu0 %2217
    %2219 = vadd.xlane.f32.xlu0 %v2199
    %v2220 = vpop.xlane.xlu0 %2219
    %2221 = vadd.xlane.f32.xlu0 %v2200
    %v2222 = vpop.xlane.xlu0 %2221
    %2223 = vadd.xlane.f32.xlu0 %v2201
    %v2224 = vpop.xlane.xlu0 %2223
    %2225 = vadd.xlane.f32.xlu0 %v2202
    %v2226 = vpop.xlane.xlu0 %2225
    %2227 = vadd.xlane.f32.xlu0 %v2203
    %v2228 = vpop.xlane.xlu0 %2227
    %2229 = vadd.xlane.f32.xlu0 %v2204
    %v2230 = vpop.xlane.xlu0 %2229
    %2231 = vadd.xlane.f32.xlu0 %v2205
    %v2232 = vpop.xlane.xlu0 %2231
    %2233 = vadd.xlane.f32.xlu0 %v2206
    %v2234 = vpop.xlane.xlu0 %2233
    %2235 = vadd.xlane.f32.xlu0 %v2207
    %v2236 = vpop.xlane.xlu0 %2235
    %2237 = vadd.xlane.f32.xlu0 %v2208
    %v2238 = vpop.xlane.xlu0 %2237
    %2239 = vadd.xlane.f32.xlu0 %v2209
    %v2240 = vpop.xlane.xlu0 %2239
    %2241 = vadd.xlane.f32.xlu0 %v2210
    %v2242 = vpop.xlane.xlu0 %2241
    %vm2243 = vcmp.gt.f32.partialorder %v2099, 0.0
    %vm2244 = vcmp.gt.f32.partialorder %v2100, 0.0
    %vm2245 = vcmp.gt.f32.partialorder %v2101, 0.0
    %vm2246 = vcmp.gt.f32.partialorder %v2102, 0.0
    %vm2247 = vcmp.gt.f32.partialorder %v2103, 0.0
    %vm2248 = vcmp.gt.f32.partialorder %v2104, 0.0
    %vm2249 = vcmp.gt.f32.partialorder %v2105, 0.0
    %vm2250 = vcmp.gt.f32.partialorder %v2106, 0.0
    %vm2251 = vcmp.gt.f32.partialorder %v2107, 0.0
    %vm2252 = vcmp.gt.f32.partialorder %v2108, 0.0
    %vm2253 = vcmp.gt.f32.partialorder %v2109, 0.0
    %vm2254 = vcmp.gt.f32.partialorder %v2110, 0.0
    %vm2255 = vcmp.gt.f32.partialorder %v2111, 0.0
    %vm2256 = vcmp.gt.f32.partialorder %v2112, 0.0
    %vm2257 = vcmp.gt.f32.partialorder %v2113, 0.0
    %vm2258 = vcmp.gt.f32.partialorder %v2114, 0.0
    %vm2259 = vcmp.ge.f32.partialorder %v2212, %v2099
    %vm2260 = vcmp.ge.f32.partialorder %v2214, %v2100
    %vm2261 = vcmp.ge.f32.partialorder %v2216, %v2101
    %vm2262 = vcmp.ge.f32.partialorder %v2218, %v2102
    %vm2263 = vcmp.ge.f32.partialorder %v2220, %v2103
    %vm2264 = vcmp.ge.f32.partialorder %v2222, %v2104
    %vm2265 = vcmp.ge.f32.partialorder %v2224, %v2105
    %vm2266 = vcmp.ge.f32.partialorder %v2226, %v2106
    %vm2267 = vcmp.ge.f32.partialorder %v2228, %v2107
    %vm2268 = vcmp.ge.f32.partialorder %v2230, %v2108
    %vm2269 = vcmp.ge.f32.partialorder %v2232, %v2109
    %vm2270 = vcmp.ge.f32.partialorder %v2234, %v2110
    %vm2271 = vcmp.ge.f32.partialorder %v2236, %v2111
    %vm2272 = vcmp.ge.f32.partialorder %v2238, %v2112
    %vm2273 = vcmp.ge.f32.partialorder %v2240, %v2113
    %vm2274 = vcmp.ge.f32.partialorder %v2242, %v2114
    %vm2275 = vmand %vm2243, %vm2259
    %vm2276 = vmand %vm2244, %vm2260
    %vm2277 = vmand %vm2245, %vm2261
    %vm2278 = vmand %vm2246, %vm2262
    %vm2279 = vmand %vm2247, %vm2263
    %vm2280 = vmand %vm2248, %vm2264
    %vm2281 = vmand %vm2249, %vm2265
    %vm2282 = vmand %vm2250, %vm2266
    %vm2283 = vmand %vm2251, %vm2267
    %vm2284 = vmand %vm2252, %vm2268
    %vm2285 = vmand %vm2253, %vm2269
    %vm2286 = vmand %vm2254, %vm2270
    %vm2287 = vmand %vm2255, %vm2271
    %vm2288 = vmand %vm2256, %vm2272
    %vm2289 = vmand %vm2257, %vm2273
    %vm2290 = vmand %vm2258, %vm2274
    %v2291 = vsel %vm2275, %v2132, %v2083
    %v2292 = vsel %vm2276, %v2134, %v2084
    %v2293 = vsel %vm2277, %v2136, %v2085
    %v2294 = vsel %vm2278, %v2138, %v2086
    %v2295 = vsel %vm2279, %v2140, %v2087
    %v2296 = vsel %vm2280, %v2142, %v2088
    %v2297 = vsel %vm2281, %v2144, %v2089
    %v2298 = vsel %vm2282, %v2146, %v2090
    %v2299 = vsel %vm2283, %v2148, %v2091
    %v2300 = vsel %vm2284, %v2150, %v2092
    %v2301 = vsel %vm2285, %v2152, %v2093
    %v2302 = vsel %vm2286, %v2154, %v2094
    %v2303 = vsel %vm2287, %v2156, %v2095
    %v2304 = vsel %vm2288, %v2158, %v2096
    %v2305 = vsel %vm2289, %v2160, %v2097
    %v2306 = vsel %vm2290, %v2162, %v2098
    %vm2307 = vcmp.gt.f32.partialorder %v1714, %v2291
    %vm2308 = vcmp.gt.f32.partialorder %v1715, %v2292
    %vm2309 = vcmp.gt.f32.partialorder %v1716, %v2293
    %vm2310 = vcmp.gt.f32.partialorder %v1717, %v2294
    %vm2311 = vcmp.gt.f32.partialorder %v1718, %v2295
    %vm2312 = vcmp.gt.f32.partialorder %v1719, %v2296
    %vm2313 = vcmp.gt.f32.partialorder %v1720, %v2297
    %vm2314 = vcmp.gt.f32.partialorder %v1721, %v2298
    %vm2315 = vcmp.gt.f32.partialorder %v1722, %v2299
    %vm2316 = vcmp.gt.f32.partialorder %v1723, %v2300
    %vm2317 = vcmp.gt.f32.partialorder %v1724, %v2301
    %vm2318 = vcmp.gt.f32.partialorder %v1725, %v2302
    %vm2319 = vcmp.gt.f32.partialorder %v1726, %v2303
    %vm2320 = vcmp.gt.f32.partialorder %v1727, %v2304
    %vm2321 = vcmp.gt.f32.partialorder %v1728, %v2305
    %vm2322 = vcmp.gt.f32.partialorder %v1729, %v2306
    %vm2323 = vmor %vm2307, %vm170
    %vm2324 = vmor %vm2308, %vm171
    %vm2325 = vmor %vm2309, %vm172
    %vm2326 = vmor %vm2310, %vm173
    %vm2327 = vmor %vm2311, %vm174
    %vm2328 = vmor %vm2312, %vm175
    %vm2329 = vmor %vm2313, %vm176
    %vm2330 = vmor %vm2314, %vm177
    %vm2331 = vmor %vm2315, %vm178
    %vm2332 = vmor %vm2316, %vm179
    %vm2333 = vmor %vm2317, %vm180
    %vm2334 = vmor %vm2318, %vm181
    %vm2335 = vmor %vm2319, %vm182
    %vm2336 = vmor %vm2320, %vm183
    %vm2337 = vmor %vm2321, %vm184
    %vm2338 = vmor %vm2322, %vm185
    %v2339 = vsel %vm2323, 1.0, 0.0
    %v2340 = vsel %vm2324, 1.0, 0.0
    %v2341 = vsel %vm2325, 1.0, 0.0
    %v2342 = vsel %vm2326, 1.0, 0.0
    %v2343 = vsel %vm2327, 1.0, 0.0
    %v2344 = vsel %vm2328, 1.0, 0.0
    %v2345 = vsel %vm2329, 1.0, 0.0
    %v2346 = vsel %vm2330, 1.0, 0.0
    %v2347 = vsel %vm2331, 1.0, 0.0
    %v2348 = vsel %vm2332, 1.0, 0.0
    %v2349 = vsel %vm2333, 1.0, 0.0
    %v2350 = vsel %vm2334, 1.0, 0.0
    %v2351 = vsel %vm2335, 1.0, 0.0
    %v2352 = vsel %vm2336, 1.0, 0.0
    %v2353 = vsel %vm2337, 1.0, 0.0
    %v2354 = vsel %vm2338, 1.0, 0.0
    %v2355 = vpack.c.bf16 %v2340, %v2339
    %v2356 = vpack.c.bf16 %v2342, %v2341
    %v2357 = vpack.c.bf16 %v2344, %v2343
    %v2358 = vpack.c.bf16 %v2346, %v2345
    %v2359 = vpack.c.bf16 %v2348, %v2347
    %v2360 = vpack.c.bf16 %v2350, %v2349
    %v2361 = vpack.c.bf16 %v2352, %v2351
    %v2362 = vpack.c.bf16 %v2354, %v2353
    %2363 = vmatprep.subr.bf16.mxu0 0
    %2364 = vmatpush1.bf16.xpose.msra.mxu0 %v2355
    %2365 = vmatprep.subr.bf16.mxu0 0
    %2366 = vmatpush1.bf16.xpose.msra.mxu0 %v2356
    %2367 = vmatprep.subr.bf16.mxu0 0
    %2368 = vmatpush1.bf16.xpose.msra.mxu0 %v2357
    %2369 = vmatprep.subr.bf16.mxu0 0
    %2370 = vmatpush1.bf16.xpose.msra.mxu0 %v2358
    %2371 = vmatprep.subr.bf16.mxu0 0
    %2372 = vmatpush1.bf16.xpose.msra.mxu0 %v2359
    %2373 = vmatprep.subr.bf16.mxu0 0
    %2374 = vmatpush1.bf16.xpose.msra.mxu0 %v2360
    %2375 = vmatprep.subr.bf16.mxu0 0
    %2376 = vmatpush1.bf16.xpose.msra.mxu0 %v2361
    %2377 = vmatprep.subr.bf16.mxu0 0
    %2378 = vmatpush1.bf16.xpose.msra.mxu0 %v2362
    %2379 = vmatprep.subr.bf16.mxu0 0
    %2380 = vmatpush1.bf16.xpose.msra.mxu0 0
    %2381 = vmatprep.subr.bf16.mxu0 0
    %2382 = vmatpush1.bf16.xpose.msra.mxu0 0
    %2383 = vmatprep.subr.bf16.mxu0 0
    %2384 = vmatpush1.bf16.xpose.msra.mxu0 0
    %2385 = vmatprep.subr.bf16.mxu0 0
    %2386 = vmatpush1.bf16.xpose.msra.mxu0 0
    %2387 = vmatprep.subr.bf16.mxu0 0
    %2388 = vmatpush1.bf16.xpose.msra.mxu0 0
    %2389 = vmatprep.subr.bf16.mxu0 0
    %2390 = vmatpush1.bf16.xpose.msra.mxu0 0
    %2391 = vmatprep.subr.bf16.mxu0 0
    %2392 = vmatpush1.bf16.xpose.msra.mxu0 0
    %2393 = vmatprep.subr.bf16.mxu0 0
    %2394 = vmatpush1.bf16.xpose.msra.mxu0 0
    %2395 = vmatprep.mubr.bf16.mxu0 0
    %2396 = vmatmul.mubr.bf16.gmra.mrb[0].mxu0 %v2355
    %v2397 = vpop.f32.mrb[0].mxu0
    %v2398 = vadd.f32 0.0, %v2397
    %v2399 = vpop.f32.mrb[0].mxu0
    %v2400 = vpop.f32.mrb[0].mxu0
    %v2401 = vadd.f32 0.0, %v2400
    %v2402 = vpop.f32.mrb[0].mxu0
    %2403 = vmatprep.mubr.bf16.mxu0 0
    %2404 = vmatmul.mubr.bf16.gmra.mrb[0].mxu0 %v2356
    %v2405 = vpop.f32.mrb[0].mxu0
    %v2406 = vadd.f32 0.0, %v2405
    %v2407 = vpop.f32.mrb[0].mxu0
    %v2408 = vpop.f32.mrb[0].mxu0
    %v2409 = vadd.f32 0.0, %v2408
    %v2410 = vpop.f32.mrb[0].mxu0
    %2411 = vmatprep.mubr.bf16.mxu0 0
    %2412 = vmatmul.mubr.bf16.gmra.mrb[0].mxu0 %v2357
    %v2413 = vpop.f32.mrb[0].mxu0
    %v2414 = vadd.f32 0.0, %v2413
    %v2415 = vpop.f32.mrb[0].mxu0
    %v2416 = vpop.f32.mrb[0].mxu0
    %v2417 = vadd.f32 0.0, %v2416
    %v2418 = vpop.f32.mrb[0].mxu0
    %2419 = vmatprep.mubr.bf16.mxu0 0
    %2420 = vmatmul.mubr.bf16.gmra.mrb[0].mxu0 %v2358
    %v2421 = vpop.f32.mrb[0].mxu0
    %v2422 = vadd.f32 0.0, %v2421
    %v2423 = vpop.f32.mrb[0].mxu0
    %v2424 = vpop.f32.mrb[0].mxu0
    %v2425 = vadd.f32 0.0, %v2424
    %v2426 = vpop.f32.mrb[0].mxu0
    %2427 = vmatprep.mubr.bf16.mxu0 0
    %2428 = vmatmul.mubr.bf16.gmra.mrb[0].mxu0 %v2359
    %v2429 = vpop.f32.mrb[0].mxu0
    %v2430 = vadd.f32 0.0, %v2429
    %v2431 = vpop.f32.mrb[0].mxu0
    %v2432 = vpop.f32.mrb[0].mxu0
    %v2433 = vadd.f32 0.0, %v2432
    %v2434 = vpop.f32.mrb[0].mxu0
    %2435 = vmatprep.mubr.bf16.mxu0 0
    %2436 = vmatmul.mubr.bf16.gmra.mrb[0].mxu0 %v2360
    %v2437 = vpop.f32.mrb[0].mxu0
    %v2438 = vadd.f32 0.0, %v2437
    %v2439 = vpop.f32.mrb[0].mxu0
    %v2440 = vpop.f32.mrb[0].mxu0
    %v2441 = vadd.f32 0.0, %v2440
    %v2442 = vpop.f32.mrb[0].mxu0
    %2443 = vmatprep.mubr.bf16.mxu0 0
    %2444 = vmatmul.mubr.bf16.gmra.mrb[0].mxu0 %v2361
    %v2445 = vpop.f32.mrb[0].mxu0
    %v2446 = vadd.f32 0.0, %v2445
    %v2447 = vpop.f32.mrb[0].mxu0
    %v2448 = vpop.f32.mrb[0].mxu0
    %v2449 = vadd.f32 0.0, %v2448
    %v2450 = vpop.f32.mrb[0].mxu0
    %2451 = vmatprep.mubr.bf16.mxu0 0
    %2452 = vmatmul.mubr.bf16.gmra.mrb[0].mxu0 %v2362
    %v2453 = vpop.f32.mrb[0].mxu0
    %v2454 = vadd.f32 0.0, %v2453
    %v2455 = vpop.f32.mrb[0].mxu0
    %v2456 = vpop.f32.mrb[0].mxu0
    %v2457 = vadd.f32 0.0, %v2456
    %v2458 = vpop.f32.mrb[0].mxu0
    %2459 = vdwg.mxu0
    %v2460 = vmul.f32 %v2398, 0.33333334
    %v2461 = vmul.f32 %v2401, 0.33333334
    %v2462 = vmul.f32 %v2406, 0.33333334
    %v2463 = vmul.f32 %v2409, 0.33333334
    %v2464 = vmul.f32 %v2414, 0.33333334
    %v2465 = vmul.f32 %v2417, 0.33333334
    %v2466 = vmul.f32 %v2422, 0.33333334
    %v2467 = vmul.f32 %v2425, 0.33333334
    %v2468 = vmul.f32 %v2430, 0.33333334
    %v2469 = vmul.f32 %v2433, 0.33333334
    %v2470 = vmul.f32 %v2438, 0.33333334
    %v2471 = vmul.f32 %v2441, 0.33333334
    %v2472 = vmul.f32 %v2446, 0.33333334
    %v2473 = vmul.f32 %v2449, 0.33333334
    %v2474 = vmul.f32 %v2454, 0.33333334
    %v2475 = vmul.f32 %v2457, 0.33333334
    %v2476 = vstv %s84
    %vm2477 = vcmp.gt.f32.partialorder %v2460, %v2476
    %vm2478 = vcmp.gt.f32.partialorder %v2461, %v2476
    %vm2479 = vcmp.gt.f32.partialorder %v2462, %v2476
    %vm2480 = vcmp.gt.f32.partialorder %v2463, %v2476
    %vm2481 = vcmp.gt.f32.partialorder %v2464, %v2476
    %vm2482 = vcmp.gt.f32.partialorder %v2465, %v2476
    %vm2483 = vcmp.gt.f32.partialorder %v2466, %v2476
    %vm2484 = vcmp.gt.f32.partialorder %v2467, %v2476
    %vm2485 = vcmp.gt.f32.partialorder %v2468, %v2476
    %vm2486 = vcmp.gt.f32.partialorder %v2469, %v2476
    %vm2487 = vcmp.gt.f32.partialorder %v2470, %v2476
    %vm2488 = vcmp.gt.f32.partialorder %v2471, %v2476
    %vm2489 = vcmp.gt.f32.partialorder %v2472, %v2476
    %vm2490 = vcmp.gt.f32.partialorder %v2473, %v2476
    %vm2491 = vcmp.gt.f32.partialorder %v2474, %v2476
    %vm2492 = vcmp.gt.f32.partialorder %v2475, %v2476
    %v2493 = vsel %vm2477, 1.0, 0.0
    %v2494 = vsel %vm2478, 1.0, 0.0
    %v2495 = vsel %vm2479, 1.0, 0.0
    %v2496 = vsel %vm2480, 1.0, 0.0
    %v2497 = vsel %vm2481, 1.0, 0.0
    %v2498 = vsel %vm2482, 1.0, 0.0
    %v2499 = vsel %vm2483, 1.0, 0.0
    %v2500 = vsel %vm2484, 1.0, 0.0
    %v2501 = vsel %vm2485, 1.0, 0.0
    %v2502 = vsel %vm2486, 1.0, 0.0
    %v2503 = vsel %vm2487, 1.0, 0.0
    %v2504 = vsel %vm2488, 1.0, 0.0
    %v2505 = vsel %vm2489, 1.0, 0.0
    %v2506 = vsel %vm2490, 1.0, 0.0
    %v2507 = vsel %vm2491, 1.0, 0.0
    %v2508 = vsel %vm2492, 1.0, 0.0
    %v2509 = vadd.f32 %v2460, 1.1754944e-38
    %v2510 = vadd.f32 %v2461, 1.1754944e-38
    %v2511 = vadd.f32 %v2462, 1.1754944e-38
    %v2512 = vadd.f32 %v2463, 1.1754944e-38
    %v2513 = vadd.f32 %v2464, 1.1754944e-38
    %v2514 = vadd.f32 %v2465, 1.1754944e-38
    %v2515 = vadd.f32 %v2466, 1.1754944e-38
    %v2516 = vadd.f32 %v2467, 1.1754944e-38
    %v2517 = vadd.f32 %v2468, 1.1754944e-38
    %v2518 = vadd.f32 %v2469, 1.1754944e-38
    %v2519 = vadd.f32 %v2470, 1.1754944e-38
    %v2520 = vadd.f32 %v2471, 1.1754944e-38
    %v2521 = vadd.f32 %v2472, 1.1754944e-38
    %v2522 = vadd.f32 %v2473, 1.1754944e-38
    %v2523 = vadd.f32 %v2474, 1.1754944e-38
    %v2524 = vadd.f32 %v2475, 1.1754944e-38
    %v2525 = vld [vmem:[#allocation10] sm:$0xff]
    %v2526 = vld [vmem:[#allocation10 + $0x8] sm:$0xff]
    %v2527 = vld [vmem:[#allocation10 + $0x10] sm:$0xff]
    %v2528 = vld [vmem:[#allocation10 + $0x18] sm:$0xff]
    %v2529 = vld [vmem:[#allocation10 + $0x20] sm:$0xff]
    %v2530 = vld [vmem:[#allocation10 + $0x28] sm:$0xff]
    %v2531 = vld [vmem:[#allocation10 + $0x30] sm:$0xff]
    %v2532 = vld [vmem:[#allocation10 + $0x38] sm:$0xff]
    %v2533 = vld [vmem:[#allocation10 + $0x40] sm:$0xff]
    %v2534 = vld [vmem:[#allocation10 + $0x48] sm:$0xff]
    %v2535 = vld [vmem:[#allocation10 + $0x50] sm:$0xff]
    %v2536 = vld [vmem:[#allocation10 + $0x58] sm:$0xff]
    %v2537 = vld [vmem:[#allocation10 + $0x60] sm:$0xff]
    %v2538 = vld [vmem:[#allocation10 + $0x68] sm:$0xff]
    %v2539 = vld [vmem:[#allocation10 + $0x70] sm:$0xff]
    %v2540 = vld [vmem:[#allocation10 + $0x78] sm:$0xff]
    %v2541 = vsel %vm105, 0.0, %v2525
    %v2542 = vsel %vm106, 0.0, %v2526
    %v2543 = vsel %vm107, 0.0, %v2527
    %v2544 = vsel %vm108, 0.0, %v2528
    %v2545 = vsel %vm109, 0.0, %v2529
    %v2546 = vsel %vm110, 0.0, %v2530
    %v2547 = vsel %vm111, 0.0, %v2531
    %v2548 = vsel %vm112, 0.0, %v2532
    %v2549 = vsel %vm113, 0.0, %v2533
    %v2550 = vsel %vm114, 0.0, %v2534
    %v2551 = vsel %vm115, 0.0, %v2535
    %v2552 = vsel %vm116, 0.0, %v2536
    %v2553 = vsel %vm117, 0.0, %v2537
    %v2554 = vsel %vm118, 0.0, %v2538
    %v2555 = vsel %vm119, 0.0, %v2539
    %v2556 = vsel %vm120, 0.0, %v2540
    %v2557 = vsel %vm1713, %v2541, -1e+30
    %v2558 = vsel %vm1713, %v2542, -1e+30
    %v2559 = vsel %vm1713, %v2543, -1e+30
    %v2560 = vsel %vm1713, %v2544, -1e+30
    %v2561 = vsel %vm1713, %v2545, -1e+30
    %v2562 = vsel %vm1713, %v2546, -1e+30
    %v2563 = vsel %vm1713, %v2547, -1e+30
    %v2564 = vsel %vm1713, %v2548, -1e+30
    %v2565 = vsel %vm1713, %v2549, -1e+30
    %v2566 = vsel %vm1713, %v2550, -1e+30
    %v2567 = vsel %vm1713, %v2551, -1e+30
    %v2568 = vsel %vm1713, %v2552, -1e+30
    %v2569 = vsel %vm1713, %v2553, -1e+30
    %v2570 = vsel %vm1713, %v2554, -1e+30
    %v2571 = vsel %vm1713, %v2555, -1e+30
    %v2572 = vsel %vm1713, %v2556, -1e+30
    %2573 = vmax.xlane.f32.xlu0 %v2557
    %v2574 = vpop.xlane.xlu0 %2573
    %2575 = vmax.xlane.f32.xlu0 %v2558
    %v2576 = vpop.xlane.xlu0 %2575
    %2577 = vmax.xlane.f32.xlu0 %v2559
    %v2578 = vpop.xlane.xlu0 %2577
    %2579 = vmax.xlane.f32.xlu0 %v2560
    %v2580 = vpop.xlane.xlu0 %2579
    %2581 = vmax.xlane.f32.xlu0 %v2561
    %v2582 = vpop.xlane.xlu0 %2581
    %2583 = vmax.xlane.f32.xlu0 %v2562
    %v2584 = vpop.xlane.xlu0 %2583
    %2585 = vmax.xlane.f32.xlu0 %v2563
    %v2586 = vpop.xlane.xlu0 %2585
    %2587 = vmax.xlane.f32.xlu0 %v2564
    %v2588 = vpop.xlane.xlu0 %2587
    %2589 = vmax.xlane.f32.xlu0 %v2565
    %v2590 = vpop.xlane.xlu0 %2589
    %2591 = vmax.xlane.f32.xlu0 %v2566
    %v2592 = vpop.xlane.xlu0 %2591
    %2593 = vmax.xlane.f32.xlu0 %v2567
    %v2594 = vpop.xlane.xlu0 %2593
    %2595 = vmax.xlane.f32.xlu0 %v2568
    %v2596 = vpop.xlane.xlu0 %2595
    %2597 = vmax.xlane.f32.xlu0 %v2569
    %v2598 = vpop.xlane.xlu0 %2597
    %2599 = vmax.xlane.f32.xlu0 %v2570
    %v2600 = vpop.xlane.xlu0 %2599
    %2601 = vmax.xlane.f32.xlu0 %v2571
    %v2602 = vpop.xlane.xlu0 %2601
    %2603 = vmax.xlane.f32.xlu0 %v2572
    %v2604 = vpop.xlane.xlu0 %2603
    %vm2605 = vcmp.eq.f32.partialorder %v2557, %v2574
    %vm2606 = vcmp.eq.f32.partialorder %v2558, %v2576
    %vm2607 = vcmp.eq.f32.partialorder %v2559, %v2578
    %vm2608 = vcmp.eq.f32.partialorder %v2560, %v2580
    %vm2609 = vcmp.eq.f32.partialorder %v2561, %v2582
    %vm2610 = vcmp.eq.f32.partialorder %v2562, %v2584
    %vm2611 = vcmp.eq.f32.partialorder %v2563, %v2586
    %vm2612 = vcmp.eq.f32.partialorder %v2564, %v2588
    %vm2613 = vcmp.eq.f32.partialorder %v2565, %v2590
    %vm2614 = vcmp.eq.f32.partialorder %v2566, %v2592
    %vm2615 = vcmp.eq.f32.partialorder %v2567, %v2594
    %vm2616 = vcmp.eq.f32.partialorder %v2568, %v2596
    %vm2617 = vcmp.eq.f32.partialorder %v2569, %v2598
    %vm2618 = vcmp.eq.f32.partialorder %v2570, %v2600
    %vm2619 = vcmp.eq.f32.partialorder %v2571, %v2602
    %vm2620 = vcmp.eq.f32.partialorder %v2572, %v2604
    %v2621 = vsel %vm2605, 1, 0
    %v2622 = vsel %vm2606, 1, 0
    %v2623 = vsel %vm2607, 1, 0
    %v2624 = vsel %vm2608, 1, 0
    %v2625 = vsel %vm2609, 1, 0
    %v2626 = vsel %vm2610, 1, 0
    %v2627 = vsel %vm2611, 1, 0
    %v2628 = vsel %vm2612, 1, 0
    %v2629 = vsel %vm2613, 1, 0
    %v2630 = vsel %vm2614, 1, 0
    %v2631 = vsel %vm2615, 1, 0
    %v2632 = vsel %vm2616, 1, 0
    %v2633 = vsel %vm2617, 1, 0
    %v2634 = vsel %vm2618, 1, 0
    %v2635 = vsel %vm2619, 1, 0
    %v2636 = vsel %vm2620, 1, 0
    %v2637 = vcvt.s32.f32 %v2621
    %v2638 = vcvt.s32.f32 %v2622
    %v2639 = vcvt.s32.f32 %v2623
    %v2640 = vcvt.s32.f32 %v2624
    %v2641 = vcvt.s32.f32 %v2625
    %v2642 = vcvt.s32.f32 %v2626
    %v2643 = vcvt.s32.f32 %v2627
    %v2644 = vcvt.s32.f32 %v2628
    %v2645 = vcvt.s32.f32 %v2629
    %v2646 = vcvt.s32.f32 %v2630
    %v2647 = vcvt.s32.f32 %v2631
    %v2648 = vcvt.s32.f32 %v2632
    %v2649 = vcvt.s32.f32 %v2633
    %v2650 = vcvt.s32.f32 %v2634
    %v2651 = vcvt.s32.f32 %v2635
    %v2652 = vcvt.s32.f32 %v2636
    %2653 = vadd.xlane.f32.xlu0 %v2637
    %v2654 = vpop.xlane.xlu0 %2653
    %2655 = vadd.xlane.f32.xlu0 %v2638
    %v2656 = vpop.xlane.xlu0 %2655
    %2657 = vadd.xlane.f32.xlu0 %v2639
    %v2658 = vpop.xlane.xlu0 %2657
    %2659 = vadd.xlane.f32.xlu0 %v2640
    %v2660 = vpop.xlane.xlu0 %2659
    %2661 = vadd.xlane.f32.xlu0 %v2641
    %v2662 = vpop.xlane.xlu0 %2661
    %2663 = vadd.xlane.f32.xlu0 %v2642
    %v2664 = vpop.xlane.xlu0 %2663
    %2665 = vadd.xlane.f32.xlu0 %v2643
    %v2666 = vpop.xlane.xlu0 %2665
    %2667 = vadd.xlane.f32.xlu0 %v2644
    %v2668 = vpop.xlane.xlu0 %2667
    %2669 = vadd.xlane.f32.xlu0 %v2645
    %v2670 = vpop.xlane.xlu0 %2669
    %2671 = vadd.xlane.f32.xlu0 %v2646
    %v2672 = vpop.xlane.xlu0 %2671
    %2673 = vadd.xlane.f32.xlu0 %v2647
    %v2674 = vpop.xlane.xlu0 %2673
    %2675 = vadd.xlane.f32.xlu0 %v2648
    %v2676 = vpop.xlane.xlu0 %2675
    %2677 = vadd.xlane.f32.xlu0 %v2649
    %v2678 = vpop.xlane.xlu0 %2677
    %2679 = vadd.xlane.f32.xlu0 %v2650
    %v2680 = vpop.xlane.xlu0 %2679
    %2681 = vadd.xlane.f32.xlu0 %v2651
    %v2682 = vpop.xlane.xlu0 %2681
    %2683 = vadd.xlane.f32.xlu0 %v2652
    %v2684 = vpop.xlane.xlu0 %2683
    %vm2685 = vcmp.ge.f32.partialorder %v2654, 3.0
    %vm2686 = vcmp.ge.f32.partialorder %v2656, 3.0
    %vm2687 = vcmp.ge.f32.partialorder %v2658, 3.0
    %vm2688 = vcmp.ge.f32.partialorder %v2660, 3.0
    %vm2689 = vcmp.ge.f32.partialorder %v2662, 3.0
    %vm2690 = vcmp.ge.f32.partialorder %v2664, 3.0
    %vm2691 = vcmp.ge.f32.partialorder %v2666, 3.0
    %vm2692 = vcmp.ge.f32.partialorder %v2668, 3.0
    %vm2693 = vcmp.ge.f32.partialorder %v2670, 3.0
    %vm2694 = vcmp.ge.f32.partialorder %v2672, 3.0
    %vm2695 = vcmp.ge.f32.partialorder %v2674, 3.0
    %vm2696 = vcmp.ge.f32.partialorder %v2676, 3.0
    %vm2697 = vcmp.ge.f32.partialorder %v2678, 3.0
    %vm2698 = vcmp.ge.f32.partialorder %v2680, 3.0
    %vm2699 = vcmp.ge.f32.partialorder %v2682, 3.0
    %vm2700 = vcmp.ge.f32.partialorder %v2684, 3.0
    %vm2701 = vmand %vm1842, %vm2685
    %vm2702 = vmand %vm1842, %vm2686
    %vm2703 = vmand %vm1842, %vm2687
    %vm2704 = vmand %vm1842, %vm2688
    %vm2705 = vmand %vm1842, %vm2689
    %vm2706 = vmand %vm1842, %vm2690
    %vm2707 = vmand %vm1842, %vm2691
    %vm2708 = vmand %vm1842, %vm2692
    %vm2709 = vmand %vm1842, %vm2693
    %vm2710 = vmand %vm1842, %vm2694
    %vm2711 = vmand %vm1842, %vm2695
    %vm2712 = vmand %vm1842, %vm2696
    %vm2713 = vmand %vm1842, %vm2697
    %vm2714 = vmand %vm1842, %vm2698
    %vm2715 = vmand %vm1842, %vm2699
    %vm2716 = vmand %vm1842, %vm2700
    %v2717 = vsel %vm2701, %v2574, -1e+30
    %v2718 = vsel %vm2702, %v2576, -1e+30
    %v2719 = vsel %vm2703, %v2578, -1e+30
    %v2720 = vsel %vm2704, %v2580, -1e+30
    %v2721 = vsel %vm2705, %v2582, -1e+30
    %v2722 = vsel %vm2706, %v2584, -1e+30
    %v2723 = vsel %vm2707, %v2586, -1e+30
    %v2724 = vsel %vm2708, %v2588, -1e+30
    %v2725 = vsel %vm2709, %v2590, -1e+30
    %v2726 = vsel %vm2710, %v2592, -1e+30
    %v2727 = vsel %vm2711, %v2594, -1e+30
    %v2728 = vsel %vm2712, %v2596, -1e+30
    %v2729 = vsel %vm2713, %v2598, -1e+30
    %v2730 = vsel %vm2714, %v2600, -1e+30
    %v2731 = vsel %vm2715, %v2602, -1e+30
    %v2732 = vsel %vm2716, %v2604, -1e+30
    %v2733 = vsub.f32 3.0, %v2654
    %v2734 = vsub.f32 3.0, %v2656
    %v2735 = vsub.f32 3.0, %v2658
    %v2736 = vsub.f32 3.0, %v2660
    %v2737 = vsub.f32 3.0, %v2662
    %v2738 = vsub.f32 3.0, %v2664
    %v2739 = vsub.f32 3.0, %v2666
    %v2740 = vsub.f32 3.0, %v2668
    %v2741 = vsub.f32 3.0, %v2670
    %v2742 = vsub.f32 3.0, %v2672
    %v2743 = vsub.f32 3.0, %v2674
    %v2744 = vsub.f32 3.0, %v2676
    %v2745 = vsub.f32 3.0, %v2678
    %v2746 = vsub.f32 3.0, %v2680
    %v2747 = vsub.f32 3.0, %v2682
    %v2748 = vsub.f32 3.0, %v2684
    %v2749 = vsel %vm2605, -1e+30, %v2557
    %v2750 = vsel %vm2606, -1e+30, %v2558
    %v2751 = vsel %vm2607, -1e+30, %v2559
    %v2752 = vsel %vm2608, -1e+30, %v2560
    %v2753 = vsel %vm2609, -1e+30, %v2561
    %v2754 = vsel %vm2610, -1e+30, %v2562
    %v2755 = vsel %vm2611, -1e+30, %v2563
    %v2756 = vsel %vm2612, -1e+30, %v2564
    %v2757 = vsel %vm2613, -1e+30, %v2565
    %v2758 = vsel %vm2614, -1e+30, %v2566
    %v2759 = vsel %vm2615, -1e+30, %v2567
    %v2760 = vsel %vm2616, -1e+30, %v2568
    %v2761 = vsel %vm2617, -1e+30, %v2569
    %v2762 = vsel %vm2618, -1e+30, %v2570
    %v2763 = vsel %vm2619, -1e+30, %v2571
    %v2764 = vsel %vm2620, -1e+30, %v2572
    %2765 = vmax.xlane.f32.xlu0 %v2749
    %v2766 = vpop.xlane.xlu0 %2765
    %2767 = vmax.xlane.f32.xlu0 %v2750
    %v2768 = vpop.xlane.xlu0 %2767
    %2769 = vmax.xlane.f32.xlu0 %v2751
    %v2770 = vpop.xlane.xlu0 %2769
    %2771 = vmax.xlane.f32.xlu0 %v2752
    %v2772 = vpop.xlane.xlu0 %2771
    %2773 = vmax.xlane.f32.xlu0 %v2753
    %v2774 = vpop.xlane.xlu0 %2773
    %2775 = vmax.xlane.f32.xlu0 %v2754
    %v2776 = vpop.xlane.xlu0 %2775
    %2777 = vmax.xlane.f32.xlu0 %v2755
    %v2778 = vpop.xlane.xlu0 %2777
    %2779 = vmax.xlane.f32.xlu0 %v2756
    %v2780 = vpop.xlane.xlu0 %2779
    %2781 = vmax.xlane.f32.xlu0 %v2757
    %v2782 = vpop.xlane.xlu0 %2781
    %2783 = vmax.xlane.f32.xlu0 %v2758
    %v2784 = vpop.xlane.xlu0 %2783
    %2785 = vmax.xlane.f32.xlu0 %v2759
    %v2786 = vpop.xlane.xlu0 %2785
    %2787 = vmax.xlane.f32.xlu0 %v2760
    %v2788 = vpop.xlane.xlu0 %2787
    %2789 = vmax.xlane.f32.xlu0 %v2761
    %v2790 = vpop.xlane.xlu0 %2789
    %2791 = vmax.xlane.f32.xlu0 %v2762
    %v2792 = vpop.xlane.xlu0 %2791
    %2793 = vmax.xlane.f32.xlu0 %v2763
    %v2794 = vpop.xlane.xlu0 %2793
    %2795 = vmax.xlane.f32.xlu0 %v2764
    %v2796 = vpop.xlane.xlu0 %2795
    %vm2797 = vcmp.eq.f32.partialorder %v2749, %v2766
    %vm2798 = vcmp.eq.f32.partialorder %v2750, %v2768
    %vm2799 = vcmp.eq.f32.partialorder %v2751, %v2770
    %vm2800 = vcmp.eq.f32.partialorder %v2752, %v2772
    %vm2801 = vcmp.eq.f32.partialorder %v2753, %v2774
    %vm2802 = vcmp.eq.f32.partialorder %v2754, %v2776
    %vm2803 = vcmp.eq.f32.partialorder %v2755, %v2778
    %vm2804 = vcmp.eq.f32.partialorder %v2756, %v2780
    %vm2805 = vcmp.eq.f32.partialorder %v2757, %v2782
    %vm2806 = vcmp.eq.f32.partialorder %v2758, %v2784
    %vm2807 = vcmp.eq.f32.partialorder %v2759, %v2786
    %vm2808 = vcmp.eq.f32.partialorder %v2760, %v2788
    %vm2809 = vcmp.eq.f32.partialorder %v2761, %v2790
    %vm2810 = vcmp.eq.f32.partialorder %v2762, %v2792
    %vm2811 = vcmp.eq.f32.partialorder %v2763, %v2794
    %vm2812 = vcmp.eq.f32.partialorder %v2764, %v2796
    %v2813 = vsel %vm2797, 1, 0
    %v2814 = vsel %vm2798, 1, 0
    %v2815 = vsel %vm2799, 1, 0
    %v2816 = vsel %vm2800, 1, 0
    %v2817 = vsel %vm2801, 1, 0
    %v2818 = vsel %vm2802, 1, 0
    %v2819 = vsel %vm2803, 1, 0
    %v2820 = vsel %vm2804, 1, 0
    %v2821 = vsel %vm2805, 1, 0
    %v2822 = vsel %vm2806, 1, 0
    %v2823 = vsel %vm2807, 1, 0
    %v2824 = vsel %vm2808, 1, 0
    %v2825 = vsel %vm2809, 1, 0
    %v2826 = vsel %vm2810, 1, 0
    %v2827 = vsel %vm2811, 1, 0
    %v2828 = vsel %vm2812, 1, 0
    %v2829 = vcvt.s32.f32 %v2813
    %v2830 = vcvt.s32.f32 %v2814
    %v2831 = vcvt.s32.f32 %v2815
    %v2832 = vcvt.s32.f32 %v2816
    %v2833 = vcvt.s32.f32 %v2817
    %v2834 = vcvt.s32.f32 %v2818
    %v2835 = vcvt.s32.f32 %v2819
    %v2836 = vcvt.s32.f32 %v2820
    %v2837 = vcvt.s32.f32 %v2821
    %v2838 = vcvt.s32.f32 %v2822
    %v2839 = vcvt.s32.f32 %v2823
    %v2840 = vcvt.s32.f32 %v2824
    %v2841 = vcvt.s32.f32 %v2825
    %v2842 = vcvt.s32.f32 %v2826
    %v2843 = vcvt.s32.f32 %v2827
    %v2844 = vcvt.s32.f32 %v2828
    %2845 = vadd.xlane.f32.xlu0 %v2829
    %v2846 = vpop.xlane.xlu0 %2845
    %2847 = vadd.xlane.f32.xlu0 %v2830
    %v2848 = vpop.xlane.xlu0 %2847
    %2849 = vadd.xlane.f32.xlu0 %v2831
    %v2850 = vpop.xlane.xlu0 %2849
    %2851 = vadd.xlane.f32.xlu0 %v2832
    %v2852 = vpop.xlane.xlu0 %2851
    %2853 = vadd.xlane.f32.xlu0 %v2833
    %v2854 = vpop.xlane.xlu0 %2853
    %2855 = vadd.xlane.f32.xlu0 %v2834
    %v2856 = vpop.xlane.xlu0 %2855
    %2857 = vadd.xlane.f32.xlu0 %v2835
    %v2858 = vpop.xlane.xlu0 %2857
    %2859 = vadd.xlane.f32.xlu0 %v2836
    %v2860 = vpop.xlane.xlu0 %2859
    %2861 = vadd.xlane.f32.xlu0 %v2837
    %v2862 = vpop.xlane.xlu0 %2861
    %2863 = vadd.xlane.f32.xlu0 %v2838
    %v2864 = vpop.xlane.xlu0 %2863
    %2865 = vadd.xlane.f32.xlu0 %v2839
    %v2866 = vpop.xlane.xlu0 %2865
    %2867 = vadd.xlane.f32.xlu0 %v2840
    %v2868 = vpop.xlane.xlu0 %2867
    %2869 = vadd.xlane.f32.xlu0 %v2841
    %v2870 = vpop.xlane.xlu0 %2869
    %2871 = vadd.xlane.f32.xlu0 %v2842
    %v2872 = vpop.xlane.xlu0 %2871
    %2873 = vadd.xlane.f32.xlu0 %v2843
    %v2874 = vpop.xlane.xlu0 %2873
    %2875 = vadd.xlane.f32.xlu0 %v2844
    %v2876 = vpop.xlane.xlu0 %2875
    %vm2877 = vcmp.gt.f32.partialorder %v2733, 0.0
    %vm2878 = vcmp.gt.f32.partialorder %v2734, 0.0
    %vm2879 = vcmp.gt.f32.partialorder %v2735, 0.0
    %vm2880 = vcmp.gt.f32.partialorder %v2736, 0.0
    %vm2881 = vcmp.gt.f32.partialorder %v2737, 0.0
    %vm2882 = vcmp.gt.f32.partialorder %v2738, 0.0
    %vm2883 = vcmp.gt.f32.partialorder %v2739, 0.0
    %vm2884 = vcmp.gt.f32.partialorder %v2740, 0.0
    %vm2885 = vcmp.gt.f32.partialorder %v2741, 0.0
    %vm2886 = vcmp.gt.f32.partialorder %v2742, 0.0
    %vm2887 = vcmp.gt.f32.partialorder %v2743, 0.0
    %vm2888 = vcmp.gt.f32.partialorder %v2744, 0.0
    %vm2889 = vcmp.gt.f32.partialorder %v2745, 0.0
    %vm2890 = vcmp.gt.f32.partialorder %v2746, 0.0
    %vm2891 = vcmp.gt.f32.partialorder %v2747, 0.0
    %vm2892 = vcmp.gt.f32.partialorder %v2748, 0.0
    %vm2893 = vcmp.ge.f32.partialorder %v2846, %v2733
    %vm2894 = vcmp.ge.f32.partialorder %v2848, %v2734
    %vm2895 = vcmp.ge.f32.partialorder %v2850, %v2735
    %vm2896 = vcmp.ge.f32.partialorder %v2852, %v2736
    %vm2897 = vcmp.ge.f32.partialorder %v2854, %v2737
    %vm2898 = vcmp.ge.f32.partialorder %v2856, %v2738
    %vm2899 = vcmp.ge.f32.partialorder %v2858, %v2739
    %vm2900 = vcmp.ge.f32.partialorder %v2860, %v2740
    %vm2901 = vcmp.ge.f32.partialorder %v2862, %v2741
    %vm2902 = vcmp.ge.f32.partialorder %v2864, %v2742
    %vm2903 = vcmp.ge.f32.partialorder %v2866, %v2743
    %vm2904 = vcmp.ge.f32.partialorder %v2868, %v2744
    %vm2905 = vcmp.ge.f32.partialorder %v2870, %v2745
    %vm2906 = vcmp.ge.f32.partialorder %v2872, %v2746
    %vm2907 = vcmp.ge.f32.partialorder %v2874, %v2747
    %vm2908 = vcmp.ge.f32.partialorder %v2876, %v2748
    %vm2909 = vmand %vm2877, %vm2893
    %vm2910 = vmand %vm2878, %vm2894
    %vm2911 = vmand %vm2879, %vm2895
    %vm2912 = vmand %vm2880, %vm2896
    %vm2913 = vmand %vm2881, %vm2897
    %vm2914 = vmand %vm2882, %vm2898
    %vm2915 = vmand %vm2883, %vm2899
    %vm2916 = vmand %vm2884, %vm2900
    %vm2917 = vmand %vm2885, %vm2901
    %vm2918 = vmand %vm2886, %vm2902
    %vm2919 = vmand %vm2887, %vm2903
    %vm2920 = vmand %vm2888, %vm2904
    %vm2921 = vmand %vm2889, %vm2905
    %vm2922 = vmand %vm2890, %vm2906
    %vm2923 = vmand %vm2891, %vm2907
    %vm2924 = vmand %vm2892, %vm2908
    %v2925 = vsel %vm2909, %v2766, %v2717
    %v2926 = vsel %vm2910, %v2768, %v2718
    %v2927 = vsel %vm2911, %v2770, %v2719
    %v2928 = vsel %vm2912, %v2772, %v2720
    %v2929 = vsel %vm2913, %v2774, %v2721
    %v2930 = vsel %vm2914, %v2776, %v2722
    %v2931 = vsel %vm2915, %v2778, %v2723
    %v2932 = vsel %vm2916, %v2780, %v2724
    %v2933 = vsel %vm2917, %v2782, %v2725
    %v2934 = vsel %vm2918, %v2784, %v2726
    %v2935 = vsel %vm2919, %v2786, %v2727
    %v2936 = vsel %vm2920, %v2788, %v2728
    %v2937 = vsel %vm2921, %v2790, %v2729
    %v2938 = vsel %vm2922, %v2792, %v2730
    %v2939 = vsel %vm2923, %v2794, %v2731
    %v2940 = vsel %vm2924, %v2796, %v2732
    %v2941 = vsub.f32 %v2733, %v2846
    %v2942 = vsub.f32 %v2734, %v2848
    %v2943 = vsub.f32 %v2735, %v2850
    %v2944 = vsub.f32 %v2736, %v2852
    %v2945 = vsub.f32 %v2737, %v2854
    %v2946 = vsub.f32 %v2738, %v2856
    %v2947 = vsub.f32 %v2739, %v2858
    %v2948 = vsub.f32 %v2740, %v2860
    %v2949 = vsub.f32 %v2741, %v2862
    %v2950 = vsub.f32 %v2742, %v2864
    %v2951 = vsub.f32 %v2743, %v2866
    %v2952 = vsub.f32 %v2744, %v2868
    %v2953 = vsub.f32 %v2745, %v2870
    %v2954 = vsub.f32 %v2746, %v2872
    %v2955 = vsub.f32 %v2747, %v2874
    %v2956 = vsub.f32 %v2748, %v2876
    %v2957 = vsel %vm2797, -1e+30, %v2749
    %v2958 = vsel %vm2798, -1e+30, %v2750
    %v2959 = vsel %vm2799, -1e+30, %v2751
    %v2960 = vsel %vm2800, -1e+30, %v2752
    %v2961 = vsel %vm2801, -1e+30, %v2753
    %v2962 = vsel %vm2802, -1e+30, %v2754
    %v2963 = vsel %vm2803, -1e+30, %v2755
    %v2964 = vsel %vm2804, -1e+30, %v2756
    %v2965 = vsel %vm2805, -1e+30, %v2757
    %v2966 = vsel %vm2806, -1e+30, %v2758
    %v2967 = vsel %vm2807, -1e+30, %v2759
    %v2968 = vsel %vm2808, -1e+30, %v2760
    %v2969 = vsel %vm2809, -1e+30, %v2761
    %v2970 = vsel %vm2810, -1e+30, %v2762
    %v2971 = vsel %vm2811, -1e+30, %v2763
    %v2972 = vsel %vm2812, -1e+30, %v2764
    %2973 = vmax.xlane.f32.xlu0 %v2957
    %v2974 = vpop.xlane.xlu0 %2973
    %2975 = vmax.xlane.f32.xlu0 %v2958
    %v2976 = vpop.xlane.xlu0 %2975
    %2977 = vmax.xlane.f32.xlu0 %v2959
    %v2978 = vpop.xlane.xlu0 %2977
    %2979 = vmax.xlane.f32.xlu0 %v2960
    %v2980 = vpop.xlane.xlu0 %2979
    %2981 = vmax.xlane.f32.xlu0 %v2961
    %v2982 = vpop.xlane.xlu0 %2981
    %2983 = vmax.xlane.f32.xlu0 %v2962
    %v2984 = vpop.xlane.xlu0 %2983
    %2985 = vmax.xlane.f32.xlu0 %v2963
    %v2986 = vpop.xlane.xlu0 %2985
    %2987 = vmax.xlane.f32.xlu0 %v2964
    %v2988 = vpop.xlane.xlu0 %2987
    %2989 = vmax.xlane.f32.xlu0 %v2965
    %v2990 = vpop.xlane.xlu0 %2989
    %2991 = vmax.xlane.f32.xlu0 %v2966
    %v2992 = vpop.xlane.xlu0 %2991
    %2993 = vmax.xlane.f32.xlu0 %v2967
    %v2994 = vpop.xlane.xlu0 %2993
    %2995 = vmax.xlane.f32.xlu0 %v2968
    %v2996 = vpop.xlane.xlu0 %2995
    %2997 = vmax.xlane.f32.xlu0 %v2969
    %v2998 = vpop.xlane.xlu0 %2997
    %2999 = vmax.xlane.f32.xlu0 %v2970
    %v3000 = vpop.xlane.xlu0 %2999
    %3001 = vmax.xlane.f32.xlu0 %v2971
    %v3002 = vpop.xlane.xlu0 %3001
    %3003 = vmax.xlane.f32.xlu0 %v2972
    %v3004 = vpop.xlane.xlu0 %3003
    %vm3005 = vcmp.eq.f32.partialorder %v2957, %v2974
    %vm3006 = vcmp.eq.f32.partialorder %v2958, %v2976
    %vm3007 = vcmp.eq.f32.partialorder %v2959, %v2978
    %vm3008 = vcmp.eq.f32.partialorder %v2960, %v2980
    %vm3009 = vcmp.eq.f32.partialorder %v2961, %v2982
    %vm3010 = vcmp.eq.f32.partialorder %v2962, %v2984
    %vm3011 = vcmp.eq.f32.partialorder %v2963, %v2986
    %vm3012 = vcmp.eq.f32.partialorder %v2964, %v2988
    %vm3013 = vcmp.eq.f32.partialorder %v2965, %v2990
    %vm3014 = vcmp.eq.f32.partialorder %v2966, %v2992
    %vm3015 = vcmp.eq.f32.partialorder %v2967, %v2994
    %vm3016 = vcmp.eq.f32.partialorder %v2968, %v2996
    %vm3017 = vcmp.eq.f32.partialorder %v2969, %v2998
    %vm3018 = vcmp.eq.f32.partialorder %v2970, %v3000
    %vm3019 = vcmp.eq.f32.partialorder %v2971, %v3002
    %vm3020 = vcmp.eq.f32.partialorder %v2972, %v3004
    %v3021 = vsel %vm3005, 1, 0
    %v3022 = vsel %vm3006, 1, 0
    %v3023 = vsel %vm3007, 1, 0
    %v3024 = vsel %vm3008, 1, 0
    %v3025 = vsel %vm3009, 1, 0
    %v3026 = vsel %vm3010, 1, 0
    %v3027 = vsel %vm3011, 1, 0
    %v3028 = vsel %vm3012, 1, 0
    %v3029 = vsel %vm3013, 1, 0
    %v3030 = vsel %vm3014, 1, 0
    %v3031 = vsel %vm3015, 1, 0
    %v3032 = vsel %vm3016, 1, 0
    %v3033 = vsel %vm3017, 1, 0
    %v3034 = vsel %vm3018, 1, 0
    %v3035 = vsel %vm3019, 1, 0
    %v3036 = vsel %vm3020, 1, 0
    %v3037 = vcvt.s32.f32 %v3021
    %v3038 = vcvt.s32.f32 %v3022
    %v3039 = vcvt.s32.f32 %v3023
    %v3040 = vcvt.s32.f32 %v3024
    %v3041 = vcvt.s32.f32 %v3025
    %v3042 = vcvt.s32.f32 %v3026
    %v3043 = vcvt.s32.f32 %v3027
    %v3044 = vcvt.s32.f32 %v3028
    %v3045 = vcvt.s32.f32 %v3029
    %v3046 = vcvt.s32.f32 %v3030
    %v3047 = vcvt.s32.f32 %v3031
    %v3048 = vcvt.s32.f32 %v3032
    %v3049 = vcvt.s32.f32 %v3033
    %v3050 = vcvt.s32.f32 %v3034
    %v3051 = vcvt.s32.f32 %v3035
    %v3052 = vcvt.s32.f32 %v3036
    %3053 = vadd.xlane.f32.xlu0 %v3037
    %v3054 = vpop.xlane.xlu0 %3053
    %3055 = vadd.xlane.f32.xlu0 %v3038
    %v3056 = vpop.xlane.xlu0 %3055
    %3057 = vadd.xlane.f32.xlu0 %v3039
    %v3058 = vpop.xlane.xlu0 %3057
    %3059 = vadd.xlane.f32.xlu0 %v3040
    %v3060 = vpop.xlane.xlu0 %3059
    %3061 = vadd.xlane.f32.xlu0 %v3041
    %v3062 = vpop.xlane.xlu0 %3061
    %3063 = vadd.xlane.f32.xlu0 %v3042
    %v3064 = vpop.xlane.xlu0 %3063
    %3065 = vadd.xlane.f32.xlu0 %v3043
    %v3066 = vpop.xlane.xlu0 %3065
    %3067 = vadd.xlane.f32.xlu0 %v3044
    %v3068 = vpop.xlane.xlu0 %3067
    %3069 = vadd.xlane.f32.xlu0 %v3045
    %v3070 = vpop.xlane.xlu0 %3069
    %3071 = vadd.xlane.f32.xlu0 %v3046
    %v3072 = vpop.xlane.xlu0 %3071
    %3073 = vadd.xlane.f32.xlu0 %v3047
    %v3074 = vpop.xlane.xlu0 %3073
    %3075 = vadd.xlane.f32.xlu0 %v3048
    %v3076 = vpop.xlane.xlu0 %3075
    %3077 = vadd.xlane.f32.xlu0 %v3049
    %v3078 = vpop.xlane.xlu0 %3077
    %3079 = vadd.xlane.f32.xlu0 %v3050
    %v3080 = vpop.xlane.xlu0 %3079
    %3081 = vadd.xlane.f32.xlu0 %v3051
    %v3082 = vpop.xlane.xlu0 %3081
    %3083 = vadd.xlane.f32.xlu0 %v3052
    %v3084 = vpop.xlane.xlu0 %3083
    %vm3085 = vcmp.gt.f32.partialorder %v2941, 0.0
    %vm3086 = vcmp.gt.f32.partialorder %v2942, 0.0
    %vm3087 = vcmp.gt.f32.partialorder %v2943, 0.0
    %vm3088 = vcmp.gt.f32.partialorder %v2944, 0.0
    %vm3089 = vcmp.gt.f32.partialorder %v2945, 0.0
    %vm3090 = vcmp.gt.f32.partialorder %v2946, 0.0
    %vm3091 = vcmp.gt.f32.partialorder %v2947, 0.0
    %vm3092 = vcmp.gt.f32.partialorder %v2948, 0.0
    %vm3093 = vcmp.gt.f32.partialorder %v2949, 0.0
    %vm3094 = vcmp.gt.f32.partialorder %v2950, 0.0
    %vm3095 = vcmp.gt.f32.partialorder %v2951, 0.0
    %vm3096 = vcmp.gt.f32.partialorder %v2952, 0.0
    %vm3097 = vcmp.gt.f32.partialorder %v2953, 0.0
    %vm3098 = vcmp.gt.f32.partialorder %v2954, 0.0
    %vm3099 = vcmp.gt.f32.partialorder %v2955, 0.0
    %vm3100 = vcmp.gt.f32.partialorder %v2956, 0.0
    %vm3101 = vcmp.ge.f32.partialorder %v3054, %v2941
    %vm3102 = vcmp.ge.f32.partialorder %v3056, %v2942
    %vm3103 = vcmp.ge.f32.partialorder %v3058, %v2943
    %vm3104 = vcmp.ge.f32.partialorder %v3060, %v2944
    %vm3105 = vcmp.ge.f32.partialorder %v3062, %v2945
    %vm3106 = vcmp.ge.f32.partialorder %v3064, %v2946
    %vm3107 = vcmp.ge.f32.partialorder %v3066, %v2947
    %vm3108 = vcmp.ge.f32.partialorder %v3068, %v2948
    %vm3109 = vcmp.ge.f32.partialorder %v3070, %v2949
    %vm3110 = vcmp.ge.f32.partialorder %v3072, %v2950
    %vm3111 = vcmp.ge.f32.partialorder %v3074, %v2951
    %vm3112 = vcmp.ge.f32.partialorder %v3076, %v2952
    %vm3113 = vcmp.ge.f32.partialorder %v3078, %v2953
    %vm3114 = vcmp.ge.f32.partialorder %v3080, %v2954
    %vm3115 = vcmp.ge.f32.partialorder %v3082, %v2955
    %vm3116 = vcmp.ge.f32.partialorder %v3084, %v2956
    %vm3117 = vmand %vm3085, %vm3101
    %vm3118 = vmand %vm3086, %vm3102
    %vm3119 = vmand %vm3087, %vm3103
    %vm3120 = vmand %vm3088, %vm3104
    %vm3121 = vmand %vm3089, %vm3105
    %vm3122 = vmand %vm3090, %vm3106
    %vm3123 = vmand %vm3091, %vm3107
    %vm3124 = vmand %vm3092, %vm3108
    %vm3125 = vmand %vm3093, %vm3109
    %vm3126 = vmand %vm3094, %vm3110
    %vm3127 = vmand %vm3095, %vm3111
    %vm3128 = vmand %vm3096, %vm3112
    %vm3129 = vmand %vm3097, %vm3113
    %vm3130 = vmand %vm3098, %vm3114
    %vm3131 = vmand %vm3099, %vm3115
    %vm3132 = vmand %vm3100, %vm3116
    %v3133 = vsel %vm3117, %v2974, %v2925
    %v3134 = vsel %vm3118, %v2976, %v2926
    %v3135 = vsel %vm3119, %v2978, %v2927
    %v3136 = vsel %vm3120, %v2980, %v2928
    %v3137 = vsel %vm3121, %v2982, %v2929
    %v3138 = vsel %vm3122, %v2984, %v2930
    %v3139 = vsel %vm3123, %v2986, %v2931
    %v3140 = vsel %vm3124, %v2988, %v2932
    %v3141 = vsel %vm3125, %v2990, %v2933
    %v3142 = vsel %vm3126, %v2992, %v2934
    %v3143 = vsel %vm3127, %v2994, %v2935
    %v3144 = vsel %vm3128, %v2996, %v2936
    %v3145 = vsel %vm3129, %v2998, %v2937
    %v3146 = vsel %vm3130, %v3000, %v2938
    %v3147 = vsel %vm3131, %v3002, %v2939
    %v3148 = vsel %vm3132, %v3004, %v2940
    %vm3149 = vcmp.gt.f32.partialorder %v2557, %v3133
    %vm3150 = vcmp.gt.f32.partialorder %v2558, %v3134
    %vm3151 = vcmp.gt.f32.partialorder %v2559, %v3135
    %vm3152 = vcmp.gt.f32.partialorder %v2560, %v3136
    %vm3153 = vcmp.gt.f32.partialorder %v2561, %v3137
    %vm3154 = vcmp.gt.f32.partialorder %v2562, %v3138
    %vm3155 = vcmp.gt.f32.partialorder %v2563, %v3139
    %vm3156 = vcmp.gt.f32.partialorder %v2564, %v3140
    %vm3157 = vcmp.gt.f32.partialorder %v2565, %v3141
    %vm3158 = vcmp.gt.f32.partialorder %v2566, %v3142
    %vm3159 = vcmp.gt.f32.partialorder %v2567, %v3143
    %vm3160 = vcmp.gt.f32.partialorder %v2568, %v3144
    %vm3161 = vcmp.gt.f32.partialorder %v2569, %v3145
    %vm3162 = vcmp.gt.f32.partialorder %v2570, %v3146
    %vm3163 = vcmp.gt.f32.partialorder %v2571, %v3147
    %vm3164 = vcmp.gt.f32.partialorder %v2572, %v3148
    %vm3165 = vmor %vm3149, %vm170
    %vm3166 = vmor %vm3150, %vm171
    %vm3167 = vmor %vm3151, %vm172
    %vm3168 = vmor %vm3152, %vm173
    %vm3169 = vmor %vm3153, %vm174
    %vm3170 = vmor %vm3154, %vm175
    %vm3171 = vmor %vm3155, %vm176
    %vm3172 = vmor %vm3156, %vm177
    %vm3173 = vmor %vm3157, %vm178
    %vm3174 = vmor %vm3158, %vm179
    %vm3175 = vmor %vm3159, %vm180
    %vm3176 = vmor %vm3160, %vm181
    %vm3177 = vmor %vm3161, %vm182
    %vm3178 = vmor %vm3162, %vm183
    %vm3179 = vmor %vm3163, %vm184
    %vm3180 = vmor %vm3164, %vm185
    %v3181 = vsel %vm3165, 1.0, 0.0
    %v3182 = vsel %vm3166, 1.0, 0.0
    %v3183 = vsel %vm3167, 1.0, 0.0
    %v3184 = vsel %vm3168, 1.0, 0.0
    %v3185 = vsel %vm3169, 1.0, 0.0
    %v3186 = vsel %vm3170, 1.0, 0.0
    %v3187 = vsel %vm3171, 1.0, 0.0
    %v3188 = vsel %vm3172, 1.0, 0.0
    %v3189 = vsel %vm3173, 1.0, 0.0
    %v3190 = vsel %vm3174, 1.0, 0.0
    %v3191 = vsel %vm3175, 1.0, 0.0
    %v3192 = vsel %vm3176, 1.0, 0.0
    %v3193 = vsel %vm3177, 1.0, 0.0
    %v3194 = vsel %vm3178, 1.0, 0.0
    %v3195 = vsel %vm3179, 1.0, 0.0
    %v3196 = vsel %vm3180, 1.0, 0.0
    %v3197 = vpack.c.bf16 %v3182, %v3181
    %v3198 = vpack.c.bf16 %v3184, %v3183
    %v3199 = vpack.c.bf16 %v3186, %v3185
    %v3200 = vpack.c.bf16 %v3188, %v3187
    %v3201 = vpack.c.bf16 %v3190, %v3189
    %v3202 = vpack.c.bf16 %v3192, %v3191
    %v3203 = vpack.c.bf16 %v3194, %v3193
    %v3204 = vpack.c.bf16 %v3196, %v3195
    %3205 = vmatprep.subr.bf16.mxu0 0
    %3206 = vmatpush1.bf16.xpose.msra.mxu0 %v3197
    %3207 = vmatprep.subr.bf16.mxu0 0
    %3208 = vmatpush1.bf16.xpose.msra.mxu0 %v3198
    %3209 = vmatprep.subr.bf16.mxu0 0
    %3210 = vmatpush1.bf16.xpose.msra.mxu0 %v3199
    %3211 = vmatprep.subr.bf16.mxu0 0
    %3212 = vmatpush1.bf16.xpose.msra.mxu0 %v3200
    %3213 = vmatprep.subr.bf16.mxu0 0
    %3214 = vmatpush1.bf16.xpose.msra.mxu0 %v3201
    %3215 = vmatprep.subr.bf16.mxu0 0
    %3216 = vmatpush1.bf16.xpose.msra.mxu0 %v3202
    %3217 = vmatprep.subr.bf16.mxu0 0
    %3218 = vmatpush1.bf16.xpose.msra.mxu0 %v3203
    %3219 = vmatprep.subr.bf16.mxu0 0
    %3220 = vmatpush1.bf16.xpose.msra.mxu0 %v3204
    %3221 = vmatprep.subr.bf16.mxu0 0
    %3222 = vmatpush1.bf16.xpose.msra.mxu0 0
    %3223 = vmatprep.subr.bf16.mxu0 0
    %3224 = vmatpush1.bf16.xpose.msra.mxu0 0
    %3225 = vmatprep.subr.bf16.mxu0 0
    %3226 = vmatpush1.bf16.xpose.msra.mxu0 0
    %3227 = vmatprep.subr.bf16.mxu0 0
    %3228 = vmatpush1.bf16.xpose.msra.mxu0 0
    %3229 = vmatprep.subr.bf16.mxu0 0
    %3230 = vmatpush1.bf16.xpose.msra.mxu0 0
    %3231 = vmatprep.subr.bf16.mxu0 0
    %3232 = vmatpush1.bf16.xpose.msra.mxu0 0
    %3233 = vmatprep.subr.bf16.mxu0 0
    %3234 = vmatpush1.bf16.xpose.msra.mxu0 0
    %3235 = vmatprep.subr.bf16.mxu0 0
    %3236 = vmatpush1.bf16.xpose.msra.mxu0 0
    %3237 = vmatprep.mubr.bf16.mxu0 0
    %3238 = vmatmul.mubr.bf16.gmra.mrb[0].mxu0 %v3197
    %v3239 = vpop.f32.mrb[0].mxu0
    %v3240 = vadd.f32 0.0, %v3239
    %v3241 = vpop.f32.mrb[0].mxu0
    %v3242 = vpop.f32.mrb[0].mxu0
    %v3243 = vadd.f32 0.0, %v3242
    %v3244 = vpop.f32.mrb[0].mxu0
    %3245 = vmatprep.mubr.bf16.mxu0 0
    %3246 = vmatmul.mubr.bf16.gmra.mrb[0].mxu0 %v3198
    %v3247 = vpop.f32.mrb[0].mxu0
    %v3248 = vadd.f32 0.0, %v3247
    %v3249 = vpop.f32.mrb[0].mxu0
    %v3250 = vpop.f32.mrb[0].mxu0
    %v3251 = vadd.f32 0.0, %v3250
    %v3252 = vpop.f32.mrb[0].mxu0
    %3253 = vmatprep.mubr.bf16.mxu0 0
    %3254 = vmatmul.mubr.bf16.gmra.mrb[0].mxu0 %v3199
    %v3255 = vpop.f32.mrb[0].mxu0
    %v3256 = vadd.f32 0.0, %v3255
    %v3257 = vpop.f32.mrb[0].mxu0
    %v3258 = vpop.f32.mrb[0].mxu0
    %v3259 = vadd.f32 0.0, %v3258
    %v3260 = vpop.f32.mrb[0].mxu0
    %3261 = vmatprep.mubr.bf16.mxu0 0
    %3262 = vmatmul.mubr.bf16.gmra.mrb[0].mxu0 %v3200
    %v3263 = vpop.f32.mrb[0].mxu0
    %v3264 = vadd.f32 0.0, %v3263
    %v3265 = vpop.f32.mrb[0].mxu0
    %v3266 = vpop.f32.mrb[0].mxu0
    %v3267 = vadd.f32 0.0, %v3266
    %v3268 = vpop.f32.mrb[0].mxu0
    %3269 = vmatprep.mubr.bf16.mxu0 0
    %3270 = vmatmul.mubr.bf16.gmra.mrb[0].mxu0 %v3201
    %v3271 = vpop.f32.mrb[0].mxu0
    %v3272 = vadd.f32 0.0, %v3271
    %v3273 = vpop.f32.mrb[0].mxu0
    %v3274 = vpop.f32.mrb[0].mxu0
    %v3275 = vadd.f32 0.0, %v3274
    %v3276 = vpop.f32.mrb[0].mxu0
    %3277 = vmatprep.mubr.bf16.mxu0 0
    %3278 = vmatmul.mubr.bf16.gmra.mrb[0].mxu0 %v3202
    %v3279 = vpop.f32.mrb[0].mxu0
    %v3280 = vadd.f32 0.0, %v3279
    %v3281 = vpop.f32.mrb[0].mxu0
    %v3282 = vpop.f32.mrb[0].mxu0
    %v3283 = vadd.f32 0.0, %v3282
    %v3284 = vpop.f32.mrb[0].mxu0
    %3285 = vmatprep.mubr.bf16.mxu0 0
    %3286 = vmatmul.mubr.bf16.gmra.mrb[0].mxu0 %v3203
    %v3287 = vpop.f32.mrb[0].mxu0
    %v3288 = vadd.f32 0.0, %v3287
    %v3289 = vpop.f32.mrb[0].mxu0
    %v3290 = vpop.f32.mrb[0].mxu0
    %v3291 = vadd.f32 0.0, %v3290
    %v3292 = vpop.f32.mrb[0].mxu0
    %3293 = vmatprep.mubr.bf16.mxu0 0
    %3294 = vmatmul.mubr.bf16.gmra.mrb[0].mxu0 %v3204
    %v3295 = vpop.f32.mrb[0].mxu0
    %v3296 = vadd.f32 0.0, %v3295
    %v3297 = vpop.f32.mrb[0].mxu0
    %v3298 = vpop.f32.mrb[0].mxu0
    %v3299 = vadd.f32 0.0, %v3298
    %v3300 = vpop.f32.mrb[0].mxu0
    %3301 = vdwg.mxu0
    %v3302 = vmul.f32 %v3240, 0.33333334
    %v3303 = vmul.f32 %v3243, 0.33333334
    %v3304 = vmul.f32 %v3248, 0.33333334
    %v3305 = vmul.f32 %v3251, 0.33333334
    %v3306 = vmul.f32 %v3256, 0.33333334
    %v3307 = vmul.f32 %v3259, 0.33333334
    %v3308 = vmul.f32 %v3264, 0.33333334
    %v3309 = vmul.f32 %v3267, 0.33333334
    %v3310 = vmul.f32 %v3272, 0.33333334
    %v3311 = vmul.f32 %v3275, 0.33333334
    %v3312 = vmul.f32 %v3280, 0.33333334
    %v3313 = vmul.f32 %v3283, 0.33333334
    %v3314 = vmul.f32 %v3288, 0.33333334
    %v3315 = vmul.f32 %v3291, 0.33333334
    %v3316 = vmul.f32 %v3296, 0.33333334
    %v3317 = vmul.f32 %v3299, 0.33333334
    %3318 = vmax.xlane.f32.xlu0 %v2525
    %v3319 = vpop.xlane.xlu0 %3318
    %3320 = vmax.xlane.f32.xlu0 %v2526
    %v3321 = vpop.xlane.xlu0 %3320
    %3322 = vmax.xlane.f32.xlu0 %v2527
    %v3323 = vpop.xlane.xlu0 %3322
    %3324 = vmax.xlane.f32.xlu0 %v2528
    %v3325 = vpop.xlane.xlu0 %3324
    %3326 = vmax.xlane.f32.xlu0 %v2529
    %v3327 = vpop.xlane.xlu0 %3326
    %3328 = vmax.xlane.f32.xlu0 %v2530
    %v3329 = vpop.xlane.xlu0 %3328
    %3330 = vmax.xlane.f32.xlu0 %v2531
    %v3331 = vpop.xlane.xlu0 %3330
    %3332 = vmax.xlane.f32.xlu0 %v2532
    %v3333 = vpop.xlane.xlu0 %3332
    %3334 = vmax.xlane.f32.xlu0 %v2533
    %v3335 = vpop.xlane.xlu0 %3334
    %3336 = vmax.xlane.f32.xlu0 %v2534
    %v3337 = vpop.xlane.xlu0 %3336
    %3338 = vmax.xlane.f32.xlu0 %v2535
    %v3339 = vpop.xlane.xlu0 %3338
    %3340 = vmax.xlane.f32.xlu0 %v2536
    %v3341 = vpop.xlane.xlu0 %3340
    %3342 = vmax.xlane.f32.xlu0 %v2537
    %v3343 = vpop.xlane.xlu0 %3342
    %3344 = vmax.xlane.f32.xlu0 %v2538
    %v3345 = vpop.xlane.xlu0 %3344
    %3346 = vmax.xlane.f32.xlu0 %v2539
    %v3347 = vpop.xlane.xlu0 %3346
    %3348 = vmax.xlane.f32.xlu0 %v2540
    %v3349 = vpop.xlane.xlu0 %3348
    %vm3350 = vcmp.gt.f32.partialorder %v3319, 0.0
    %vm3351 = vcmp.gt.f32.partialorder %v3321, 0.0
    %vm3352 = vcmp.gt.f32.partialorder %v3323, 0.0
    %vm3353 = vcmp.gt.f32.partialorder %v3325, 0.0
    %vm3354 = vcmp.gt.f32.partialorder %v3327, 0.0
    %vm3355 = vcmp.gt.f32.partialorder %v3329, 0.0
    %vm3356 = vcmp.gt.f32.partialorder %v3331, 0.0
    %vm3357 = vcmp.gt.f32.partialorder %v3333, 0.0
    %vm3358 = vcmp.gt.f32.partialorder %v3335, 0.0
    %vm3359 = vcmp.gt.f32.partialorder %v3337, 0.0
    %vm3360 = vcmp.gt.f32.partialorder %v3339, 0.0
    %vm3361 = vcmp.gt.f32.partialorder %v3341, 0.0
    %vm3362 = vcmp.gt.f32.partialorder %v3343, 0.0
    %vm3363 = vcmp.gt.f32.partialorder %v3345, 0.0
    %vm3364 = vcmp.gt.f32.partialorder %v3347, 0.0
    %vm3365 = vcmp.gt.f32.partialorder %v3349, 0.0
    %v3366 = vsel %vm3350, %v3319, 1.0
    %v3367 = vsel %vm3351, %v3321, 1.0
    %v3368 = vsel %vm3352, %v3323, 1.0
    %v3369 = vsel %vm3353, %v3325, 1.0
    %v3370 = vsel %vm3354, %v3327, 1.0
    %v3371 = vsel %vm3355, %v3329, 1.0
    %v3372 = vsel %vm3356, %v3331, 1.0
    %v3373 = vsel %vm3357, %v3333, 1.0
    %v3374 = vsel %vm3358, %v3335, 1.0
    %v3375 = vsel %vm3359, %v3337, 1.0
    %v3376 = vsel %vm3360, %v3339, 1.0
    %v3377 = vsel %vm3361, %v3341, 1.0
    %v3378 = vsel %vm3362, %v3343, 1.0
    %v3379 = vsel %vm3363, %v3345, 1.0
    %v3380 = vsel %vm3364, %v3347, 1.0
    %v3381 = vsel %vm3365, %v3349, 1.0
    %v3382 = vrcp.pop %v3366
    %v3383 = vrcp.pop %v3367
    %v3384 = vrcp.pop %v3368
    %v3385 = vrcp.pop %v3369
    %v3386 = vrcp.pop %v3370
    %v3387 = vrcp.pop %v3371
    %v3388 = vrcp.pop %v3372
    %v3389 = vrcp.pop %v3373
    %v3390 = vrcp.pop %v3374
    %v3391 = vrcp.pop %v3375
    %v3392 = vrcp.pop %v3376
    %v3393 = vrcp.pop %v3377
    %v3394 = vrcp.pop %v3378
    %v3395 = vrcp.pop %v3379
    %v3396 = vrcp.pop %v3380
    %v3397 = vrcp.pop %v3381
    %v3398 = vmul.f32 %v2525, %v3382
    %v3399 = vmul.f32 %v2526, %v3383
    %v3400 = vmul.f32 %v2527, %v3384
    %v3401 = vmul.f32 %v2528, %v3385
    %v3402 = vmul.f32 %v2529, %v3386
    %v3403 = vmul.f32 %v2530, %v3387
    %v3404 = vmul.f32 %v2531, %v3388
    %v3405 = vmul.f32 %v2532, %v3389
    %v3406 = vmul.f32 %v2533, %v3390
    %v3407 = vmul.f32 %v2534, %v3391
    %v3408 = vmul.f32 %v2535, %v3392
    %v3409 = vmul.f32 %v2536, %v3393
    %v3410 = vmul.f32 %v2537, %v3394
    %v3411 = vmul.f32 %v2538, %v3395
    %v3412 = vmul.f32 %v2539, %v3396
    %v3413 = vmul.f32 %v2540, %v3397
    %vm3414 = vcmp.gt.f32.partialorder %v3302, %v2476
    %vm3415 = vcmp.gt.f32.partialorder %v3303, %v2476
    %vm3416 = vcmp.gt.f32.partialorder %v3304, %v2476
    %vm3417 = vcmp.gt.f32.partialorder %v3305, %v2476
    %vm3418 = vcmp.gt.f32.partialorder %v3306, %v2476
    %vm3419 = vcmp.gt.f32.partialorder %v3307, %v2476
    %vm3420 = vcmp.gt.f32.partialorder %v3308, %v2476
    %vm3421 = vcmp.gt.f32.partialorder %v3309, %v2476
    %vm3422 = vcmp.gt.f32.partialorder %v3310, %v2476
    %vm3423 = vcmp.gt.f32.partialorder %v3311, %v2476
    %vm3424 = vcmp.gt.f32.partialorder %v3312, %v2476
    %vm3425 = vcmp.gt.f32.partialorder %v3313, %v2476
    %vm3426 = vcmp.gt.f32.partialorder %v3314, %v2476
    %vm3427 = vcmp.gt.f32.partialorder %v3315, %v2476
    %vm3428 = vcmp.gt.f32.partialorder %v3316, %v2476
    %vm3429 = vcmp.gt.f32.partialorder %v3317, %v2476
    %v3430 = vsel %vm3414, 1.0, 0.0
    %v3431 = vsel %vm3415, 1.0, 0.0
    %v3432 = vsel %vm3416, 1.0, 0.0
    %v3433 = vsel %vm3417, 1.0, 0.0
    %v3434 = vsel %vm3418, 1.0, 0.0
    %v3435 = vsel %vm3419, 1.0, 0.0
    %v3436 = vsel %vm3420, 1.0, 0.0
    %v3437 = vsel %vm3421, 1.0, 0.0
    %v3438 = vsel %vm3422, 1.0, 0.0
    %v3439 = vsel %vm3423, 1.0, 0.0
    %v3440 = vsel %vm3424, 1.0, 0.0
    %v3441 = vsel %vm3425, 1.0, 0.0
    %v3442 = vsel %vm3426, 1.0, 0.0
    %v3443 = vsel %vm3427, 1.0, 0.0
    %v3444 = vsel %vm3428, 1.0, 0.0
    %v3445 = vsel %vm3429, 1.0, 0.0
    %v3446 = vadd.f32 %v3302, 1.1754944e-38
    %v3447 = vadd.f32 %v3303, 1.1754944e-38
    %v3448 = vadd.f32 %v3304, 1.1754944e-38
    %v3449 = vadd.f32 %v3305, 1.1754944e-38
    %v3450 = vadd.f32 %v3306, 1.1754944e-38
    %v3451 = vadd.f32 %v3307, 1.1754944e-38
    %v3452 = vadd.f32 %v3308, 1.1754944e-38
    %v3453 = vadd.f32 %v3309, 1.1754944e-38
    %v3454 = vadd.f32 %v3310, 1.1754944e-38
    %v3455 = vadd.f32 %v3311, 1.1754944e-38
    %v3456 = vadd.f32 %v3312, 1.1754944e-38
    %v3457 = vadd.f32 %v3313, 1.1754944e-38
    %v3458 = vadd.f32 %v3314, 1.1754944e-38
    %v3459 = vadd.f32 %v3315, 1.1754944e-38
    %v3460 = vadd.f32 %v3316, 1.1754944e-38
    %v3461 = vadd.f32 %v3317, 1.1754944e-38
    %v3462 = vadd.f32 %v3430, %v2493
    %v3463 = vadd.f32 %v3431, %v2494
    %v3464 = vadd.f32 %v3432, %v2495
    %v3465 = vadd.f32 %v3433, %v2496
    %v3466 = vadd.f32 %v3434, %v2497
    %v3467 = vadd.f32 %v3435, %v2498
    %v3468 = vadd.f32 %v3436, %v2499
    %v3469 = vadd.f32 %v3437, %v2500
    %v3470 = vadd.f32 %v3438, %v2501
    %v3471 = vadd.f32 %v3439, %v2502
    %v3472 = vadd.f32 %v3440, %v2503
    %v3473 = vadd.f32 %v3441, %v2504
    %v3474 = vadd.f32 %v3442, %v2505
    %v3475 = vadd.f32 %v3443, %v2506
    %v3476 = vadd.f32 %v3444, %v2507
    %v3477 = vadd.f32 %v3445, %v2508
    %v3478 = vmul.f32 %v3462, 0.5
    %v3479 = vmul.f32 %v3463, 0.5
    %v3480 = vmul.f32 %v3464, 0.5
    %v3481 = vmul.f32 %v3465, 0.5
    %v3482 = vmul.f32 %v3466, 0.5
    %v3483 = vmul.f32 %v3467, 0.5
    %v3484 = vmul.f32 %v3468, 0.5
    %v3485 = vmul.f32 %v3469, 0.5
    %v3486 = vmul.f32 %v3470, 0.5
    %v3487 = vmul.f32 %v3471, 0.5
    %v3488 = vmul.f32 %v3472, 0.5
    %v3489 = vmul.f32 %v3473, 0.5
    %v3490 = vmul.f32 %v3474, 0.5
    %v3491 = vmul.f32 %v3475, 0.5
    %v3492 = vmul.f32 %v3476, 0.5
    %v3493 = vmul.f32 %v3477, 0.5
    %v3494 = vsel %vm154, %v3478, 0.0
    %v3495 = vsel %vm155, %v3479, 0.0
    %v3496 = vsel %vm156, %v3480, 0.0
    %v3497 = vsel %vm157, %v3481, 0.0
    %v3498 = vsel %vm158, %v3482, 0.0
    %v3499 = vsel %vm159, %v3483, 0.0
    %v3500 = vsel %vm160, %v3484, 0.0
    %v3501 = vsel %vm161, %v3485, 0.0
    %v3502 = vsel %vm162, %v3486, 0.0
    %v3503 = vsel %vm163, %v3487, 0.0
    %v3504 = vsel %vm164, %v3488, 0.0
    %v3505 = vsel %vm165, %v3489, 0.0
    %v3506 = vsel %vm166, %v3490, 0.0
    %v3507 = vsel %vm167, %v3491, 0.0
    %v3508 = vsel %vm168, %v3492, 0.0
    %v3509 = vsel %vm169, %v3493, 0.0
    %v3510 = vsel %vm1713, %v3494, 0.0
    %v3511 = vsel %vm1713, %v3495, 0.0
    %v3512 = vsel %vm1713, %v3496, 0.0
    %v3513 = vsel %vm1713, %v3497, 0.0
    %v3514 = vsel %vm1713, %v3498, 0.0
    %v3515 = vsel %vm1713, %v3499, 0.0
    %v3516 = vsel %vm1713, %v3500, 0.0
    %v3517 = vsel %vm1713, %v3501, 0.0
    %v3518 = vsel %vm1713, %v3502, 0.0
    %v3519 = vsel %vm1713, %v3503, 0.0
    %v3520 = vsel %vm1713, %v3504, 0.0
    %v3521 = vsel %vm1713, %v3505, 0.0
    %v3522 = vsel %vm1713, %v3506, 0.0
    %v3523 = vsel %vm1713, %v3507, 0.0
    %v3524 = vsel %vm1713, %v3508, 0.0
    %v3525 = vsel %vm1713, %v3509, 0.0
    %v3526 = vsel %vm1713, %v2493, -1e+30
    %v3527 = vsel %vm1713, %v2494, -1e+30
    %v3528 = vsel %vm1713, %v2495, -1e+30
    %v3529 = vsel %vm1713, %v2496, -1e+30
    %v3530 = vsel %vm1713, %v2497, -1e+30
    %v3531 = vsel %vm1713, %v2498, -1e+30
    %v3532 = vsel %vm1713, %v2499, -1e+30
    %v3533 = vsel %vm1713, %v2500, -1e+30
    %v3534 = vsel %vm1713, %v2501, -1e+30
    %v3535 = vsel %vm1713, %v2502, -1e+30
    %v3536 = vsel %vm1713, %v2503, -1e+30
    %v3537 = vsel %vm1713, %v2504, -1e+30
    %v3538 = vsel %vm1713, %v2505, -1e+30
    %v3539 = vsel %vm1713, %v2506, -1e+30
    %v3540 = vsel %vm1713, %v2507, -1e+30
    %v3541 = vsel %vm1713, %v2508, -1e+30
    %3542 = vmax.xlane.f32.xlu0 %v3526
    %v3543 = vpop.xlane.xlu0 %3542
    %3544 = vmax.xlane.f32.xlu0 %v3527
    %v3545 = vpop.xlane.xlu0 %3544
    %3546 = vmax.xlane.f32.xlu0 %v3528
    %v3547 = vpop.xlane.xlu0 %3546
    %3548 = vmax.xlane.f32.xlu0 %v3529
    %v3549 = vpop.xlane.xlu0 %3548
    %3550 = vmax.xlane.f32.xlu0 %v3530
    %v3551 = vpop.xlane.xlu0 %3550
    %3552 = vmax.xlane.f32.xlu0 %v3531
    %v3553 = vpop.xlane.xlu0 %3552
    %3554 = vmax.xlane.f32.xlu0 %v3532
    %v3555 = vpop.xlane.xlu0 %3554
    %3556 = vmax.xlane.f32.xlu0 %v3533
    %v3557 = vpop.xlane.xlu0 %3556
    %3558 = vmax.xlane.f32.xlu0 %v3534
    %v3559 = vpop.xlane.xlu0 %3558
    %3560 = vmax.xlane.f32.xlu0 %v3535
    %v3561 = vpop.xlane.xlu0 %3560
    %3562 = vmax.xlane.f32.xlu0 %v3536
    %v3563 = vpop.xlane.xlu0 %3562
    %3564 = vmax.xlane.f32.xlu0 %v3537
    %v3565 = vpop.xlane.xlu0 %3564
    %3566 = vmax.xlane.f32.xlu0 %v3538
    %v3567 = vpop.xlane.xlu0 %3566
    %3568 = vmax.xlane.f32.xlu0 %v3539
    %v3569 = vpop.xlane.xlu0 %3568
    %3570 = vmax.xlane.f32.xlu0 %v3540
    %v3571 = vpop.xlane.xlu0 %3570
    %3572 = vmax.xlane.f32.xlu0 %v3541
    %v3573 = vpop.xlane.xlu0 %3572
    %v3574 = vsub.f32 %v3526, %v3543
    %v3575 = vsub.f32 %v3527, %v3545
    %v3576 = vsub.f32 %v3528, %v3547
    %v3577 = vsub.f32 %v3529, %v3549
    %v3578 = vsub.f32 %v3530, %v3551
    %v3579 = vsub.f32 %v3531, %v3553
    %v3580 = vsub.f32 %v3532, %v3555
    %v3581 = vsub.f32 %v3533, %v3557
    %v3582 = vsub.f32 %v3534, %v3559
    %v3583 = vsub.f32 %v3535, %v3561
    %v3584 = vsub.f32 %v3536, %v3563
    %v3585 = vsub.f32 %v3537, %v3565
    %v3586 = vsub.f32 %v3538, %v3567
    %v3587 = vsub.f32 %v3539, %v3569
    %v3588 = vsub.f32 %v3540, %v3571
    %v3589 = vsub.f32 %v3541, %v3573
    %v3590 = vmul.f32 %v3574, 1.442695
    %v3591 = vpow.pop %v3590
    %v3592 = vmul.f32 %v3575, 1.442695
    %v3593 = vpow.pop %v3592
    %v3594 = vmul.f32 %v3576, 1.442695
    %v3595 = vpow.pop %v3594
    %v3596 = vmul.f32 %v3577, 1.442695
    %v3597 = vpow.pop %v3596
    %v3598 = vmul.f32 %v3578, 1.442695
    %v3599 = vpow.pop %v3598
    %v3600 = vmul.f32 %v3579, 1.442695
    %v3601 = vpow.pop %v3600
    %v3602 = vmul.f32 %v3580, 1.442695
    %v3603 = vpow.pop %v3602
    %v3604 = vmul.f32 %v3581, 1.442695
    %v3605 = vpow.pop %v3604
    %v3606 = vmul.f32 %v3582, 1.442695
    %v3607 = vpow.pop %v3606
    %v3608 = vmul.f32 %v3583, 1.442695
    %v3609 = vpow.pop %v3608
    %v3610 = vmul.f32 %v3584, 1.442695
    %v3611 = vpow.pop %v3610
    %v3612 = vmul.f32 %v3585, 1.442695
    %v3613 = vpow.pop %v3612
    %v3614 = vmul.f32 %v3586, 1.442695
    %v3615 = vpow.pop %v3614
    %v3616 = vmul.f32 %v3587, 1.442695
    %v3617 = vpow.pop %v3616
    %v3618 = vmul.f32 %v3588, 1.442695
    %v3619 = vpow.pop %v3618
    %v3620 = vmul.f32 %v3589, 1.442695
    %v3621 = vpow.pop %v3620
    %3622 = vadd.xlane.f32.xlu0 %v3591
    %v3623 = vpop.xlane.xlu0 %3622
    %3624 = vadd.xlane.f32.xlu0 %v3593
    %v3625 = vpop.xlane.xlu0 %3624
    %3626 = vadd.xlane.f32.xlu0 %v3595
    %v3627 = vpop.xlane.xlu0 %3626
    %3628 = vadd.xlane.f32.xlu0 %v3597
    %v3629 = vpop.xlane.xlu0 %3628
    %3630 = vadd.xlane.f32.xlu0 %v3599
    %v3631 = vpop.xlane.xlu0 %3630
    %3632 = vadd.xlane.f32.xlu0 %v3601
    %v3633 = vpop.xlane.xlu0 %3632
    %3634 = vadd.xlane.f32.xlu0 %v3603
    %v3635 = vpop.xlane.xlu0 %3634
    %3636 = vadd.xlane.f32.xlu0 %v3605
    %v3637 = vpop.xlane.xlu0 %3636
    %3638 = vadd.xlane.f32.xlu0 %v3607
    %v3639 = vpop.xlane.xlu0 %3638
    %3640 = vadd.xlane.f32.xlu0 %v3609
    %v3641 = vpop.xlane.xlu0 %3640
    %3642 = vadd.xlane.f32.xlu0 %v3611
    %v3643 = vpop.xlane.xlu0 %3642
    %3644 = vadd.xlane.f32.xlu0 %v3613
    %v3645 = vpop.xlane.xlu0 %3644
    %3646 = vadd.xlane.f32.xlu0 %v3615
    %v3647 = vpop.xlane.xlu0 %3646
    %3648 = vadd.xlane.f32.xlu0 %v3617
    %v3649 = vpop.xlane.xlu0 %3648
    %3650 = vadd.xlane.f32.xlu0 %v3619
    %v3651 = vpop.xlane.xlu0 %3650
    %3652 = vadd.xlane.f32.xlu0 %v3621
    %v3653 = vpop.xlane.xlu0 %3652
    %v3654 = vlog2.pop %v3623
    %v3655 = vmul.f32 %v3654, 0.6931472
    %v3656 = vlog2.pop %v3625
    %v3657 = vmul.f32 %v3656, 0.6931472
    %v3658 = vlog2.pop %v3627
    %v3659 = vmul.f32 %v3658, 0.6931472
    %v3660 = vlog2.pop %v3629
    %v3661 = vmul.f32 %v3660, 0.6931472
    %v3662 = vlog2.pop %v3631
    %v3663 = vmul.f32 %v3662, 0.6931472
    %v3664 = vlog2.pop %v3633
    %v3665 = vmul.f32 %v3664, 0.6931472
    %v3666 = vlog2.pop %v3635
    %v3667 = vmul.f32 %v3666, 0.6931472
    %v3668 = vlog2.pop %v3637
    %v3669 = vmul.f32 %v3668, 0.6931472
    %v3670 = vlog2.pop %v3639
    %v3671 = vmul.f32 %v3670, 0.6931472
    %v3672 = vlog2.pop %v3641
    %v3673 = vmul.f32 %v3672, 0.6931472
    %v3674 = vlog2.pop %v3643
    %v3675 = vmul.f32 %v3674, 0.6931472
    %v3676 = vlog2.pop %v3645
    %v3677 = vmul.f32 %v3676, 0.6931472
    %v3678 = vlog2.pop %v3647
    %v3679 = vmul.f32 %v3678, 0.6931472
    %v3680 = vlog2.pop %v3649
    %v3681 = vmul.f32 %v3680, 0.6931472
    %v3682 = vlog2.pop %v3651
    %v3683 = vmul.f32 %v3682, 0.6931472
    %v3684 = vlog2.pop %v3653
    %v3685 = vmul.f32 %v3684, 0.6931472
    %v3686 = vadd.f32 %v3543, %v3655
    %v3687 = vadd.f32 %v3545, %v3657
    %v3688 = vadd.f32 %v3547, %v3659
    %v3689 = vadd.f32 %v3549, %v3661
    %v3690 = vadd.f32 %v3551, %v3663
    %v3691 = vadd.f32 %v3553, %v3665
    %v3692 = vadd.f32 %v3555, %v3667
    %v3693 = vadd.f32 %v3557, %v3669
    %v3694 = vadd.f32 %v3559, %v3671
    %v3695 = vadd.f32 %v3561, %v3673
    %v3696 = vadd.f32 %v3563, %v3675
    %v3697 = vadd.f32 %v3565, %v3677
    %v3698 = vadd.f32 %v3567, %v3679
    %v3699 = vadd.f32 %v3569, %v3681
    %v3700 = vadd.f32 %v3571, %v3683
    %v3701 = vadd.f32 %v3573, %v3685
    %v3702 = vsub.f32 %v3686, %v2493
    %v3703 = vsub.f32 %v3687, %v2494
    %v3704 = vsub.f32 %v3688, %v2495
    %v3705 = vsub.f32 %v3689, %v2496
    %v3706 = vsub.f32 %v3690, %v2497
    %v3707 = vsub.f32 %v3691, %v2498
    %v3708 = vsub.f32 %v3692, %v2499
    %v3709 = vsub.f32 %v3693, %v2500
    %v3710 = vsub.f32 %v3694, %v2501
    %v3711 = vsub.f32 %v3695, %v2502
    %v3712 = vsub.f32 %v3696, %v2503
    %v3713 = vsub.f32 %v3697, %v2504
    %v3714 = vsub.f32 %v3698, %v2505
    %v3715 = vsub.f32 %v3699, %v2506
    %v3716 = vsub.f32 %v3700, %v2507
    %v3717 = vsub.f32 %v3701, %v2508
    %v3718 = vmul.f32 %v3398, %v3702
    %v3719 = vmul.f32 %v3399, %v3703
    %v3720 = vmul.f32 %v3400, %v3704
    %v3721 = vmul.f32 %v3401, %v3705
    %v3722 = vmul.f32 %v3402, %v3706
    %v3723 = vmul.f32 %v3403, %v3707
    %v3724 = vmul.f32 %v3404, %v3708
    %v3725 = vmul.f32 %v3405, %v3709
    %v3726 = vmul.f32 %v3406, %v3710
    %v3727 = vmul.f32 %v3407, %v3711
    %v3728 = vmul.f32 %v3408, %v3712
    %v3729 = vmul.f32 %v3409, %v3713
    %v3730 = vmul.f32 %v3410, %v3714
    %v3731 = vmul.f32 %v3411, %v3715
    %v3732 = vmul.f32 %v3412, %v3716
    %v3733 = vmul.f32 %v3413, %v3717
    %v3734 = vadd.f32 %v3718, %v3719
    %v3735 = vadd.f32 %v3734, %v3720
    %v3736 = vadd.f32 %v3735, %v3721
    %v3737 = vadd.f32 %v3736, %v3722
    %v3738 = vadd.f32 %v3737, %v3723
    %v3739 = vadd.f32 %v3738, %v3724
    %v3740 = vadd.f32 %v3739, %v3725
    %v3741 = vadd.f32 %v3740, %v3726
    %v3742 = vadd.f32 %v3741, %v3727
    %v3743 = vadd.f32 %v3742, %v3728
    %v3744 = vadd.f32 %v3743, %v3729
    %v3745 = vadd.f32 %v3744, %v3730
    %v3746 = vadd.f32 %v3745, %v3731
    %v3747 = vadd.f32 %v3746, %v3732
    %v3748 = vadd.f32 %v3747, %v3733
    %3749 = vadd.xlane.f32.xlu0 %v3748
    %v3750 = vpop.xlane.xlu0 %3749
    %v3751 = vrot.slane %v3750, 4
    %v3752 = vadd.f32 %v3750, %v3751
    %v3753 = vrot.slane %v3752, 2
    %v3754 = vadd.f32 %v3752, %v3753
    %v3755 = vrot.slane %v3754, 1
    %v3756 = vadd.f32 %v3754, %v3755
    %s3757 = vtos %v3756
    %v3758 = vsel %vm1713, %v3430, -1e+30
    %v3759 = vsel %vm1713, %v3431, -1e+30
    %v3760 = vsel %vm1713, %v3432, -1e+30
    %v3761 = vsel %vm1713, %v3433, -1e+30
    %v3762 = vsel %vm1713, %v3434, -1e+30
    %v3763 = vsel %vm1713, %v3435, -1e+30
    %v3764 = vsel %vm1713, %v3436, -1e+30
    %v3765 = vsel %vm1713, %v3437, -1e+30
    %v3766 = vsel %vm1713, %v3438, -1e+30
    %v3767 = vsel %vm1713, %v3439, -1e+30
    %v3768 = vsel %vm1713, %v3440, -1e+30
    %v3769 = vsel %vm1713, %v3441, -1e+30
    %v3770 = vsel %vm1713, %v3442, -1e+30
    %v3771 = vsel %vm1713, %v3443, -1e+30
    %v3772 = vsel %vm1713, %v3444, -1e+30
    %v3773 = vsel %vm1713, %v3445, -1e+30
    %3774 = vmax.xlane.f32.xlu0 %v3758
    %v3775 = vpop.xlane.xlu0 %3774
    %3776 = vmax.xlane.f32.xlu0 %v3759
    %v3777 = vpop.xlane.xlu0 %3776
    %3778 = vmax.xlane.f32.xlu0 %v3760
    %v3779 = vpop.xlane.xlu0 %3778
    %3780 = vmax.xlane.f32.xlu0 %v3761
    %v3781 = vpop.xlane.xlu0 %3780
    %3782 = vmax.xlane.f32.xlu0 %v3762
    %v3783 = vpop.xlane.xlu0 %3782
    %3784 = vmax.xlane.f32.xlu0 %v3763
    %v3785 = vpop.xlane.xlu0 %3784
    %3786 = vmax.xlane.f32.xlu0 %v3764
    %v3787 = vpop.xlane.xlu0 %3786
    %3788 = vmax.xlane.f32.xlu0 %v3765
    %v3789 = vpop.xlane.xlu0 %3788
    %3790 = vmax.xlane.f32.xlu0 %v3766
    %v3791 = vpop.xlane.xlu0 %3790
    %3792 = vmax.xlane.f32.xlu0 %v3767
    %v3793 = vpop.xlane.xlu0 %3792
    %3794 = vmax.xlane.f32.xlu0 %v3768
    %v3795 = vpop.xlane.xlu0 %3794
    %3796 = vmax.xlane.f32.xlu0 %v3769
    %v3797 = vpop.xlane.xlu0 %3796
    %3798 = vmax.xlane.f32.xlu0 %v3770
    %v3799 = vpop.xlane.xlu0 %3798
    %3800 = vmax.xlane.f32.xlu0 %v3771
    %v3801 = vpop.xlane.xlu0 %3800
    %3802 = vmax.xlane.f32.xlu0 %v3772
    %v3803 = vpop.xlane.xlu0 %3802
    %3804 = vmax.xlane.f32.xlu0 %v3773
    %v3805 = vpop.xlane.xlu0 %3804
    %v3806 = vsub.f32 %v3758, %v3775
    %v3807 = vsub.f32 %v3759, %v3777
    %v3808 = vsub.f32 %v3760, %v3779
    %v3809 = vsub.f32 %v3761, %v3781
    %v3810 = vsub.f32 %v3762, %v3783
    %v3811 = vsub.f32 %v3763, %v3785
    %v3812 = vsub.f32 %v3764, %v3787
    %v3813 = vsub.f32 %v3765, %v3789
    %v3814 = vsub.f32 %v3766, %v3791
    %v3815 = vsub.f32 %v3767, %v3793
    %v3816 = vsub.f32 %v3768, %v3795
    %v3817 = vsub.f32 %v3769, %v3797
    %v3818 = vsub.f32 %v3770, %v3799
    %v3819 = vsub.f32 %v3771, %v3801
    %v3820 = vsub.f32 %v3772, %v3803
    %v3821 = vsub.f32 %v3773, %v3805
    %v3822 = vmul.f32 %v3806, 1.442695
    %v3823 = vpow.pop %v3822
    %v3824 = vmul.f32 %v3807, 1.442695
    %v3825 = vpow.pop %v3824
    %v3826 = vmul.f32 %v3808, 1.442695
    %v3827 = vpow.pop %v3826
    %v3828 = vmul.f32 %v3809, 1.442695
    %v3829 = vpow.pop %v3828
    %v3830 = vmul.f32 %v3810, 1.442695
    %v3831 = vpow.pop %v3830
    %v3832 = vmul.f32 %v3811, 1.442695
    %v3833 = vpow.pop %v3832
    %v3834 = vmul.f32 %v3812, 1.442695
    %v3835 = vpow.pop %v3834
    %v3836 = vmul.f32 %v3813, 1.442695
    %v3837 = vpow.pop %v3836
    %v3838 = vmul.f32 %v3814, 1.442695
    %v3839 = vpow.pop %v3838
    %v3840 = vmul.f32 %v3815, 1.442695
    %v3841 = vpow.pop %v3840
    %v3842 = vmul.f32 %v3816, 1.442695
    %v3843 = vpow.pop %v3842
    %v3844 = vmul.f32 %v3817, 1.442695
    %v3845 = vpow.pop %v3844
    %v3846 = vmul.f32 %v3818, 1.442695
    %v3847 = vpow.pop %v3846
    %v3848 = vmul.f32 %v3819, 1.442695
    %v3849 = vpow.pop %v3848
    %v3850 = vmul.f32 %v3820, 1.442695
    %v3851 = vpow.pop %v3850
    %v3852 = vmul.f32 %v3821, 1.442695
    %v3853 = vpow.pop %v3852
    %3854 = vadd.xlane.f32.xlu0 %v3823
    %v3855 = vpop.xlane.xlu0 %3854
    %3856 = vadd.xlane.f32.xlu0 %v3825
    %v3857 = vpop.xlane.xlu0 %3856
    %3858 = vadd.xlane.f32.xlu0 %v3827
    %v3859 = vpop.xlane.xlu0 %3858
    %3860 = vadd.xlane.f32.xlu0 %v3829
    %v3861 = vpop.xlane.xlu0 %3860
    %3862 = vadd.xlane.f32.xlu0 %v3831
    %v3863 = vpop.xlane.xlu0 %3862
    %3864 = vadd.xlane.f32.xlu0 %v3833
    %v3865 = vpop.xlane.xlu0 %3864
    %3866 = vadd.xlane.f32.xlu0 %v3835
    %v3867 = vpop.xlane.xlu0 %3866
    %3868 = vadd.xlane.f32.xlu0 %v3837
    %v3869 = vpop.xlane.xlu0 %3868
    %3870 = vadd.xlane.f32.xlu0 %v3839
    %v3871 = vpop.xlane.xlu0 %3870
    %3872 = vadd.xlane.f32.xlu0 %v3841
    %v3873 = vpop.xlane.xlu0 %3872
    %3874 = vadd.xlane.f32.xlu0 %v3843
    %v3875 = vpop.xlane.xlu0 %3874
    %3876 = vadd.xlane.f32.xlu0 %v3845
    %v3877 = vpop.xlane.xlu0 %3876
    %3878 = vadd.xlane.f32.xlu0 %v3847
    %v3879 = vpop.xlane.xlu0 %3878
    %3880 = vadd.xlane.f32.xlu0 %v3849
    %v3881 = vpop.xlane.xlu0 %3880
    %3882 = vadd.xlane.f32.xlu0 %v3851
    %v3883 = vpop.xlane.xlu0 %3882
    %3884 = vadd.xlane.f32.xlu0 %v3853
    %v3885 = vpop.xlane.xlu0 %3884
    %v3886 = vlog2.pop %v3855
    %v3887 = vmul.f32 %v3886, 0.6931472
    %v3888 = vlog2.pop %v3857
    %v3889 = vmul.f32 %v3888, 0.6931472
    %v3890 = vlog2.pop %v3859
    %v3891 = vmul.f32 %v3890, 0.6931472
    %v3892 = vlog2.pop %v3861
    %v3893 = vmul.f32 %v3892, 0.6931472
    %v3894 = vlog2.pop %v3863
    %v3895 = vmul.f32 %v3894, 0.6931472
    %v3896 = vlog2.pop %v3865
    %v3897 = vmul.f32 %v3896, 0.6931472
    %v3898 = vlog2.pop %v3867
    %v3899 = vmul.f32 %v3898, 0.6931472
    %v3900 = vlog2.pop %v3869
    %v3901 = vmul.f32 %v3900, 0.6931472
    %v3902 = vlog2.pop %v3871
    %v3903 = vmul.f32 %v3902, 0.6931472
    %v3904 = vlog2.pop %v3873
    %v3905 = vmul.f32 %v3904, 0.6931472
    %v3906 = vlog2.pop %v3875
    %v3907 = vmul.f32 %v3906, 0.6931472
    %v3908 = vlog2.pop %v3877
    %v3909 = vmul.f32 %v3908, 0.6931472
    %v3910 = vlog2.pop %v3879
    %v3911 = vmul.f32 %v3910, 0.6931472
    %v3912 = vlog2.pop %v3881
    %v3913 = vmul.f32 %v3912, 0.6931472
    %v3914 = vlog2.pop %v3883
    %v3915 = vmul.f32 %v3914, 0.6931472
    %v3916 = vlog2.pop %v3885
    %v3917 = vmul.f32 %v3916, 0.6931472
    %v3918 = vadd.f32 %v3775, %v3887
    %v3919 = vadd.f32 %v3777, %v3889
    %v3920 = vadd.f32 %v3779, %v3891
    %v3921 = vadd.f32 %v3781, %v3893
    %v3922 = vadd.f32 %v3783, %v3895
    %v3923 = vadd.f32 %v3785, %v3897
    %v3924 = vadd.f32 %v3787, %v3899
    %v3925 = vadd.f32 %v3789, %v3901
    %v3926 = vadd.f32 %v3791, %v3903
    %v3927 = vadd.f32 %v3793, %v3905
    %v3928 = vadd.f32 %v3795, %v3907
    %v3929 = vadd.f32 %v3797, %v3909
    %v3930 = vadd.f32 %v3799, %v3911
    %v3931 = vadd.f32 %v3801, %v3913
    %v3932 = vadd.f32 %v3803, %v3915
    %v3933 = vadd.f32 %v3805, %v3917
    %v3934 = vsub.f32 %v3918, %v3430
    %v3935 = vsub.f32 %v3919, %v3431
    %v3936 = vsub.f32 %v3920, %v3432
    %v3937 = vsub.f32 %v3921, %v3433
    %v3938 = vsub.f32 %v3922, %v3434
    %v3939 = vsub.f32 %v3923, %v3435
    %v3940 = vsub.f32 %v3924, %v3436
    %v3941 = vsub.f32 %v3925, %v3437
    %v3942 = vsub.f32 %v3926, %v3438
    %v3943 = vsub.f32 %v3927, %v3439
    %v3944 = vsub.f32 %v3928, %v3440
    %v3945 = vsub.f32 %v3929, %v3441
    %v3946 = vsub.f32 %v3930, %v3442
    %v3947 = vsub.f32 %v3931, %v3443
    %v3948 = vsub.f32 %v3932, %v3444
    %v3949 = vsub.f32 %v3933, %v3445
    %v3950 = vmul.f32 %v1603, %v3934
    %v3951 = vmul.f32 %v1609, %v3935
    %v3952 = vmul.f32 %v1615, %v3936
    %v3953 = vmul.f32 %v1621, %v3937
    %v3954 = vmul.f32 %v1627, %v3938
    %v3955 = vmul.f32 %v1633, %v3939
    %v3956 = vmul.f32 %v1639, %v3940
    %v3957 = vmul.f32 %v1645, %v3941
    %v3958 = vmul.f32 %v1651, %v3942
    %v3959 = vmul.f32 %v1657, %v3943
    %v3960 = vmul.f32 %v1663, %v3944
    %v3961 = vmul.f32 %v1669, %v3945
    %v3962 = vmul.f32 %v1675, %v3946
    %v3963 = vmul.f32 %v1681, %v3947
    %v3964 = vmul.f32 %v1687, %v3948
    %v3965 = vmul.f32 %v1693, %v3949
    %v3966 = vadd.f32 %v3950, %v3951
    %v3967 = vadd.f32 %v3966, %v3952
    %v3968 = vadd.f32 %v3967, %v3953
    %v3969 = vadd.f32 %v3968, %v3954
    %v3970 = vadd.f32 %v3969, %v3955
    %v3971 = vadd.f32 %v3970, %v3956
    %v3972 = vadd.f32 %v3971, %v3957
    %v3973 = vadd.f32 %v3972, %v3958
    %v3974 = vadd.f32 %v3973, %v3959
    %v3975 = vadd.f32 %v3974, %v3960
    %v3976 = vadd.f32 %v3975, %v3961
    %v3977 = vadd.f32 %v3976, %v3962
    %v3978 = vadd.f32 %v3977, %v3963
    %v3979 = vadd.f32 %v3978, %v3964
    %v3980 = vadd.f32 %v3979, %v3965
    %3981 = vadd.xlane.f32.xlu0 %v3980
    %v3982 = vpop.xlane.xlu0 %3981
    %v3983 = vrot.slane %v3982, 4
    %v3984 = vadd.f32 %v3982, %v3983
    %v3985 = vrot.slane %v3984, 2
    %v3986 = vadd.f32 %v3984, %v3985
    %v3987 = vrot.slane %v3986, 1
    %v3988 = vadd.f32 %v3986, %v3987
    %s3989 = vtos %v3988
    %v3990 = vsel %vm1713, %v2509, -1e+30
    %v3991 = vsel %vm1713, %v2510, -1e+30
    %v3992 = vsel %vm1713, %v2511, -1e+30
    %v3993 = vsel %vm1713, %v2512, -1e+30
    %v3994 = vsel %vm1713, %v2513, -1e+30
    %v3995 = vsel %vm1713, %v2514, -1e+30
    %v3996 = vsel %vm1713, %v2515, -1e+30
    %v3997 = vsel %vm1713, %v2516, -1e+30
    %v3998 = vsel %vm1713, %v2517, -1e+30
    %v3999 = vsel %vm1713, %v2518, -1e+30
    %v4000 = vsel %vm1713, %v2519, -1e+30
    %v4001 = vsel %vm1713, %v2520, -1e+30
    %v4002 = vsel %vm1713, %v2521, -1e+30
    %v4003 = vsel %vm1713, %v2522, -1e+30
    %v4004 = vsel %vm1713, %v2523, -1e+30
    %v4005 = vsel %vm1713, %v2524, -1e+30
    %4006 = vmax.xlane.f32.xlu0 %v3990
    %v4007 = vpop.xlane.xlu0 %4006
    %4008 = vmax.xlane.f32.xlu0 %v3991
    %v4009 = vpop.xlane.xlu0 %4008
    %4010 = vmax.xlane.f32.xlu0 %v3992
    %v4011 = vpop.xlane.xlu0 %4010
    %4012 = vmax.xlane.f32.xlu0 %v3993
    %v4013 = vpop.xlane.xlu0 %4012
    %4014 = vmax.xlane.f32.xlu0 %v3994
    %v4015 = vpop.xlane.xlu0 %4014
    %4016 = vmax.xlane.f32.xlu0 %v3995
    %v4017 = vpop.xlane.xlu0 %4016
    %4018 = vmax.xlane.f32.xlu0 %v3996
    %v4019 = vpop.xlane.xlu0 %4018
    %4020 = vmax.xlane.f32.xlu0 %v3997
    %v4021 = vpop.xlane.xlu0 %4020
    %4022 = vmax.xlane.f32.xlu0 %v3998
    %v4023 = vpop.xlane.xlu0 %4022
    %4024 = vmax.xlane.f32.xlu0 %v3999
    %v4025 = vpop.xlane.xlu0 %4024
    %4026 = vmax.xlane.f32.xlu0 %v4000
    %v4027 = vpop.xlane.xlu0 %4026
    %4028 = vmax.xlane.f32.xlu0 %v4001
    %v4029 = vpop.xlane.xlu0 %4028
    %4030 = vmax.xlane.f32.xlu0 %v4002
    %v4031 = vpop.xlane.xlu0 %4030
    %4032 = vmax.xlane.f32.xlu0 %v4003
    %v4033 = vpop.xlane.xlu0 %4032
    %4034 = vmax.xlane.f32.xlu0 %v4004
    %v4035 = vpop.xlane.xlu0 %4034
    %4036 = vmax.xlane.f32.xlu0 %v4005
    %v4037 = vpop.xlane.xlu0 %4036
    %v4038 = vsub.f32 %v3990, %v4007
    %v4039 = vsub.f32 %v3991, %v4009
    %v4040 = vsub.f32 %v3992, %v4011
    %v4041 = vsub.f32 %v3993, %v4013
    %v4042 = vsub.f32 %v3994, %v4015
    %v4043 = vsub.f32 %v3995, %v4017
    %v4044 = vsub.f32 %v3996, %v4019
    %v4045 = vsub.f32 %v3997, %v4021
    %v4046 = vsub.f32 %v3998, %v4023
    %v4047 = vsub.f32 %v3999, %v4025
    %v4048 = vsub.f32 %v4000, %v4027
    %v4049 = vsub.f32 %v4001, %v4029
    %v4050 = vsub.f32 %v4002, %v4031
    %v4051 = vsub.f32 %v4003, %v4033
    %v4052 = vsub.f32 %v4004, %v4035
    %v4053 = vsub.f32 %v4005, %v4037
    %v4054 = vmul.f32 %v4038, 1.442695
    %v4055 = vpow.pop %v4054
    %v4056 = vmul.f32 %v4039, 1.442695
    %v4057 = vpow.pop %v4056
    %v4058 = vmul.f32 %v4040, 1.442695
    %v4059 = vpow.pop %v4058
    %v4060 = vmul.f32 %v4041, 1.442695
    %v4061 = vpow.pop %v4060
    %v4062 = vmul.f32 %v4042, 1.442695
    %v4063 = vpow.pop %v4062
    %v4064 = vmul.f32 %v4043, 1.442695
    %v4065 = vpow.pop %v4064
    %v4066 = vmul.f32 %v4044, 1.442695
    %v4067 = vpow.pop %v4066
    %v4068 = vmul.f32 %v4045, 1.442695
    %v4069 = vpow.pop %v4068
    %v4070 = vmul.f32 %v4046, 1.442695
    %v4071 = vpow.pop %v4070
    %v4072 = vmul.f32 %v4047, 1.442695
    %v4073 = vpow.pop %v4072
    %v4074 = vmul.f32 %v4048, 1.442695
    %v4075 = vpow.pop %v4074
    %v4076 = vmul.f32 %v4049, 1.442695
    %v4077 = vpow.pop %v4076
    %v4078 = vmul.f32 %v4050, 1.442695
    %v4079 = vpow.pop %v4078
    %v4080 = vmul.f32 %v4051, 1.442695
    %v4081 = vpow.pop %v4080
    %v4082 = vmul.f32 %v4052, 1.442695
    %v4083 = vpow.pop %v4082
    %v4084 = vmul.f32 %v4053, 1.442695
    %v4085 = vpow.pop %v4084
    %4086 = vadd.xlane.f32.xlu0 %v4055
    %v4087 = vpop.xlane.xlu0 %4086
    %4088 = vadd.xlane.f32.xlu0 %v4057
    %v4089 = vpop.xlane.xlu0 %4088
    %4090 = vadd.xlane.f32.xlu0 %v4059
    %v4091 = vpop.xlane.xlu0 %4090
    %4092 = vadd.xlane.f32.xlu0 %v4061
    %v4093 = vpop.xlane.xlu0 %4092
    %4094 = vadd.xlane.f32.xlu0 %v4063
    %v4095 = vpop.xlane.xlu0 %4094
    %4096 = vadd.xlane.f32.xlu0 %v4065
    %v4097 = vpop.xlane.xlu0 %4096
    %4098 = vadd.xlane.f32.xlu0 %v4067
    %v4099 = vpop.xlane.xlu0 %4098
    %4100 = vadd.xlane.f32.xlu0 %v4069
    %v4101 = vpop.xlane.xlu0 %4100
    %4102 = vadd.xlane.f32.xlu0 %v4071
    %v4103 = vpop.xlane.xlu0 %4102
    %4104 = vadd.xlane.f32.xlu0 %v4073
    %v4105 = vpop.xlane.xlu0 %4104
    %4106 = vadd.xlane.f32.xlu0 %v4075
    %v4107 = vpop.xlane.xlu0 %4106
    %4108 = vadd.xlane.f32.xlu0 %v4077
    %v4109 = vpop.xlane.xlu0 %4108
    %4110 = vadd.xlane.f32.xlu0 %v4079
    %v4111 = vpop.xlane.xlu0 %4110
    %4112 = vadd.xlane.f32.xlu0 %v4081
    %v4113 = vpop.xlane.xlu0 %4112
    %4114 = vadd.xlane.f32.xlu0 %v4083
    %v4115 = vpop.xlane.xlu0 %4114
    %4116 = vadd.xlane.f32.xlu0 %v4085
    %v4117 = vpop.xlane.xlu0 %4116
    %v4118 = vlog2.pop %v4087
    %v4119 = vmul.f32 %v4118, 0.6931472
    %v4120 = vlog2.pop %v4089
    %v4121 = vmul.f32 %v4120, 0.6931472
    %v4122 = vlog2.pop %v4091
    %v4123 = vmul.f32 %v4122, 0.6931472
    %v4124 = vlog2.pop %v4093
    %v4125 = vmul.f32 %v4124, 0.6931472
    %v4126 = vlog2.pop %v4095
    %v4127 = vmul.f32 %v4126, 0.6931472
    %v4128 = vlog2.pop %v4097
    %v4129 = vmul.f32 %v4128, 0.6931472
    %v4130 = vlog2.pop %v4099
    %v4131 = vmul.f32 %v4130, 0.6931472
    %v4132 = vlog2.pop %v4101
    %v4133 = vmul.f32 %v4132, 0.6931472
    %v4134 = vlog2.pop %v4103
    %v4135 = vmul.f32 %v4134, 0.6931472
    %v4136 = vlog2.pop %v4105
    %v4137 = vmul.f32 %v4136, 0.6931472
    %v4138 = vlog2.pop %v4107
    %v4139 = vmul.f32 %v4138, 0.6931472
    %v4140 = vlog2.pop %v4109
    %v4141 = vmul.f32 %v4140, 0.6931472
    %v4142 = vlog2.pop %v4111
    %v4143 = vmul.f32 %v4142, 0.6931472
    %v4144 = vlog2.pop %v4113
    %v4145 = vmul.f32 %v4144, 0.6931472
    %v4146 = vlog2.pop %v4115
    %v4147 = vmul.f32 %v4146, 0.6931472
    %v4148 = vlog2.pop %v4117
    %v4149 = vmul.f32 %v4148, 0.6931472
    %v4150 = vadd.f32 %v4007, %v4119
    %v4151 = vadd.f32 %v4009, %v4121
    %v4152 = vadd.f32 %v4011, %v4123
    %v4153 = vadd.f32 %v4013, %v4125
    %v4154 = vadd.f32 %v4015, %v4127
    %v4155 = vadd.f32 %v4017, %v4129
    %v4156 = vadd.f32 %v4019, %v4131
    %v4157 = vadd.f32 %v4021, %v4133
    %v4158 = vadd.f32 %v4023, %v4135
    %v4159 = vadd.f32 %v4025, %v4137
    %v4160 = vadd.f32 %v4027, %v4139
    %v4161 = vadd.f32 %v4029, %v4141
    %v4162 = vadd.f32 %v4031, %v4143
    %v4163 = vadd.f32 %v4033, %v4145
    %v4164 = vadd.f32 %v4035, %v4147
    %v4165 = vadd.f32 %v4037, %v4149
    %v4166 = vsub.f32 %v4150, %v2509
    %v4167 = vsub.f32 %v4151, %v2510
    %v4168 = vsub.f32 %v4152, %v2511
    %v4169 = vsub.f32 %v4153, %v2512
    %v4170 = vsub.f32 %v4154, %v2513
    %v4171 = vsub.f32 %v4155, %v2514
    %v4172 = vsub.f32 %v4156, %v2515
    %v4173 = vsub.f32 %v4157, %v2516
    %v4174 = vsub.f32 %v4158, %v2517
    %v4175 = vsub.f32 %v4159, %v2518
    %v4176 = vsub.f32 %v4160, %v2519
    %v4177 = vsub.f32 %v4161, %v2520
    %v4178 = vsub.f32 %v4162, %v2521
    %v4179 = vsub.f32 %v4163, %v2522
    %v4180 = vsub.f32 %v4164, %v2523
    %v4181 = vsub.f32 %v4165, %v2524
    %v4182 = vmul.f32 %v3510, %v4166
    %v4183 = vmul.f32 %v3511, %v4167
    %v4184 = vmul.f32 %v3512, %v4168
    %v4185 = vmul.f32 %v3513, %v4169
    %v4186 = vmul.f32 %v3514, %v4170
    %v4187 = vmul.f32 %v3515, %v4171
    %v4188 = vmul.f32 %v3516, %v4172
    %v4189 = vmul.f32 %v3517, %v4173
    %v4190 = vmul.f32 %v3518, %v4174
    %v4191 = vmul.f32 %v3519, %v4175
    %v4192 = vmul.f32 %v3520, %v4176
    %v4193 = vmul.f32 %v3521, %v4177
    %v4194 = vmul.f32 %v3522, %v4178
    %v4195 = vmul.f32 %v3523, %v4179
    %v4196 = vmul.f32 %v3524, %v4180
    %v4197 = vmul.f32 %v3525, %v4181
    %v4198 = vadd.f32 %v4182, %v4183
    %v4199 = vadd.f32 %v4198, %v4184
    %v4200 = vadd.f32 %v4199, %v4185
    %v4201 = vadd.f32 %v4200, %v4186
    %v4202 = vadd.f32 %v4201, %v4187
    %v4203 = vadd.f32 %v4202, %v4188
    %v4204 = vadd.f32 %v4203, %v4189
    %v4205 = vadd.f32 %v4204, %v4190
    %v4206 = vadd.f32 %v4205, %v4191
    %v4207 = vadd.f32 %v4206, %v4192
    %v4208 = vadd.f32 %v4207, %v4193
    %v4209 = vadd.f32 %v4208, %v4194
    %v4210 = vadd.f32 %v4209, %v4195
    %v4211 = vadd.f32 %v4210, %v4196
    %v4212 = vadd.f32 %v4211, %v4197
    %4213 = vadd.xlane.f32.xlu0 %v4212
    %v4214 = vpop.xlane.xlu0 %4213
    %v4215 = vrot.slane %v4214, 4
    %v4216 = vadd.f32 %v4214, %v4215
    %v4217 = vrot.slane %v4216, 2
    %v4218 = vadd.f32 %v4216, %v4217
    %v4219 = vrot.slane %v4218, 1
    %v4220 = vadd.f32 %v4218, %v4219
    %s4221 = vtos %v4220
    %v4222 = vsel %vm1713, %v3446, -1e+30
    %v4223 = vsel %vm1713, %v3447, -1e+30
    %v4224 = vsel %vm1713, %v3448, -1e+30
    %v4225 = vsel %vm1713, %v3449, -1e+30
    %v4226 = vsel %vm1713, %v3450, -1e+30
    %v4227 = vsel %vm1713, %v3451, -1e+30
    %v4228 = vsel %vm1713, %v3452, -1e+30
    %v4229 = vsel %vm1713, %v3453, -1e+30
    %v4230 = vsel %vm1713, %v3454, -1e+30
    %v4231 = vsel %vm1713, %v3455, -1e+30
    %v4232 = vsel %vm1713, %v3456, -1e+30
    %v4233 = vsel %vm1713, %v3457, -1e+30
    %v4234 = vsel %vm1713, %v3458, -1e+30
    %v4235 = vsel %vm1713, %v3459, -1e+30
    %v4236 = vsel %vm1713, %v3460, -1e+30
    %v4237 = vsel %vm1713, %v3461, -1e+30
    %4238 = vmax.xlane.f32.xlu0 %v4222
    %v4239 = vpop.xlane.xlu0 %4238
    %4240 = vmax.xlane.f32.xlu0 %v4223
    %v4241 = vpop.xlane.xlu0 %4240
    %4242 = vmax.xlane.f32.xlu0 %v4224
    %v4243 = vpop.xlane.xlu0 %4242
    %4244 = vmax.xlane.f32.xlu0 %v4225
    %v4245 = vpop.xlane.xlu0 %4244
    %4246 = vmax.xlane.f32.xlu0 %v4226
    %v4247 = vpop.xlane.xlu0 %4246
    %4248 = vmax.xlane.f32.xlu0 %v4227
    %v4249 = vpop.xlane.xlu0 %4248
    %4250 = vmax.xlane.f32.xlu0 %v4228
    %v4251 = vpop.xlane.xlu0 %4250
    %4252 = vmax.xlane.f32.xlu0 %v4229
    %v4253 = vpop.xlane.xlu0 %4252
    %4254 = vmax.xlane.f32.xlu0 %v4230
    %v4255 = vpop.xlane.xlu0 %4254
    %4256 = vmax.xlane.f32.xlu0 %v4231
    %v4257 = vpop.xlane.xlu0 %4256
    %4258 = vmax.xlane.f32.xlu0 %v4232
    %v4259 = vpop.xlane.xlu0 %4258
    %4260 = vmax.xlane.f32.xlu0 %v4233
    %v4261 = vpop.xlane.xlu0 %4260
    %4262 = vmax.xlane.f32.xlu0 %v4234
    %v4263 = vpop.xlane.xlu0 %4262
    %4264 = vmax.xlane.f32.xlu0 %v4235
    %v4265 = vpop.xlane.xlu0 %4264
    %4266 = vmax.xlane.f32.xlu0 %v4236
    %v4267 = vpop.xlane.xlu0 %4266
    %4268 = vmax.xlane.f32.xlu0 %v4237
    %v4269 = vpop.xlane.xlu0 %4268
    %v4270 = vsub.f32 %v4222, %v4239
    %v4271 = vsub.f32 %v4223, %v4241
    %v4272 = vsub.f32 %v4224, %v4243
    %v4273 = vsub.f32 %v4225, %v4245
    %v4274 = vsub.f32 %v4226, %v4247
    %v4275 = vsub.f32 %v4227, %v4249
    %v4276 = vsub.f32 %v4228, %v4251
    %v4277 = vsub.f32 %v4229, %v4253
    %v4278 = vsub.f32 %v4230, %v4255
    %v4279 = vsub.f32 %v4231, %v4257
    %v4280 = vsub.f32 %v4232, %v4259
    %v4281 = vsub.f32 %v4233, %v4261
    %v4282 = vsub.f32 %v4234, %v4263
    %v4283 = vsub.f32 %v4235, %v4265
    %v4284 = vsub.f32 %v4236, %v4267
    %v4285 = vsub.f32 %v4237, %v4269
    %v4286 = vmul.f32 %v4270, 1.442695
    %v4287 = vpow.pop %v4286
    %v4288 = vmul.f32 %v4271, 1.442695
    %v4289 = vpow.pop %v4288
    %v4290 = vmul.f32 %v4272, 1.442695
    %v4291 = vpow.pop %v4290
    %v4292 = vmul.f32 %v4273, 1.442695
    %v4293 = vpow.pop %v4292
    %v4294 = vmul.f32 %v4274, 1.442695
    %v4295 = vpow.pop %v4294
    %v4296 = vmul.f32 %v4275, 1.442695
    %v4297 = vpow.pop %v4296
    %v4298 = vmul.f32 %v4276, 1.442695
    %v4299 = vpow.pop %v4298
    %v4300 = vmul.f32 %v4277, 1.442695
    %v4301 = vpow.pop %v4300
    %v4302 = vmul.f32 %v4278, 1.442695
    %v4303 = vpow.pop %v4302
    %v4304 = vmul.f32 %v4279, 1.442695
    %v4305 = vpow.pop %v4304
    %v4306 = vmul.f32 %v4280, 1.442695
    %v4307 = vpow.pop %v4306
    %v4308 = vmul.f32 %v4281, 1.442695
    %v4309 = vpow.pop %v4308
    %v4310 = vmul.f32 %v4282, 1.442695
    %v4311 = vpow.pop %v4310
    %v4312 = vmul.f32 %v4283, 1.442695
    %v4313 = vpow.pop %v4312
    %v4314 = vmul.f32 %v4284, 1.442695
    %v4315 = vpow.pop %v4314
    %v4316 = vmul.f32 %v4285, 1.442695
    %v4317 = vpow.pop %v4316
    %4318 = vadd.xlane.f32.xlu0 %v4287
    %v4319 = vpop.xlane.xlu0 %4318
    %4320 = vadd.xlane.f32.xlu0 %v4289
    %v4321 = vpop.xlane.xlu0 %4320
    %4322 = vadd.xlane.f32.xlu0 %v4291
    %v4323 = vpop.xlane.xlu0 %4322
    %4324 = vadd.xlane.f32.xlu0 %v4293
    %v4325 = vpop.xlane.xlu0 %4324
    %4326 = vadd.xlane.f32.xlu0 %v4295
    %v4327 = vpop.xlane.xlu0 %4326
    %4328 = vadd.xlane.f32.xlu0 %v4297
    %v4329 = vpop.xlane.xlu0 %4328
    %4330 = vadd.xlane.f32.xlu0 %v4299
    %v4331 = vpop.xlane.xlu0 %4330
    %4332 = vadd.xlane.f32.xlu0 %v4301
    %v4333 = vpop.xlane.xlu0 %4332
    %4334 = vadd.xlane.f32.xlu0 %v4303
    %v4335 = vpop.xlane.xlu0 %4334
    %4336 = vadd.xlane.f32.xlu0 %v4305
    %v4337 = vpop.xlane.xlu0 %4336
    %4338 = vadd.xlane.f32.xlu0 %v4307
    %v4339 = vpop.xlane.xlu0 %4338
    %4340 = vadd.xlane.f32.xlu0 %v4309
    %v4341 = vpop.xlane.xlu0 %4340
    %4342 = vadd.xlane.f32.xlu0 %v4311
    %v4343 = vpop.xlane.xlu0 %4342
    %4344 = vadd.xlane.f32.xlu0 %v4313
    %v4345 = vpop.xlane.xlu0 %4344
    %4346 = vadd.xlane.f32.xlu0 %v4315
    %v4347 = vpop.xlane.xlu0 %4346
    %4348 = vadd.xlane.f32.xlu0 %v4317
    %v4349 = vpop.xlane.xlu0 %4348
    %v4350 = vlog2.pop %v4319
    %v4351 = vmul.f32 %v4350, 0.6931472
    %v4352 = vlog2.pop %v4321
    %v4353 = vmul.f32 %v4352, 0.6931472
    %v4354 = vlog2.pop %v4323
    %v4355 = vmul.f32 %v4354, 0.6931472
    %v4356 = vlog2.pop %v4325
    %v4357 = vmul.f32 %v4356, 0.6931472
    %v4358 = vlog2.pop %v4327
    %v4359 = vmul.f32 %v4358, 0.6931472
    %v4360 = vlog2.pop %v4329
    %v4361 = vmul.f32 %v4360, 0.6931472
    %v4362 = vlog2.pop %v4331
    %v4363 = vmul.f32 %v4362, 0.6931472
    %v4364 = vlog2.pop %v4333
    %v4365 = vmul.f32 %v4364, 0.6931472
    %v4366 = vlog2.pop %v4335
    %v4367 = vmul.f32 %v4366, 0.6931472
    %v4368 = vlog2.pop %v4337
    %v4369 = vmul.f32 %v4368, 0.6931472
    %v4370 = vlog2.pop %v4339
    %v4371 = vmul.f32 %v4370, 0.6931472
    %v4372 = vlog2.pop %v4341
    %v4373 = vmul.f32 %v4372, 0.6931472
    %v4374 = vlog2.pop %v4343
    %v4375 = vmul.f32 %v4374, 0.6931472
    %v4376 = vlog2.pop %v4345
    %v4377 = vmul.f32 %v4376, 0.6931472
    %v4378 = vlog2.pop %v4347
    %v4379 = vmul.f32 %v4378, 0.6931472
    %v4380 = vlog2.pop %v4349
    %v4381 = vmul.f32 %v4380, 0.6931472
    %v4382 = vadd.f32 %v4239, %v4351
    %v4383 = vadd.f32 %v4241, %v4353
    %v4384 = vadd.f32 %v4243, %v4355
    %v4385 = vadd.f32 %v4245, %v4357
    %v4386 = vadd.f32 %v4247, %v4359
    %v4387 = vadd.f32 %v4249, %v4361
    %v4388 = vadd.f32 %v4251, %v4363
    %v4389 = vadd.f32 %v4253, %v4365
    %v4390 = vadd.f32 %v4255, %v4367
    %v4391 = vadd.f32 %v4257, %v4369
    %v4392 = vadd.f32 %v4259, %v4371
    %v4393 = vadd.f32 %v4261, %v4373
    %v4394 = vadd.f32 %v4263, %v4375
    %v4395 = vadd.f32 %v4265, %v4377
    %v4396 = vadd.f32 %v4267, %v4379
    %v4397 = vadd.f32 %v4269, %v4381
    %v4398 = vsub.f32 %v4382, %v3446
    %v4399 = vsub.f32 %v4383, %v3447
    %v4400 = vsub.f32 %v4384, %v3448
    %v4401 = vsub.f32 %v4385, %v3449
    %v4402 = vsub.f32 %v4386, %v3450
    %v4403 = vsub.f32 %v4387, %v3451
    %v4404 = vsub.f32 %v4388, %v3452
    %v4405 = vsub.f32 %v4389, %v3453
    %v4406 = vsub.f32 %v4390, %v3454
    %v4407 = vsub.f32 %v4391, %v3455
    %v4408 = vsub.f32 %v4392, %v3456
    %v4409 = vsub.f32 %v4393, %v3457
    %v4410 = vsub.f32 %v4394, %v3458
    %v4411 = vsub.f32 %v4395, %v3459
    %v4412 = vsub.f32 %v4396, %v3460
    %v4413 = vsub.f32 %v4397, %v3461
    %v4414 = vmul.f32 %v3510, %v4398
    %v4415 = vmul.f32 %v3511, %v4399
    %v4416 = vmul.f32 %v3512, %v4400
    %v4417 = vmul.f32 %v3513, %v4401
    %v4418 = vmul.f32 %v3514, %v4402
    %v4419 = vmul.f32 %v3515, %v4403
    %v4420 = vmul.f32 %v3516, %v4404
    %v4421 = vmul.f32 %v3517, %v4405
    %v4422 = vmul.f32 %v3518, %v4406
    %v4423 = vmul.f32 %v3519, %v4407
    %v4424 = vmul.f32 %v3520, %v4408
    %v4425 = vmul.f32 %v3521, %v4409
    %v4426 = vmul.f32 %v3522, %v4410
    %v4427 = vmul.f32 %v3523, %v4411
    %v4428 = vmul.f32 %v3524, %v4412
    %v4429 = vmul.f32 %v3525, %v4413
    %v4430 = vadd.f32 %v4414, %v4415
    %v4431 = vadd.f32 %v4430, %v4416
    %v4432 = vadd.f32 %v4431, %v4417
    %v4433 = vadd.f32 %v4432, %v4418
    %v4434 = vadd.f32 %v4433, %v4419
    %v4435 = vadd.f32 %v4434, %v4420
    %v4436 = vadd.f32 %v4435, %v4421
    %v4437 = vadd.f32 %v4436, %v4422
    %v4438 = vadd.f32 %v4437, %v4423
    %v4439 = vadd.f32 %v4438, %v4424
    %v4440 = vadd.f32 %v4439, %v4425
    %v4441 = vadd.f32 %v4440, %v4426
    %v4442 = vadd.f32 %v4441, %v4427
    %v4443 = vadd.f32 %v4442, %v4428
    %v4444 = vadd.f32 %v4443, %v4429
    %4445 = vadd.xlane.f32.xlu0 %v4444
    %v4446 = vpop.xlane.xlu0 %4445
    %v4447 = vrot.slane %v4446, 4
    %v4448 = vadd.f32 %v4446, %v4447
    %v4449 = vrot.slane %v4448, 2
    %v4450 = vadd.f32 %v4448, %v4449
    %v4451 = vrot.slane %v4450, 1
    %v4452 = vadd.f32 %v4450, %v4451
    %s4453 = vtos %v4452
    %s4454 = smul.f32 %s80, %s3757
    %s4455 = smul.f32 %s81, %s3989
    %s4456 = sadd.f32 %s4454, %s4455
    %s4457 = smul.f32 %s82, %s4221
    %s4458 = sadd.f32 %s4456, %s4457
    %s4459 = smul.f32 %s83, %s4453
    %s4460 = sadd.f32 %s4458, %s4459
    %s4461 = smul.f32 %s4460, %s85
    %s4462 = scalar_lea.smem [#allocation11], 0
    %4463 = sst [smem:[%s4462]] %s4461
    %4464 = vst [vmem:[#allocation12] sm:$0xff] %v1603
    %4465 = vst [vmem:[#allocation12 + $0x8] sm:$0xff] %v1609
    %4466 = vst [vmem:[#allocation12 + $0x10] sm:$0xff] %v1615
    %4467 = vst [vmem:[#allocation12 + $0x18] sm:$0xff] %v1621
    %4468 = vst [vmem:[#allocation12 + $0x20] sm:$0xff] %v1627
    %4469 = vst [vmem:[#allocation12 + $0x28] sm:$0xff] %v1633
    %4470 = vst [vmem:[#allocation12 + $0x30] sm:$0xff] %v1639
    %4471 = vst [vmem:[#allocation12 + $0x38] sm:$0xff] %v1645
    %4472 = vst [vmem:[#allocation12 + $0x40] sm:$0xff] %v1651
    %4473 = vst [vmem:[#allocation12 + $0x48] sm:$0xff] %v1657
    %4474 = vst [vmem:[#allocation12 + $0x50] sm:$0xff] %v1663
    %4475 = vst [vmem:[#allocation12 + $0x58] sm:$0xff] %v1669
    %4476 = vst [vmem:[#allocation12 + $0x60] sm:$0xff] %v1675
    %4477 = vst [vmem:[#allocation12 + $0x68] sm:$0xff] %v1681
    %4478 = vst [vmem:[#allocation12 + $0x70] sm:$0xff] %v1687
    %4479 = vst [vmem:[#allocation12 + $0x78] sm:$0xff] %v1693
    %4480 = vst [vmem:[#allocation13] sm:$0xff] %v2509
    %4481 = vst [vmem:[#allocation13 + $0x8] sm:$0xff] %v2510
    %4482 = vst [vmem:[#allocation13 + $0x10] sm:$0xff] %v2511
    %4483 = vst [vmem:[#allocation13 + $0x18] sm:$0xff] %v2512
    %4484 = vst [vmem:[#allocation13 + $0x20] sm:$0xff] %v2513
    %4485 = vst [vmem:[#allocation13 + $0x28] sm:$0xff] %v2514
    %4486 = vst [vmem:[#allocation13 + $0x30] sm:$0xff] %v2515
    %4487 = vst [vmem:[#allocation13 + $0x38] sm:$0xff] %v2516
    %4488 = vst [vmem:[#allocation13 + $0x40] sm:$0xff] %v2517
    %4489 = vst [vmem:[#allocation13 + $0x48] sm:$0xff] %v2518
    %4490 = vst [vmem:[#allocation13 + $0x50] sm:$0xff] %v2519
    %4491 = vst [vmem:[#allocation13 + $0x58] sm:$0xff] %v2520
    %4492 = vst [vmem:[#allocation13 + $0x60] sm:$0xff] %v2521
    %4493 = vst [vmem:[#allocation13 + $0x68] sm:$0xff] %v2522
    %4494 = vst [vmem:[#allocation13 + $0x70] sm:$0xff] %v2523
    %4495 = vst [vmem:[#allocation13 + $0x78] sm:$0xff] %v2524
    %v4496 = vpack.c.bf16 %v2494, %v2493
    %v4497 = vpack.c.bf16 %v2496, %v2495
    %v4498 = vpack.c.bf16 %v2498, %v2497
    %v4499 = vpack.c.bf16 %v2500, %v2499
    %v4500 = vpack.c.bf16 %v2502, %v2501
    %v4501 = vpack.c.bf16 %v2504, %v2503
    %v4502 = vpack.c.bf16 %v2506, %v2505
    %v4503 = vpack.c.bf16 %v2508, %v2507
    %v4512 = vunpack.c.l.b16 %v4496
    %v4513 = vunpack.c.h.b16 %v4496
    %v4514 = vunpack.c.l.b16 %v4497
    %v4515 = vunpack.c.h.b16 %v4497
    %v4516 = vunpack.c.l.b16 %v4498
    %v4517 = vunpack.c.h.b16 %v4498
    %v4518 = vunpack.c.l.b16 %v4499
    %v4519 = vunpack.c.h.b16 %v4499
    %v4520 = vunpack.c.l.b16 %v4500
    %v4521 = vunpack.c.h.b16 %v4500
    %v4522 = vunpack.c.l.b16 %v4501
    %v4523 = vunpack.c.h.b16 %v4501
    %v4524 = vunpack.c.l.b16 %v4502
    %v4525 = vunpack.c.h.b16 %v4502
    %v4526 = vunpack.c.l.b16 %v4503
    %v4527 = vunpack.c.h.b16 %v4503
    %v4528 = vpack.c.b16 %v4512, %v4512
    %v4529 = vpack.c.b16 %v4513, %v4513
    %v4530 = vpack.c.b16 %v4514, %v4514
    %v4531 = vpack.c.b16 %v4515, %v4515
    %v4532 = vpack.c.b16 %v4516, %v4516
    %v4533 = vpack.c.b16 %v4517, %v4517
    %v4534 = vpack.c.b16 %v4518, %v4518
    %v4535 = vpack.c.b16 %v4519, %v4519
    %v4536 = vpack.c.b16 %v4520, %v4520
    %v4537 = vpack.c.b16 %v4521, %v4521
    %v4538 = vpack.c.b16 %v4522, %v4522
    %v4539 = vpack.c.b16 %v4523, %v4523
    %v4540 = vpack.c.b16 %v4524, %v4524
    %v4541 = vpack.c.b16 %v4525, %v4525
    %v4542 = vpack.c.b16 %v4526, %v4526
    %v4543 = vpack.c.b16 %v4527, %v4527
    %4560 = vst [vmem:[#allocation15] sm:$0xf] %v4528
    %4561 = vst [vmem:[#allocation15 + $0x4] sm:$0xf] %v4529
    %4562 = vst [vmem:[#allocation15 + $0x8] sm:$0xf] %v4530
    %4563 = vst [vmem:[#allocation15 + $0xc] sm:$0xf] %v4531
    %4564 = vst [vmem:[#allocation15 + $0x10] sm:$0xf] %v4532
    %4565 = vst [vmem:[#allocation15 + $0x14] sm:$0xf] %v4533
    %4566 = vst [vmem:[#allocation15 + $0x18] sm:$0xf] %v4534
    %4567 = vst [vmem:[#allocation15 + $0x1c] sm:$0xf] %v4535
    %4568 = vst [vmem:[#allocation15 + $0x20] sm:$0xf] %v4536
    %4569 = vst [vmem:[#allocation15 + $0x24] sm:$0xf] %v4537
    %4570 = vst [vmem:[#allocation15 + $0x28] sm:$0xf] %v4538
    %4571 = vst [vmem:[#allocation15 + $0x2c] sm:$0xf] %v4539
    %4572 = vst [vmem:[#allocation15 + $0x30] sm:$0xf] %v4540
    %4573 = vst [vmem:[#allocation15 + $0x34] sm:$0xf] %v4541
    %4574 = vst [vmem:[#allocation15 + $0x38] sm:$0xf] %v4542
    %4575 = vst [vmem:[#allocation15 + $0x3c] sm:$0xf] %v4543
    %4576 = vst [vmem:[#allocation16] sm:$0xff] %v3446
    %4577 = vst [vmem:[#allocation16 + $0x8] sm:$0xff] %v3447
    %4578 = vst [vmem:[#allocation16 + $0x10] sm:$0xff] %v3448
    %4579 = vst [vmem:[#allocation16 + $0x18] sm:$0xff] %v3449
    %4580 = vst [vmem:[#allocation16 + $0x20] sm:$0xff] %v3450
    %4581 = vst [vmem:[#allocation16 + $0x28] sm:$0xff] %v3451
    %4582 = vst [vmem:[#allocation16 + $0x30] sm:$0xff] %v3452
    %4583 = vst [vmem:[#allocation16 + $0x38] sm:$0xff] %v3453
    %4584 = vst [vmem:[#allocation16 + $0x40] sm:$0xff] %v3454
    %4585 = vst [vmem:[#allocation16 + $0x48] sm:$0xff] %v3455
    %4586 = vst [vmem:[#allocation16 + $0x50] sm:$0xff] %v3456
    %4587 = vst [vmem:[#allocation16 + $0x58] sm:$0xff] %v3457
    %4588 = vst [vmem:[#allocation16 + $0x60] sm:$0xff] %v3458
    %4589 = vst [vmem:[#allocation16 + $0x68] sm:$0xff] %v3459
    %4590 = vst [vmem:[#allocation16 + $0x70] sm:$0xff] %v3460
    %4591 = vst [vmem:[#allocation16 + $0x78] sm:$0xff] %v3461
    %v4592 = vpack.c.bf16 %v3431, %v3430
    %v4593 = vpack.c.bf16 %v3433, %v3432
    %v4594 = vpack.c.bf16 %v3435, %v3434
    %v4595 = vpack.c.bf16 %v3437, %v3436
    %v4596 = vpack.c.bf16 %v3439, %v3438
    %v4597 = vpack.c.bf16 %v3441, %v3440
    %v4598 = vpack.c.bf16 %v3443, %v3442
    %v4599 = vpack.c.bf16 %v3445, %v3444
    %v4608 = vunpack.c.l.b16 %v4592
    %v4609 = vunpack.c.h.b16 %v4592
    %v4610 = vunpack.c.l.b16 %v4593
    %v4611 = vunpack.c.h.b16 %v4593
    %v4612 = vunpack.c.l.b16 %v4594
    %v4613 = vunpack.c.h.b16 %v4594
    %v4614 = vunpack.c.l.b16 %v4595
    %v4615 = vunpack.c.h.b16 %v4595
    %v4616 = vunpack.c.l.b16 %v4596
    %v4617 = vunpack.c.h.b16 %v4596
    %v4618 = vunpack.c.l.b16 %v4597
    %v4619 = vunpack.c.h.b16 %v4597
    %v4620 = vunpack.c.l.b16 %v4598
    %v4621 = vunpack.c.h.b16 %v4598
    %v4622 = vunpack.c.l.b16 %v4599
    %v4623 = vunpack.c.h.b16 %v4599
    %v4624 = vpack.c.b16 %v4608, %v4608
    %v4625 = vpack.c.b16 %v4609, %v4609
    %v4626 = vpack.c.b16 %v4610, %v4610
    %v4627 = vpack.c.b16 %v4611, %v4611
    %v4628 = vpack.c.b16 %v4612, %v4612
    %v4629 = vpack.c.b16 %v4613, %v4613
    %v4630 = vpack.c.b16 %v4614, %v4614
    %v4631 = vpack.c.b16 %v4615, %v4615
    %v4632 = vpack.c.b16 %v4616, %v4616
    %v4633 = vpack.c.b16 %v4617, %v4617
    %v4634 = vpack.c.b16 %v4618, %v4618
    %v4635 = vpack.c.b16 %v4619, %v4619
    %v4636 = vpack.c.b16 %v4620, %v4620
    %v4637 = vpack.c.b16 %v4621, %v4621
    %v4638 = vpack.c.b16 %v4622, %v4622
    %v4639 = vpack.c.b16 %v4623, %v4623
    %4656 = vst [vmem:[#allocation18] sm:$0xf] %v4624
    %4657 = vst [vmem:[#allocation18 + $0x4] sm:$0xf] %v4625
    %4658 = vst [vmem:[#allocation18 + $0x8] sm:$0xf] %v4626
    %4659 = vst [vmem:[#allocation18 + $0xc] sm:$0xf] %v4627
    %4660 = vst [vmem:[#allocation18 + $0x10] sm:$0xf] %v4628
    %4661 = vst [vmem:[#allocation18 + $0x14] sm:$0xf] %v4629
    %4662 = vst [vmem:[#allocation18 + $0x18] sm:$0xf] %v4630
    %4663 = vst [vmem:[#allocation18 + $0x1c] sm:$0xf] %v4631
    %4664 = vst [vmem:[#allocation18 + $0x20] sm:$0xf] %v4632
    %4665 = vst [vmem:[#allocation18 + $0x24] sm:$0xf] %v4633
    %4666 = vst [vmem:[#allocation18 + $0x28] sm:$0xf] %v4634
    %4667 = vst [vmem:[#allocation18 + $0x2c] sm:$0xf] %v4635
    %4668 = vst [vmem:[#allocation18 + $0x30] sm:$0xf] %v4636
    %4669 = vst [vmem:[#allocation18 + $0x34] sm:$0xf] %v4637
    %4670 = vst [vmem:[#allocation18 + $0x38] sm:$0xf] %v4638
    %4671 = vst [vmem:[#allocation18 + $0x3c] sm:$0xf] %v4639
    // Predicated region
    $region34: #{tpu_custom_call.1} parent=1 // pred_check
      _
    $region35: #{tpu_custom_call.1} parent=1 // pred_check_branch
      %4673 = sbr.rel (0) target = $region37
    $region36: #{tpu_custom_call.1} parent=1 // pred_region
      %s4675 = ssub.s32 16, 16
      %4676 = vsyncadd [#allocation6], %s4675
      %4679 = dma.smem_to_hbm [#allocation11], 16, %s4, [#allocation6]
    $region37: #{tpu_custom_call.1} parent=1 // pred_fallthru
      _
    // Predicated region
    $region38: #{tpu_custom_call.1} parent=1 // pred_check
      _
    $region39: #{tpu_custom_call.1} parent=1 // pred_check_branch
      %4681 = sbr.rel (0) target = $region41
    $region40: #{tpu_custom_call.1} parent=1 // pred_region
      %s4683 = ssub.s32 2048, 2048
      %4684 = vsyncadd [#allocation4], %s4683
      %s4685 = sshll.u32 [#allocation12], 4
      %s4686 = int_to_ptr.vmem [resolvable:$true] %s4685
      %4691 = dma.vmem_to_hbm [thread:$0]  %s4686, 2048, %s5, [#allocation4], 128, 128, 8
    $region41: #{tpu_custom_call.1} parent=1 // pred_fallthru
      _
    // Predicated region
    $region42: #{tpu_custom_call.1} parent=1 // pred_check
      _
    $region43: #{tpu_custom_call.1} parent=1 // pred_check_branch
      %4693 = sbr.rel (0) target = $region45
    $region44: #{tpu_custom_call.1} parent=1 // pred_region
      %s4695 = ssub.s32 2048, 2048
      %4696 = vsyncadd [#allocation14], %s4695
      %s4697 = sshll.u32 [#allocation13], 4
      %s4698 = int_to_ptr.vmem [resolvable:$true] %s4697
      %4703 = dma.vmem_to_hbm [thread:$0]  %s4698, 2048, %s6, [#allocation14], 128, 128, 8
    $region45: #{tpu_custom_call.1} parent=1 // pred_fallthru
      _
    // Predicated region
    $region46: #{tpu_custom_call.1} parent=1 // pred_check
      _
    $region47: #{tpu_custom_call.1} parent=1 // pred_check_branch
      %4705 = sbr.rel (0) target = $region49
    $region48: #{tpu_custom_call.1} parent=1 // pred_region
      %s4707 = ssub.s32 1024, 1024
      %4708 = vsyncadd [#allocation14], %s4707
      %s4709 = sshll.u32 [#allocation15], 4
      %s4710 = int_to_ptr.vmem [resolvable:$true] %s4709
      %4715 = dma.vmem_to_hbm [thread:$0]  %s4710, 1024, %s7, [#allocation14], 64, 64, 4
    $region49: #{tpu_custom_call.1} parent=1 // pred_fallthru
      _
    // Predicated region
    $region50: #{tpu_custom_call.1} parent=1 // pred_check
      _
    $region51: #{tpu_custom_call.1} parent=1 // pred_check_branch
      %4717 = sbr.rel (0) target = $region53
    $region52: #{tpu_custom_call.1} parent=1 // pred_region
      %s4719 = ssub.s32 2048, 2048
      %4720 = vsyncadd [#allocation17], %s4719
      %s4721 = sshll.u32 [#allocation16], 4
      %s4722 = int_to_ptr.vmem [resolvable:$true] %s4721
      %4727 = dma.vmem_to_hbm [thread:$0]  %s4722, 2048, %s8, [#allocation17], 128, 128, 8
    $region53: #{tpu_custom_call.1} parent=1 // pred_fallthru
      _
    // Predicated region
    $region54: #{tpu_custom_call.1} parent=1 // pred_check
      _
    $region55: #{tpu_custom_call.1} parent=1 // pred_check_branch
      %4729 = sbr.rel (0) target = $region57
    $region56: #{tpu_custom_call.1} parent=1 // pred_region
      %s4731 = ssub.s32 1024, 1024
      %4732 = vsyncadd [#allocation17], %s4731
      %s4733 = sshll.u32 [#allocation18], 4
      %s4734 = int_to_ptr.vmem [resolvable:$true] %s4733
      %4739 = dma.vmem_to_hbm [thread:$0]  %s4734, 1024, %s9, [#allocation17], 64, 64, 4
    $region57: #{tpu_custom_call.1} parent=1 // pred_fallthru
      _
    // Predicated region
    $region58: #{tpu_custom_call.1} parent=1 // pred_check
      _
    $region59: #{tpu_custom_call.1} parent=1 // pred_check_branch
      %4741 = sbr.rel (0) target = $region61
    $region60: #{tpu_custom_call.1} parent=1 // pred_region
      %4742 = dma.done [#allocation6], 16
    $region61: #{tpu_custom_call.1} parent=1 // pred_fallthru
      _
    // Predicated region
    $region62: #{tpu_custom_call.1} parent=1 // pred_check
      _
    $region63: #{tpu_custom_call.1} parent=1 // pred_check_branch
      %4744 = sbr.rel (0) target = $region65
    $region64: #{tpu_custom_call.1} parent=1 // pred_region
      %4745 = dma.done [#allocation4], 2048
    $region65: #{tpu_custom_call.1} parent=1 // pred_fallthru
      _
    // Predicated region
    $region66: #{tpu_custom_call.1} parent=1 // pred_check
      _
    $region67: #{tpu_custom_call.1} parent=1 // pred_check_branch
      %4747 = sbr.rel (0) target = $region69
    $region68: #{tpu_custom_call.1} parent=1 // pred_region
      %4748 = dma.done [#allocation14], 2048
    $region69: #{tpu_custom_call.1} parent=1 // pred_fallthru
      _
    // Predicated region
    $region70: #{tpu_custom_call.1} parent=1 // pred_check
      _
    $region71: #{tpu_custom_call.1} parent=1 // pred_check_branch
      %4750 = sbr.rel (0) target = $region73
    $region72: #{tpu_custom_call.1} parent=1 // pred_region
      %4751 = dma.done [#allocation14], 1024
    $region73: #{tpu_custom_call.1} parent=1 // pred_fallthru
      _
    // Predicated region
    $region74: #{tpu_custom_call.1} parent=1 // pred_check
      _
    $region75: #{tpu_custom_call.1} parent=1 // pred_check_branch
      %4753 = sbr.rel (0) target = $region77
    $region76: #{tpu_custom_call.1} parent=1 // pred_region
      %4754 = dma.done [#allocation17], 2048
    $region77: #{tpu_custom_call.1} parent=1 // pred_fallthru
      _
    // Predicated region
    $region78: #{tpu_custom_call.1} parent=1 // pred_check
      _
    $region79: #{tpu_custom_call.1} parent=1 // pred_check_branch
      %4756 = sbr.rel (0) target = $region81
    $region80: #{tpu_custom_call.1} parent=1 // pred_region
      %4757 = dma.done [#allocation17], 1024
    $region81: #{tpu_custom_call.1} parent=1 // pred_fallthru
      _
    %4758 = sfence
    %4759 = vsyncpa [#allocation3], 1
    %4760 = vsyncpa [#allocation9], 1
    %4761 = vsyncpa [#allocation4], 1
    %4762 = vsyncpa [#allocation14], 1
    %4763 = vsyncpa [#allocation17], 1
    %4764 = vsyncpa [#allocation5], 1
    %4765 = vsyncpa [#allocation6], 1

</llo_original>
